<compile_context>
chip_gen: v5e
topology: v5e:2x2
jax: 0.10.0
libtpu: 0.0.40
codegen_flags: <defaults>
</compile_context>

<pallas_src>
import functools

import jax
import jax.numpy as jnp
import numpy as np
from jax.experimental import pallas as pl
from jax.experimental.pallas import tpu as pltpu

_LANE = 128


def _pad_lanes(n: int) -> int:
    return ((n + _LANE - 1) // _LANE) * _LANE


def _conv_masks(H: int, W: int) -> np.ndarray:
    """(9, pad(H*W)) 0/1 masks: tap t = dy*3+dx is valid at output pixel p."""
    n, npad = H * W, _pad_lanes(H * W)
    p = np.arange(npad)
    y, x = p // W, p % W
    m = np.zeros((9, npad), np.float32)
    for t in range(9):
        dy, dx = t // 3, t % 3
        valid = ((p < n) & (y + dy - 1 >= 0) & (y + dy - 1 < H)
                 & (x + dx - 1 >= 0) & (x + dx - 1 < W))
        m[t] = valid.astype(np.float32)
    return m


def _pool_select(H: int, W: int) -> np.ndarray:
    """(pad(H*W), pad(H/2*W/2)) 0/1 matrix picking the top-left corner of each
    2x2 window (after the two rolls that corner holds the window max)."""
    H2, W2 = H // 2, W // 2
    S = np.zeros((_pad_lanes(H * W), _pad_lanes(H2 * W2)), np.float32)
    for q in range(H2 * W2):
        yo, xo = divmod(q, W2)
        S[(2 * yo) * W + 2 * xo, q] = 1.0
    return S


def _tinyvgg_kernel(x_ref, w1_ref, b1_ref, w2_ref, b2_ref, w3_ref, b3_ref,
                    w4_ref, b4_ref, wfc_ref, bfc_ref,
                    m1_ref, m2_ref, s1_ref, s2_ref, out_ref,
                    *, B, cin, hid, H, W):
    """Whole TinyVGG forward for the full batch in one grid step."""

    def conv3x3_relu(x, wmat, bias, masks, c_in, c_out, w):
        # x: (B*c_in, npad) lane-dense -> (B*c_out, npad)
        npad = x.shape[1]
        # 9 lane rotations of the flat spatial axis == the 9 conv taps;
        # border masks reproduce the zero padding of Conv2d(padding=1).
        shifted = []
        for t in range(9):
            dy, dx = t // 3, t % 3
            s = (dy - 1) * w + (dx - 1)            # want out[p] = x[p + s]
            xs = x if s == 0 else pltpu.roll(x, shift=(-s) % npad, axis=1)
            shifted.append(xs * masks[t:t + 1, :])
        outs = []
        for b in range(B):
            if c_in == 1:
                # K=1 taps: cheaper as 9 broadcast MACs on the VPU than a
                # degenerate matmul (also avoids an unaligned sublane concat).
                acc = jnp.zeros((c_out, npad), jnp.float32) + bias
                for t in range(9):
                    acc = acc + wmat[:, t:t + 1] * shifted[t][b:b + 1, :]
            else:
                # im2col: one (c_out, 9*c_in) @ (9*c_in, npad) MXU matmul.
                patches = jnp.concatenate(
                    [sh[b * c_in:(b + 1) * c_in, :] for sh in shifted], axis=0)
                acc = jnp.dot(wmat, patches,
                              preferred_element_type=jnp.float32) + bias
            outs.append(jnp.maximum(acc, 0.0))
        return jnp.concatenate(outs, axis=0)

    def maxpool2x2(x, w, sel):
        # x: (rows, npad_in) at spatial width w -> (rows, npad_out)
        npad = x.shape[1]
        hmax = jnp.maximum(x, pltpu.roll(x, shift=(-1) % npad, axis=1))
        vmax = jnp.maximum(hmax, pltpu.roll(hmax, shift=(-w) % npad, axis=1))
        # constant 0/1 selection matmul: stride-2 decimation + lane-dense relayout
        return jnp.dot(vmax, sel, preferred_element_type=jnp.float32)

    x = x_ref[...]
    m1, m2 = m1_ref[...], m2_ref[...]

    a = conv3x3_relu(x, w1_ref[...], b1_ref[...], m1, cin, hid, W)
    a = conv3x3_relu(a, w2_ref[...], b2_ref[...], m1, hid, hid, W)
    a = maxpool2x2(a, W, s1_ref[...])
    W2 = W // 2
    a = conv3x3_relu(a, w3_ref[...], b3_ref[...], m2, hid, hid, W2)
    a = conv3x3_relu(a, w4_ref[...], b4_ref[...], m2, hid, hid, W2)
    a = maxpool2x2(a, W2, s2_ref[...])

    # classifier: per-image flatten in torch (C, H, W) order (channel-major),
    # built from 128-aligned lane blocks, then one (1, F) @ (F, O) matmul.
    wfc = wfc_ref[...]
    bfc = bfc_ref[...]
    for b in range(B):
        flat_b = jnp.concatenate(
            [a[b * hid + c:b * hid + c + 1, :] for c in range(hid)], axis=1)
        logits_b = jnp.dot(flat_b, wfc,
                           preferred_element_type=jnp.float32) + bfc
        out_ref[b:b + 1, :] = logits_b


def init_params(key, input_shape, hidden_units, output_shape):
    """Parameters in PyTorch layout: conv (cout, cin, 3, 3), linear (O, F)."""
    ks = jax.random.split(key, 10)

    def conv_w(k, c_in, c_out):
        return (jax.random.normal(k, (c_out, c_in, 3, 3), jnp.float32)
                * (1.0 / np.sqrt(9.0 * c_in)))

    feat = hidden_units * 7 * 7
    return {
        "w1": conv_w(ks[0], input_shape, hidden_units),
        "b1": jax.random.normal(ks[1], (hidden_units,), jnp.float32) * 0.01,
        "w2": conv_w(ks[2], hidden_units, hidden_units),
        "b2": jax.random.normal(ks[3], (hidden_units,), jnp.float32) * 0.01,
        "w3": conv_w(ks[4], hidden_units, hidden_units),
        "b3": jax.random.normal(ks[5], (hidden_units,), jnp.float32) * 0.01,
        "w4": conv_w(ks[6], hidden_units, hidden_units),
        "b4": jax.random.normal(ks[7], (hidden_units,), jnp.float32) * 0.01,
        "wfc": (jax.random.normal(ks[8], (output_shape, feat), jnp.float32)
                * (1.0 / np.sqrt(float(feat)))),
        "bfc": jax.random.normal(ks[9], (output_shape,), jnp.float32) * 0.01,
    }


def prepare_params(params):
    """One-time conversion from PyTorch-layout params to kernel layout."""
    hid = params["b1"].shape[0]
    n_cls, feat = params["wfc"].shape
    spatial = feat // hid                       # 7*7 = 49
    spad = _pad_lanes(spatial)                  # 128
    prep = {}
    for i in (1, 2, 3, 4):
        w = params[f"w{i}"]                     # (cout, cin, 3, 3)
        cout, cin_i = w.shape[0], w.shape[1]
        # column index = (dy*3+dx)*cin + ci, matching the kernel's patch order
        prep[f"w{i}"] = jnp.transpose(w, (0, 2, 3, 1)).reshape(cout, 9 * cin_i)
        prep[f"b{i}"] = params[f"b{i}"].reshape(cout, 1)
    wfc3 = params["wfc"].reshape(n_cls, hid, spatial)
    wfc3 = jnp.pad(wfc3, ((0, 0), (0, 0), (0, spad - spatial)))
    prep["wfc"] = jnp.transpose(wfc3.reshape(n_cls, hid * spad), (1, 0))
    prep["bfc"] = params["bfc"].reshape(1, n_cls)
    return prep


@jax.jit
def mnist_model_v1_forward(x_nchw, prep):
    B, cin, H, W = x_nchw.shape
    hid = prep["b1"].shape[0]
    n_cls = prep["bfc"].shape[1]
    assert H % 4 == 0 and W % 4 == 0, "two 2x2 max-pools need H, W % 4 == 0"
    H2, W2 = H // 2, W // 2
    n1 = _pad_lanes(H * W)
    n3 = _pad_lanes((H2 // 2) * (W2 // 2))
    assert prep["wfc"].shape == (hid * n3, n_cls)

    # Only wrapper-side glue: put HxW on the lane axis and pad to 128*k lanes.
    x2 = jnp.pad(x_nchw.astype(jnp.float32).reshape(B * cin, H * W),
                 ((0, 0), (0, n1 - H * W)))

    m1 = jnp.asarray(_conv_masks(H, W))
    m2 = jnp.asarray(_conv_masks(H2, W2))
    s1 = jnp.asarray(_pool_select(H, W))
    s2 = jnp.asarray(_pool_select(H2, W2))

    ins = (x2, prep["w1"], prep["b1"], prep["w2"], prep["b2"],
           prep["w3"], prep["b3"], prep["w4"], prep["b4"],
           prep["wfc"], prep["bfc"], m1, m2, s1, s2)

    kernel = functools.partial(_tinyvgg_kernel, B=B, cin=cin, hid=hid, H=H, W=W)
    return pl.pallas_call(
        kernel,
        out_shape=jax.ShapeDtypeStruct((B, n_cls), jnp.float32),
        grid=(1,),
        in_specs=[pl.BlockSpec(a.shape, lambda i: (0, 0)) for a in ins],
        out_specs=pl.BlockSpec((B, n_cls), lambda i: (0, 0)),
        compiler_params=pltpu.CompilerParams(
            dimension_semantics=("arbitrary",)),
    )(*ins)


if __name__ == "__main__":
    # MNIST-like: 1 input channel, 28x28 spatial (classifier expects
    # hidden_units * 7 * 7 in_features: 28 -> 14 -> 7).
    batch, in_ch, hidden, n_cls, hw = 2, 1, 8, 10, 28

    key = jax.random.PRNGKey(0)
    k_x, k_p = jax.random.split(key)
    x = jax.random.normal(k_x, (batch, in_ch, hw, hw), jnp.float32)  # NCHW
    params = init_params(k_p, in_ch, hidden, n_cls)
    prep = prepare_params(params)      # one-time weight re-layout (no per-call w.T)

    logits = mnist_model_v1_forward(x, prep)
    jax.block_until_ready(logits)
    assert logits.shape == (batch, n_cls), logits.shape
    print("KERNEL_OK")
</pallas_src>

<mosaic_0001>
module attributes {stable_mosaic.version = 11 : i64} {
  func.func @_tinyvgg_kernel(%arg0: i32, %arg1: memref<2x896xf32, #tpu.memory_space<vmem>>, %arg2: memref<8x9xf32, #tpu.memory_space<vmem>>, %arg3: memref<8x1xf32, #tpu.memory_space<vmem>>, %arg4: memref<8x72xf32, #tpu.memory_space<vmem>>, %arg5: memref<8x1xf32, #tpu.memory_space<vmem>>, %arg6: memref<8x72xf32, #tpu.memory_space<vmem>>, %arg7: memref<8x1xf32, #tpu.memory_space<vmem>>, %arg8: memref<8x72xf32, #tpu.memory_space<vmem>>, %arg9: memref<8x1xf32, #tpu.memory_space<vmem>>, %arg10: memref<1024x10xf32, #tpu.memory_space<vmem>>, %arg11: memref<1x10xf32, #tpu.memory_space<vmem>>, %arg12: memref<9x896xf32, #tpu.memory_space<vmem>>, %arg13: memref<9x256xf32, #tpu.memory_space<vmem>>, %arg14: memref<896x256xf32, #tpu.memory_space<vmem>>, %arg15: memref<256x128xf32, #tpu.memory_space<vmem>>, %arg16: memref<2x10xf32, #tpu.memory_space<vmem>>) attributes {dimension_semantics = [#tpu.dimension_semantics<arbitrary>], iteration_bounds = array<i64: 1>, scalar_prefetch = 0 : i64, scratch_operands = 0 : i64, tpu.core_type = #tpu.core_type<tc>, window_params = [{pipeline_mode = #tpu.pipeline_mode<synchronous>, transform_indices = @transform_0, window_bounds = array<i64: 2, 896>}, {pipeline_mode = #tpu.pipeline_mode<synchronous>, transform_indices = @transform_1, window_bounds = array<i64: 8, 9>}, {pipeline_mode = #tpu.pipeline_mode<synchronous>, transform_indices = @transform_2, window_bounds = array<i64: 8, 1>}, {pipeline_mode = #tpu.pipeline_mode<synchronous>, transform_indices = @transform_3, window_bounds = array<i64: 8, 72>}, {pipeline_mode = #tpu.pipeline_mode<synchronous>, transform_indices = @transform_4, window_bounds = array<i64: 8, 1>}, {pipeline_mode = #tpu.pipeline_mode<synchronous>, transform_indices = @transform_5, window_bounds = array<i64: 8, 72>}, {pipeline_mode = #tpu.pipeline_mode<synchronous>, transform_indices = @transform_6, window_bounds = array<i64: 8, 1>}, {pipeline_mode = #tpu.pipeline_mode<synchronous>, transform_indices = @transform_7, window_bounds = array<i64: 8, 72>}, {pipeline_mode = #tpu.pipeline_mode<synchronous>, transform_indices = @transform_8, window_bounds = array<i64: 8, 1>}, {pipeline_mode = #tpu.pipeline_mode<synchronous>, transform_indices = @transform_9, window_bounds = array<i64: 1024, 10>}, {pipeline_mode = #tpu.pipeline_mode<synchronous>, transform_indices = @transform_10, window_bounds = array<i64: 1, 10>}, {pipeline_mode = #tpu.pipeline_mode<synchronous>, transform_indices = @transform_11, window_bounds = array<i64: 9, 896>}, {pipeline_mode = #tpu.pipeline_mode<synchronous>, transform_indices = @transform_12, window_bounds = array<i64: 9, 256>}, {pipeline_mode = #tpu.pipeline_mode<synchronous>, transform_indices = @transform_13, window_bounds = array<i64: 896, 256>}, {pipeline_mode = #tpu.pipeline_mode<synchronous>, transform_indices = @transform_14, window_bounds = array<i64: 256, 128>}, {pipeline_mode = #tpu.pipeline_mode<synchronous>, transform_indices = @transform_15, window_bounds = array<i64: 2, 10>}]} {
    %c0 = arith.constant 0 : index
    %c0_0 = arith.constant 0 : index
    %0 = vector.load %arg1[%c0, %c0_0] : memref<2x896xf32, #tpu.memory_space<vmem>>, vector<2x896xf32>
    %c0_1 = arith.constant 0 : index
    %c0_2 = arith.constant 0 : index
    %1 = vector.load %arg12[%c0_1, %c0_2] : memref<9x896xf32, #tpu.memory_space<vmem>>, vector<9x896xf32>
    %c0_3 = arith.constant 0 : index
    %c0_4 = arith.constant 0 : index
    %2 = vector.load %arg13[%c0_3, %c0_4] : memref<9x256xf32, #tpu.memory_space<vmem>>, vector<9x256xf32>
    %c0_5 = arith.constant 0 : index
    %c0_6 = arith.constant 0 : index
    %3 = vector.load %arg2[%c0_5, %c0_6] : memref<8x9xf32, #tpu.memory_space<vmem>>, vector<8x9xf32>
    %c0_7 = arith.constant 0 : index
    %c0_8 = arith.constant 0 : index
    %4 = vector.load %arg3[%c0_7, %c0_8] : memref<8x1xf32, #tpu.memory_space<vmem>>, vector<8x1xf32>
    %c29_i32 = arith.constant 29 : i32
    %5 = tpu.dynamic_rotate %0 by %c29_i32 dim 1 : vector<2x896xf32>, i32 -> vector<2x896xf32>
    %6 = vector.extract_strided_slice %1 {offsets = [0, 0], sizes = [1, 896], strides = [1, 1]} : vector<9x896xf32> to vector<1x896xf32>
    %7 = vector.broadcast %6 : vector<1x896xf32> to vector<2x896xf32>
    %8 = arith.mulf %5, %7 : vector<2x896xf32>
    %c28_i32 = arith.constant 28 : i32
    %9 = tpu.dynamic_rotate %0 by %c28_i32 dim 1 : vector<2x896xf32>, i32 -> vector<2x896xf32>
    %10 = vector.extract_strided_slice %1 {offsets = [1, 0], sizes = [1, 896], strides = [1, 1]} : vector<9x896xf32> to vector<1x896xf32>
    %11 = vector.broadcast %10 : vector<1x896xf32> to vector<2x896xf32>
    %12 = arith.mulf %9, %11 : vector<2x896xf32>
    %c27_i32 = arith.constant 27 : i32
    %13 = tpu.dynamic_rotate %0 by %c27_i32 dim 1 : vector<2x896xf32>, i32 -> vector<2x896xf32>
    %14 = vector.extract_strided_slice %1 {offsets = [2, 0], sizes = [1, 896], strides = [1, 1]} : vector<9x896xf32> to vector<1x896xf32>
    %15 = vector.broadcast %14 : vector<1x896xf32> to vector<2x896xf32>
    %16 = arith.mulf %13, %15 : vector<2x896xf32>
    %c1_i32 = arith.constant 1 : i32
    %17 = tpu.dynamic_rotate %0 by %c1_i32 dim 1 : vector<2x896xf32>, i32 -> vector<2x896xf32>
    %18 = vector.extract_strided_slice %1 {offsets = [3, 0], sizes = [1, 896], strides = [1, 1]} : vector<9x896xf32> to vector<1x896xf32>
    %19 = vector.broadcast %18 : vector<1x896xf32> to vector<2x896xf32>
    %20 = arith.mulf %17, %19 : vector<2x896xf32>
    %21 = vector.extract_strided_slice %1 {offsets = [4, 0], sizes = [1, 896], strides = [1, 1]} : vector<9x896xf32> to vector<1x896xf32>
    %22 = vector.broadcast %21 : vector<1x896xf32> to vector<2x896xf32>
    %23 = arith.mulf %0, %22 : vector<2x896xf32>
    %c895_i32 = arith.constant 895 : i32
    %24 = tpu.dynamic_rotate %0 by %c895_i32 dim 1 : vector<2x896xf32>, i32 -> vector<2x896xf32>
    %25 = vector.extract_strided_slice %1 {offsets = [5, 0], sizes = [1, 896], strides = [1, 1]} : vector<9x896xf32> to vector<1x896xf32>
    %26 = vector.broadcast %25 : vector<1x896xf32> to vector<2x896xf32>
    %27 = arith.mulf %24, %26 : vector<2x896xf32>
    %c869_i32 = arith.constant 869 : i32
    %28 = tpu.dynamic_rotate %0 by %c869_i32 dim 1 : vector<2x896xf32>, i32 -> vector<2x896xf32>
    %29 = vector.extract_strided_slice %1 {offsets = [6, 0], sizes = [1, 896], strides = [1, 1]} : vector<9x896xf32> to vector<1x896xf32>
    %30 = vector.broadcast %29 : vector<1x896xf32> to vector<2x896xf32>
    %31 = arith.mulf %28, %30 : vector<2x896xf32>
    %c868_i32 = arith.constant 868 : i32
    %32 = tpu.dynamic_rotate %0 by %c868_i32 dim 1 : vector<2x896xf32>, i32 -> vector<2x896xf32>
    %33 = vector.extract_strided_slice %1 {offsets = [7, 0], sizes = [1, 896], strides = [1, 1]} : vector<9x896xf32> to vector<1x896xf32>
    %34 = vector.broadcast %33 : vector<1x896xf32> to vector<2x896xf32>
    %35 = arith.mulf %32, %34 : vector<2x896xf32>
    %c867_i32 = arith.constant 867 : i32
    %36 = tpu.dynamic_rotate %0 by %c867_i32 dim 1 : vector<2x896xf32>, i32 -> vector<2x896xf32>
    %37 = vector.extract_strided_slice %1 {offsets = [8, 0], sizes = [1, 896], strides = [1, 1]} : vector<9x896xf32> to vector<1x896xf32>
    %38 = vector.broadcast %37 : vector<1x896xf32> to vector<2x896xf32>
    %39 = arith.mulf %36, %38 : vector<2x896xf32>
    %cst = arith.constant 0.000000e+00 : f32
    %40 = vector.broadcast %cst : f32 to vector<8x896xf32>
    %41 = vector.broadcast %4 : vector<8x1xf32> to vector<8x896xf32>
    %42 = arith.addf %40, %41 : vector<8x896xf32>
    %43 = vector.extract_strided_slice %3 {offsets = [0, 0], sizes = [8, 1], strides = [1, 1]} : vector<8x9xf32> to vector<8x1xf32>
    %44 = vector.extract_strided_slice %8 {offsets = [0, 0], sizes = [1, 896], strides = [1, 1]} : vector<2x896xf32> to vector<1x896xf32>
    %45 = vector.broadcast %43 : vector<8x1xf32> to vector<8x896xf32>
    %46 = vector.broadcast %44 : vector<1x896xf32> to vector<8x896xf32>
    %47 = arith.mulf %45, %46 : vector<8x896xf32>
    %48 = arith.addf %42, %47 : vector<8x896xf32>
    %49 = vector.extract_strided_slice %3 {offsets = [0, 1], sizes = [8, 1], strides = [1, 1]} : vector<8x9xf32> to vector<8x1xf32>
    %50 = vector.extract_strided_slice %12 {offsets = [0, 0], sizes = [1, 896], strides = [1, 1]} : vector<2x896xf32> to vector<1x896xf32>
    %51 = vector.broadcast %49 : vector<8x1xf32> to vector<8x896xf32>
    %52 = vector.broadcast %50 : vector<1x896xf32> to vector<8x896xf32>
    %53 = arith.mulf %51, %52 : vector<8x896xf32>
    %54 = arith.addf %48, %53 : vector<8x896xf32>
    %55 = vector.extract_strided_slice %3 {offsets = [0, 2], sizes = [8, 1], strides = [1, 1]} : vector<8x9xf32> to vector<8x1xf32>
    %56 = vector.extract_strided_slice %16 {offsets = [0, 0], sizes = [1, 896], strides = [1, 1]} : vector<2x896xf32> to vector<1x896xf32>
    %57 = vector.broadcast %55 : vector<8x1xf32> to vector<8x896xf32>
    %58 = vector.broadcast %56 : vector<1x896xf32> to vector<8x896xf32>
    %59 = arith.mulf %57, %58 : vector<8x896xf32>
    %60 = arith.addf %54, %59 : vector<8x896xf32>
    %61 = vector.extract_strided_slice %3 {offsets = [0, 3], sizes = [8, 1], strides = [1, 1]} : vector<8x9xf32> to vector<8x1xf32>
    %62 = vector.extract_strided_slice %20 {offsets = [0, 0], sizes = [1, 896], strides = [1, 1]} : vector<2x896xf32> to vector<1x896xf32>
    %63 = vector.broadcast %61 : vector<8x1xf32> to vector<8x896xf32>
    %64 = vector.broadcast %62 : vector<1x896xf32> to vector<8x896xf32>
    %65 = arith.mulf %63, %64 : vector<8x896xf32>
    %66 = arith.addf %60, %65 : vector<8x896xf32>
    %67 = vector.extract_strided_slice %3 {offsets = [0, 4], sizes = [8, 1], strides = [1, 1]} : vector<8x9xf32> to vector<8x1xf32>
    %68 = vector.extract_strided_slice %23 {offsets = [0, 0], sizes = [1, 896], strides = [1, 1]} : vector<2x896xf32> to vector<1x896xf32>
    %69 = vector.broadcast %67 : vector<8x1xf32> to vector<8x896xf32>
    %70 = vector.broadcast %68 : vector<1x896xf32> to vector<8x896xf32>
    %71 = arith.mulf %69, %70 : vector<8x896xf32>
    %72 = arith.addf %66, %71 : vector<8x896xf32>
    %73 = vector.extract_strided_slice %3 {offsets = [0, 5], sizes = [8, 1], strides = [1, 1]} : vector<8x9xf32> to vector<8x1xf32>
    %74 = vector.extract_strided_slice %27 {offsets = [0, 0], sizes = [1, 896], strides = [1, 1]} : vector<2x896xf32> to vector<1x896xf32>
    %75 = vector.broadcast %73 : vector<8x1xf32> to vector<8x896xf32>
    %76 = vector.broadcast %74 : vector<1x896xf32> to vector<8x896xf32>
    %77 = arith.mulf %75, %76 : vector<8x896xf32>
    %78 = arith.addf %72, %77 : vector<8x896xf32>
    %79 = vector.extract_strided_slice %3 {offsets = [0, 6], sizes = [8, 1], strides = [1, 1]} : vector<8x9xf32> to vector<8x1xf32>
    %80 = vector.extract_strided_slice %31 {offsets = [0, 0], sizes = [1, 896], strides = [1, 1]} : vector<2x896xf32> to vector<1x896xf32>
    %81 = vector.broadcast %79 : vector<8x1xf32> to vector<8x896xf32>
    %82 = vector.broadcast %80 : vector<1x896xf32> to vector<8x896xf32>
    %83 = arith.mulf %81, %82 : vector<8x896xf32>
    %84 = arith.addf %78, %83 : vector<8x896xf32>
    %85 = vector.extract_strided_slice %3 {offsets = [0, 7], sizes = [8, 1], strides = [1, 1]} : vector<8x9xf32> to vector<8x1xf32>
    %86 = vector.extract_strided_slice %35 {offsets = [0, 0], sizes = [1, 896], strides = [1, 1]} : vector<2x896xf32> to vector<1x896xf32>
    %87 = vector.broadcast %85 : vector<8x1xf32> to vector<8x896xf32>
    %88 = vector.broadcast %86 : vector<1x896xf32> to vector<8x896xf32>
    %89 = arith.mulf %87, %88 : vector<8x896xf32>
    %90 = arith.addf %84, %89 : vector<8x896xf32>
    %91 = vector.extract_strided_slice %3 {offsets = [0, 8], sizes = [8, 1], strides = [1, 1]} : vector<8x9xf32> to vector<8x1xf32>
    %92 = vector.extract_strided_slice %39 {offsets = [0, 0], sizes = [1, 896], strides = [1, 1]} : vector<2x896xf32> to vector<1x896xf32>
    %93 = vector.broadcast %91 : vector<8x1xf32> to vector<8x896xf32>
    %94 = vector.broadcast %92 : vector<1x896xf32> to vector<8x896xf32>
    %95 = arith.mulf %93, %94 : vector<8x896xf32>
    %96 = arith.addf %90, %95 : vector<8x896xf32>
    %cst_9 = arith.constant 0.000000e+00 : f32
    %97 = vector.broadcast %cst_9 : f32 to vector<8x896xf32>
    %98 = arith.maximumf %96, %97 : vector<8x896xf32>
    %cst_10 = arith.constant 0.000000e+00 : f32
    %99 = vector.broadcast %cst_10 : f32 to vector<8x896xf32>
    %100 = vector.broadcast %4 : vector<8x1xf32> to vector<8x896xf32>
    %101 = arith.addf %99, %100 : vector<8x896xf32>
    %102 = vector.extract_strided_slice %3 {offsets = [0, 0], sizes = [8, 1], strides = [1, 1]} : vector<8x9xf32> to vector<8x1xf32>
    %103 = vector.extract_strided_slice %8 {offsets = [1, 0], sizes = [1, 896], strides = [1, 1]} : vector<2x896xf32> to vector<1x896xf32>
    %104 = vector.broadcast %102 : vector<8x1xf32> to vector<8x896xf32>
    %105 = vector.broadcast %103 : vector<1x896xf32> to vector<8x896xf32>
    %106 = arith.mulf %104, %105 : vector<8x896xf32>
    %107 = arith.addf %101, %106 : vector<8x896xf32>
    %108 = vector.extract_strided_slice %3 {offsets = [0, 1], sizes = [8, 1], strides = [1, 1]} : vector<8x9xf32> to vector<8x1xf32>
    %109 = vector.extract_strided_slice %12 {offsets = [1, 0], sizes = [1, 896], strides = [1, 1]} : vector<2x896xf32> to vector<1x896xf32>
    %110 = vector.broadcast %108 : vector<8x1xf32> to vector<8x896xf32>
    %111 = vector.broadcast %109 : vector<1x896xf32> to vector<8x896xf32>
    %112 = arith.mulf %110, %111 : vector<8x896xf32>
    %113 = arith.addf %107, %112 : vector<8x896xf32>
    %114 = vector.extract_strided_slice %3 {offsets = [0, 2], sizes = [8, 1], strides = [1, 1]} : vector<8x9xf32> to vector<8x1xf32>
    %115 = vector.extract_strided_slice %16 {offsets = [1, 0], sizes = [1, 896], strides = [1, 1]} : vector<2x896xf32> to vector<1x896xf32>
    %116 = vector.broadcast %114 : vector<8x1xf32> to vector<8x896xf32>
    %117 = vector.broadcast %115 : vector<1x896xf32> to vector<8x896xf32>
    %118 = arith.mulf %116, %117 : vector<8x896xf32>
    %119 = arith.addf %113, %118 : vector<8x896xf32>
    %120 = vector.extract_strided_slice %3 {offsets = [0, 3], sizes = [8, 1], strides = [1, 1]} : vector<8x9xf32> to vector<8x1xf32>
    %121 = vector.extract_strided_slice %20 {offsets = [1, 0], sizes = [1, 896], strides = [1, 1]} : vector<2x896xf32> to vector<1x896xf32>
    %122 = vector.broadcast %120 : vector<8x1xf32> to vector<8x896xf32>
    %123 = vector.broadcast %121 : vector<1x896xf32> to vector<8x896xf32>
    %124 = arith.mulf %122, %123 : vector<8x896xf32>
    %125 = arith.addf %119, %124 : vector<8x896xf32>
    %126 = vector.extract_strided_slice %3 {offsets = [0, 4], sizes = [8, 1], strides = [1, 1]} : vector<8x9xf32> to vector<8x1xf32>
    %127 = vector.extract_strided_slice %23 {offsets = [1, 0], sizes = [1, 896], strides = [1, 1]} : vector<2x896xf32> to vector<1x896xf32>
    %128 = vector.broadcast %126 : vector<8x1xf32> to vector<8x896xf32>
    %129 = vector.broadcast %127 : vector<1x896xf32> to vector<8x896xf32>
    %130 = arith.mulf %128, %129 : vector<8x896xf32>
    %131 = arith.addf %125, %130 : vector<8x896xf32>
    %132 = vector.extract_strided_slice %3 {offsets = [0, 5], sizes = [8, 1], strides = [1, 1]} : vector<8x9xf32> to vector<8x1xf32>
    %133 = vector.extract_strided_slice %27 {offsets = [1, 0], sizes = [1, 896], strides = [1, 1]} : vector<2x896xf32> to vector<1x896xf32>
    %134 = vector.broadcast %132 : vector<8x1xf32> to vector<8x896xf32>
    %135 = vector.broadcast %133 : vector<1x896xf32> to vector<8x896xf32>
    %136 = arith.mulf %134, %135 : vector<8x896xf32>
    %137 = arith.addf %131, %136 : vector<8x896xf32>
    %138 = vector.extract_strided_slice %3 {offsets = [0, 6], sizes = [8, 1], strides = [1, 1]} : vector<8x9xf32> to vector<8x1xf32>
    %139 = vector.extract_strided_slice %31 {offsets = [1, 0], sizes = [1, 896], strides = [1, 1]} : vector<2x896xf32> to vector<1x896xf32>
    %140 = vector.broadcast %138 : vector<8x1xf32> to vector<8x896xf32>
    %141 = vector.broadcast %139 : vector<1x896xf32> to vector<8x896xf32>
    %142 = arith.mulf %140, %141 : vector<8x896xf32>
    %143 = arith.addf %137, %142 : vector<8x896xf32>
    %144 = vector.extract_strided_slice %3 {offsets = [0, 7], sizes = [8, 1], strides = [1, 1]} : vector<8x9xf32> to vector<8x1xf32>
    %145 = vector.extract_strided_slice %35 {offsets = [1, 0], sizes = [1, 896], strides = [1, 1]} : vector<2x896xf32> to vector<1x896xf32>
    %146 = vector.broadcast %144 : vector<8x1xf32> to vector<8x896xf32>
    %147 = vector.broadcast %145 : vector<1x896xf32> to vector<8x896xf32>
    %148 = arith.mulf %146, %147 : vector<8x896xf32>
    %149 = arith.addf %143, %148 : vector<8x896xf32>
    %150 = vector.extract_strided_slice %3 {offsets = [0, 8], sizes = [8, 1], strides = [1, 1]} : vector<8x9xf32> to vector<8x1xf32>
    %151 = vector.extract_strided_slice %39 {offsets = [1, 0], sizes = [1, 896], strides = [1, 1]} : vector<2x896xf32> to vector<1x896xf32>
    %152 = vector.broadcast %150 : vector<8x1xf32> to vector<8x896xf32>
    %153 = vector.broadcast %151 : vector<1x896xf32> to vector<8x896xf32>
    %154 = arith.mulf %152, %153 : vector<8x896xf32>
    %155 = arith.addf %149, %154 : vector<8x896xf32>
    %cst_11 = arith.constant 0.000000e+00 : f32
    %156 = vector.broadcast %cst_11 : f32 to vector<8x896xf32>
    %157 = arith.maximumf %155, %156 : vector<8x896xf32>
    %158 = tpu.concatenate %98, %157 in 0 : vector<8x896xf32>, vector<8x896xf32> -> vector<16x896xf32>
    %c0_12 = arith.constant 0 : index
    %c0_13 = arith.constant 0 : index
    %159 = vector.load %arg4[%c0_12, %c0_13] : memref<8x72xf32, #tpu.memory_space<vmem>>, vector<8x72xf32>
    %c0_14 = arith.constant 0 : index
    %c0_15 = arith.constant 0 : index
    %160 = vector.load %arg5[%c0_14, %c0_15] : memref<8x1xf32, #tpu.memory_space<vmem>>, vector<8x1xf32>
    %c29_i32_16 = arith.constant 29 : i32
    %161 = tpu.dynamic_rotate %158 by %c29_i32_16 dim 1 : vector<16x896xf32>, i32 -> vector<16x896xf32>
    %162 = vector.extract_strided_slice %1 {offsets = [0, 0], sizes = [1, 896], strides = [1, 1]} : vector<9x896xf32> to vector<1x896xf32>
    %163 = vector.broadcast %162 : vector<1x896xf32> to vector<16x896xf32>
    %164 = arith.mulf %161, %163 : vector<16x896xf32>
    %c28_i32_17 = arith.constant 28 : i32
    %165 = tpu.dynamic_rotate %158 by %c28_i32_17 dim 1 : vector<16x896xf32>, i32 -> vector<16x896xf32>
    %166 = vector.extract_strided_slice %1 {offsets = [1, 0], sizes = [1, 896], strides = [1, 1]} : vector<9x896xf32> to vector<1x896xf32>
    %167 = vector.broadcast %166 : vector<1x896xf32> to vector<16x896xf32>
    %168 = arith.mulf %165, %167 : vector<16x896xf32>
    %c27_i32_18 = arith.constant 27 : i32
    %169 = tpu.dynamic_rotate %158 by %c27_i32_18 dim 1 : vector<16x896xf32>, i32 -> vector<16x896xf32>
    %170 = vector.extract_strided_slice %1 {offsets = [2, 0], sizes = [1, 896], strides = [1, 1]} : vector<9x896xf32> to vector<1x896xf32>
    %171 = vector.broadcast %170 : vector<1x896xf32> to vector<16x896xf32>
    %172 = arith.mulf %169, %171 : vector<16x896xf32>
    %c1_i32_19 = arith.constant 1 : i32
    %173 = tpu.dynamic_rotate %158 by %c1_i32_19 dim 1 : vector<16x896xf32>, i32 -> vector<16x896xf32>
    %174 = vector.extract_strided_slice %1 {offsets = [3, 0], sizes = [1, 896], strides = [1, 1]} : vector<9x896xf32> to vector<1x896xf32>
    %175 = vector.broadcast %174 : vector<1x896xf32> to vector<16x896xf32>
    %176 = arith.mulf %173, %175 : vector<16x896xf32>
    %177 = vector.extract_strided_slice %1 {offsets = [4, 0], sizes = [1, 896], strides = [1, 1]} : vector<9x896xf32> to vector<1x896xf32>
    %178 = vector.broadcast %177 : vector<1x896xf32> to vector<16x896xf32>
    %179 = arith.mulf %158, %178 : vector<16x896xf32>
    %c895_i32_20 = arith.constant 895 : i32
    %180 = tpu.dynamic_rotate %158 by %c895_i32_20 dim 1 : vector<16x896xf32>, i32 -> vector<16x896xf32>
    %181 = vector.extract_strided_slice %1 {offsets = [5, 0], sizes = [1, 896], strides = [1, 1]} : vector<9x896xf32> to vector<1x896xf32>
    %182 = vector.broadcast %181 : vector<1x896xf32> to vector<16x896xf32>
    %183 = arith.mulf %180, %182 : vector<16x896xf32>
    %c869_i32_21 = arith.constant 869 : i32
    %184 = tpu.dynamic_rotate %158 by %c869_i32_21 dim 1 : vector<16x896xf32>, i32 -> vector<16x896xf32>
    %185 = vector.extract_strided_slice %1 {offsets = [6, 0], sizes = [1, 896], strides = [1, 1]} : vector<9x896xf32> to vector<1x896xf32>
    %186 = vector.broadcast %185 : vector<1x896xf32> to vector<16x896xf32>
    %187 = arith.mulf %184, %186 : vector<16x896xf32>
    %c868_i32_22 = arith.constant 868 : i32
    %188 = tpu.dynamic_rotate %158 by %c868_i32_22 dim 1 : vector<16x896xf32>, i32 -> vector<16x896xf32>
    %189 = vector.extract_strided_slice %1 {offsets = [7, 0], sizes = [1, 896], strides = [1, 1]} : vector<9x896xf32> to vector<1x896xf32>
    %190 = vector.broadcast %189 : vector<1x896xf32> to vector<16x896xf32>
    %191 = arith.mulf %188, %190 : vector<16x896xf32>
    %c867_i32_23 = arith.constant 867 : i32
    %192 = tpu.dynamic_rotate %158 by %c867_i32_23 dim 1 : vector<16x896xf32>, i32 -> vector<16x896xf32>
    %193 = vector.extract_strided_slice %1 {offsets = [8, 0], sizes = [1, 896], strides = [1, 1]} : vector<9x896xf32> to vector<1x896xf32>
    %194 = vector.broadcast %193 : vector<1x896xf32> to vector<16x896xf32>
    %195 = arith.mulf %192, %194 : vector<16x896xf32>
    %196 = vector.extract_strided_slice %164 {offsets = [0, 0], sizes = [8, 896], strides = [1, 1]} : vector<16x896xf32> to vector<8x896xf32>
    %197 = vector.extract_strided_slice %168 {offsets = [0, 0], sizes = [8, 896], strides = [1, 1]} : vector<16x896xf32> to vector<8x896xf32>
    %198 = vector.extract_strided_slice %172 {offsets = [0, 0], sizes = [8, 896], strides = [1, 1]} : vector<16x896xf32> to vector<8x896xf32>
    %199 = vector.extract_strided_slice %176 {offsets = [0, 0], sizes = [8, 896], strides = [1, 1]} : vector<16x896xf32> to vector<8x896xf32>
    %200 = vector.extract_strided_slice %179 {offsets = [0, 0], sizes = [8, 896], strides = [1, 1]} : vector<16x896xf32> to vector<8x896xf32>
    %201 = vector.extract_strided_slice %183 {offsets = [0, 0], sizes = [8, 896], strides = [1, 1]} : vector<16x896xf32> to vector<8x896xf32>
    %202 = vector.extract_strided_slice %187 {offsets = [0, 0], sizes = [8, 896], strides = [1, 1]} : vector<16x896xf32> to vector<8x896xf32>
    %203 = vector.extract_strided_slice %191 {offsets = [0, 0], sizes = [8, 896], strides = [1, 1]} : vector<16x896xf32> to vector<8x896xf32>
    %204 = vector.extract_strided_slice %195 {offsets = [0, 0], sizes = [8, 896], strides = [1, 1]} : vector<16x896xf32> to vector<8x896xf32>
    %205 = tpu.concatenate %196, %197, %198, %199, %200, %201, %202, %203, %204 in 0 : vector<8x896xf32>, vector<8x896xf32>, vector<8x896xf32>, vector<8x896xf32>, vector<8x896xf32>, vector<8x896xf32>, vector<8x896xf32>, vector<8x896xf32>, vector<8x896xf32> -> vector<72x896xf32>
    %cst_24 = arith.constant dense<0.000000e+00> : vector<8x896xf32>
    %206 = tpu.matmul %159, %205, %cst_24 {dimension_numbers = #tpu.dot_dimension_numbers<[1], [0], [0], [1], [0, 0, 1, 1], [], []>} : vector<8x72xf32>, vector<72x896xf32>, vector<8x896xf32> -> vector<8x896xf32>
    %207 = vector.broadcast %160 : vector<8x1xf32> to vector<8x896xf32>
    %208 = arith.addf %206, %207 : vector<8x896xf32>
    %cst_25 = arith.constant 0.000000e+00 : f32
    %209 = vector.broadcast %cst_25 : f32 to vector<8x896xf32>
    %210 = arith.maximumf %208, %209 : vector<8x896xf32>
    %211 = vector.extract_strided_slice %164 {offsets = [8, 0], sizes = [8, 896], strides = [1, 1]} : vector<16x896xf32> to vector<8x896xf32>
    %212 = vector.extract_strided_slice %168 {offsets = [8, 0], sizes = [8, 896], strides = [1, 1]} : vector<16x896xf32> to vector<8x896xf32>
    %213 = vector.extract_strided_slice %172 {offsets = [8, 0], sizes = [8, 896], strides = [1, 1]} : vector<16x896xf32> to vector<8x896xf32>
    %214 = vector.extract_strided_slice %176 {offsets = [8, 0], sizes = [8, 896], strides = [1, 1]} : vector<16x896xf32> to vector<8x896xf32>
    %215 = vector.extract_strided_slice %179 {offsets = [8, 0], sizes = [8, 896], strides = [1, 1]} : vector<16x896xf32> to vector<8x896xf32>
    %216 = vector.extract_strided_slice %183 {offsets = [8, 0], sizes = [8, 896], strides = [1, 1]} : vector<16x896xf32> to vector<8x896xf32>
    %217 = vector.extract_strided_slice %187 {offsets = [8, 0], sizes = [8, 896], strides = [1, 1]} : vector<16x896xf32> to vector<8x896xf32>
    %218 = vector.extract_strided_slice %191 {offsets = [8, 0], sizes = [8, 896], strides = [1, 1]} : vector<16x896xf32> to vector<8x896xf32>
    %219 = vector.extract_strided_slice %195 {offsets = [8, 0], sizes = [8, 896], strides = [1, 1]} : vector<16x896xf32> to vector<8x896xf32>
    %220 = tpu.concatenate %211, %212, %213, %214, %215, %216, %217, %218, %219 in 0 : vector<8x896xf32>, vector<8x896xf32>, vector<8x896xf32>, vector<8x896xf32>, vector<8x896xf32>, vector<8x896xf32>, vector<8x896xf32>, vector<8x896xf32>, vector<8x896xf32> -> vector<72x896xf32>
    %cst_26 = arith.constant dense<0.000000e+00> : vector<8x896xf32>
    %221 = tpu.matmul %159, %220, %cst_26 {dimension_numbers = #tpu.dot_dimension_numbers<[1], [0], [0], [1], [0, 0, 1, 1], [], []>} : vector<8x72xf32>, vector<72x896xf32>, vector<8x896xf32> -> vector<8x896xf32>
    %222 = vector.broadcast %160 : vector<8x1xf32> to vector<8x896xf32>
    %223 = arith.addf %221, %222 : vector<8x896xf32>
    %cst_27 = arith.constant 0.000000e+00 : f32
    %224 = vector.broadcast %cst_27 : f32 to vector<8x896xf32>
    %225 = arith.maximumf %223, %224 : vector<8x896xf32>
    %226 = tpu.concatenate %210, %225 in 0 : vector<8x896xf32>, vector<8x896xf32> -> vector<16x896xf32>
    %c0_28 = arith.constant 0 : index
    %c0_29 = arith.constant 0 : index
    %227 = vector.load %arg14[%c0_28, %c0_29] : memref<896x256xf32, #tpu.memory_space<vmem>>, vector<896x256xf32>
    %c895_i32_30 = arith.constant 895 : i32
    %228 = tpu.dynamic_rotate %226 by %c895_i32_30 dim 1 : vector<16x896xf32>, i32 -> vector<16x896xf32>
    %229 = arith.maximumf %226, %228 : vector<16x896xf32>
    %c868_i32_31 = arith.constant 868 : i32
    %230 = tpu.dynamic_rotate %229 by %c868_i32_31 dim 1 : vector<16x896xf32>, i32 -> vector<16x896xf32>
    %231 = arith.maximumf %229, %230 : vector<16x896xf32>
    %cst_32 = arith.constant dense<0.000000e+00> : vector<16x256xf32>
    %232 = tpu.matmul %231, %227, %cst_32 {dimension_numbers = #tpu.dot_dimension_numbers<[1], [0], [0], [1], [0, 0, 1, 1], [], []>} : vector<16x896xf32>, vector<896x256xf32>, vector<16x256xf32> -> vector<16x256xf32>
    %c0_33 = arith.constant 0 : index
    %c0_34 = arith.constant 0 : index
    %233 = vector.load %arg6[%c0_33, %c0_34] : memref<8x72xf32, #tpu.memory_space<vmem>>, vector<8x72xf32>
    %c0_35 = arith.constant 0 : index
    %c0_36 = arith.constant 0 : index
    %234 = vector.load %arg7[%c0_35, %c0_36] : memref<8x1xf32, #tpu.memory_space<vmem>>, vector<8x1xf32>
    %c15_i32 = arith.constant 15 : i32
    %235 = tpu.dynamic_rotate %232 by %c15_i32 dim 1 : vector<16x256xf32>, i32 -> vector<16x256xf32>
    %236 = vector.extract_strided_slice %2 {offsets = [0, 0], sizes = [1, 256], strides = [1, 1]} : vector<9x256xf32> to vector<1x256xf32>
    %237 = vector.broadcast %236 : vector<1x256xf32> to vector<16x256xf32>
    %238 = arith.mulf %235, %237 : vector<16x256xf32>
    %c14_i32 = arith.constant 14 : i32
    %239 = tpu.dynamic_rotate %232 by %c14_i32 dim 1 : vector<16x256xf32>, i32 -> vector<16x256xf32>
    %240 = vector.extract_strided_slice %2 {offsets = [1, 0], sizes = [1, 256], strides = [1, 1]} : vector<9x256xf32> to vector<1x256xf32>
    %241 = vector.broadcast %240 : vector<1x256xf32> to vector<16x256xf32>
    %242 = arith.mulf %239, %241 : vector<16x256xf32>
    %c13_i32 = arith.constant 13 : i32
    %243 = tpu.dynamic_rotate %232 by %c13_i32 dim 1 : vector<16x256xf32>, i32 -> vector<16x256xf32>
    %244 = vector.extract_strided_slice %2 {offsets = [2, 0], sizes = [1, 256], strides = [1, 1]} : vector<9x256xf32> to vector<1x256xf32>
    %245 = vector.broadcast %244 : vector<1x256xf32> to vector<16x256xf32>
    %246 = arith.mulf %243, %245 : vector<16x256xf32>
    %c1_i32_37 = arith.constant 1 : i32
    %247 = tpu.dynamic_rotate %232 by %c1_i32_37 dim 1 : vector<16x256xf32>, i32 -> vector<16x256xf32>
    %248 = vector.extract_strided_slice %2 {offsets = [3, 0], sizes = [1, 256], strides = [1, 1]} : vector<9x256xf32> to vector<1x256xf32>
    %249 = vector.broadcast %248 : vector<1x256xf32> to vector<16x256xf32>
    %250 = arith.mulf %247, %249 : vector<16x256xf32>
    %251 = vector.extract_strided_slice %2 {offsets = [4, 0], sizes = [1, 256], strides = [1, 1]} : vector<9x256xf32> to vector<1x256xf32>
    %252 = vector.broadcast %251 : vector<1x256xf32> to vector<16x256xf32>
    %253 = arith.mulf %232, %252 : vector<16x256xf32>
    %c255_i32 = arith.constant 255 : i32
    %254 = tpu.dynamic_rotate %232 by %c255_i32 dim 1 : vector<16x256xf32>, i32 -> vector<16x256xf32>
    %255 = vector.extract_strided_slice %2 {offsets = [5, 0], sizes = [1, 256], strides = [1, 1]} : vector<9x256xf32> to vector<1x256xf32>
    %256 = vector.broadcast %255 : vector<1x256xf32> to vector<16x256xf32>
    %257 = arith.mulf %254, %256 : vector<16x256xf32>
    %c243_i32 = arith.constant 243 : i32
    %258 = tpu.dynamic_rotate %232 by %c243_i32 dim 1 : vector<16x256xf32>, i32 -> vector<16x256xf32>
    %259 = vector.extract_strided_slice %2 {offsets = [6, 0], sizes = [1, 256], strides = [1, 1]} : vector<9x256xf32> to vector<1x256xf32>
    %260 = vector.broadcast %259 : vector<1x256xf32> to vector<16x256xf32>
    %261 = arith.mulf %258, %260 : vector<16x256xf32>
    %c242_i32 = arith.constant 242 : i32
    %262 = tpu.dynamic_rotate %232 by %c242_i32 dim 1 : vector<16x256xf32>, i32 -> vector<16x256xf32>
    %263 = vector.extract_strided_slice %2 {offsets = [7, 0], sizes = [1, 256], strides = [1, 1]} : vector<9x256xf32> to vector<1x256xf32>
    %264 = vector.broadcast %263 : vector<1x256xf32> to vector<16x256xf32>
    %265 = arith.mulf %262, %264 : vector<16x256xf32>
    %c241_i32 = arith.constant 241 : i32
    %266 = tpu.dynamic_rotate %232 by %c241_i32 dim 1 : vector<16x256xf32>, i32 -> vector<16x256xf32>
    %267 = vector.extract_strided_slice %2 {offsets = [8, 0], sizes = [1, 256], strides = [1, 1]} : vector<9x256xf32> to vector<1x256xf32>
    %268 = vector.broadcast %267 : vector<1x256xf32> to vector<16x256xf32>
    %269 = arith.mulf %266, %268 : vector<16x256xf32>
    %270 = vector.extract_strided_slice %238 {offsets = [0, 0], sizes = [8, 256], strides = [1, 1]} : vector<16x256xf32> to vector<8x256xf32>
    %271 = vector.extract_strided_slice %242 {offsets = [0, 0], sizes = [8, 256], strides = [1, 1]} : vector<16x256xf32> to vector<8x256xf32>
    %272 = vector.extract_strided_slice %246 {offsets = [0, 0], sizes = [8, 256], strides = [1, 1]} : vector<16x256xf32> to vector<8x256xf32>
    %273 = vector.extract_strided_slice %250 {offsets = [0, 0], sizes = [8, 256], strides = [1, 1]} : vector<16x256xf32> to vector<8x256xf32>
    %274 = vector.extract_strided_slice %253 {offsets = [0, 0], sizes = [8, 256], strides = [1, 1]} : vector<16x256xf32> to vector<8x256xf32>
    %275 = vector.extract_strided_slice %257 {offsets = [0, 0], sizes = [8, 256], strides = [1, 1]} : vector<16x256xf32> to vector<8x256xf32>
    %276 = vector.extract_strided_slice %261 {offsets = [0, 0], sizes = [8, 256], strides = [1, 1]} : vector<16x256xf32> to vector<8x256xf32>
    %277 = vector.extract_strided_slice %265 {offsets = [0, 0], sizes = [8, 256], strides = [1, 1]} : vector<16x256xf32> to vector<8x256xf32>
    %278 = vector.extract_strided_slice %269 {offsets = [0, 0], sizes = [8, 256], strides = [1, 1]} : vector<16x256xf32> to vector<8x256xf32>
    %279 = tpu.concatenate %270, %271, %272, %273, %274, %275, %276, %277, %278 in 0 : vector<8x256xf32>, vector<8x256xf32>, vector<8x256xf32>, vector<8x256xf32>, vector<8x256xf32>, vector<8x256xf32>, vector<8x256xf32>, vector<8x256xf32>, vector<8x256xf32> -> vector<72x256xf32>
    %cst_38 = arith.constant dense<0.000000e+00> : vector<8x256xf32>
    %280 = tpu.matmul %233, %279, %cst_38 {dimension_numbers = #tpu.dot_dimension_numbers<[1], [0], [0], [1], [0, 0, 1, 1], [], []>} : vector<8x72xf32>, vector<72x256xf32>, vector<8x256xf32> -> vector<8x256xf32>
    %281 = vector.broadcast %234 : vector<8x1xf32> to vector<8x256xf32>
    %282 = arith.addf %280, %281 : vector<8x256xf32>
    %cst_39 = arith.constant 0.000000e+00 : f32
    %283 = vector.broadcast %cst_39 : f32 to vector<8x256xf32>
    %284 = arith.maximumf %282, %283 : vector<8x256xf32>
    %285 = vector.extract_strided_slice %238 {offsets = [8, 0], sizes = [8, 256], strides = [1, 1]} : vector<16x256xf32> to vector<8x256xf32>
    %286 = vector.extract_strided_slice %242 {offsets = [8, 0], sizes = [8, 256], strides = [1, 1]} : vector<16x256xf32> to vector<8x256xf32>
    %287 = vector.extract_strided_slice %246 {offsets = [8, 0], sizes = [8, 256], strides = [1, 1]} : vector<16x256xf32> to vector<8x256xf32>
    %288 = vector.extract_strided_slice %250 {offsets = [8, 0], sizes = [8, 256], strides = [1, 1]} : vector<16x256xf32> to vector<8x256xf32>
    %289 = vector.extract_strided_slice %253 {offsets = [8, 0], sizes = [8, 256], strides = [1, 1]} : vector<16x256xf32> to vector<8x256xf32>
    %290 = vector.extract_strided_slice %257 {offsets = [8, 0], sizes = [8, 256], strides = [1, 1]} : vector<16x256xf32> to vector<8x256xf32>
    %291 = vector.extract_strided_slice %261 {offsets = [8, 0], sizes = [8, 256], strides = [1, 1]} : vector<16x256xf32> to vector<8x256xf32>
    %292 = vector.extract_strided_slice %265 {offsets = [8, 0], sizes = [8, 256], strides = [1, 1]} : vector<16x256xf32> to vector<8x256xf32>
    %293 = vector.extract_strided_slice %269 {offsets = [8, 0], sizes = [8, 256], strides = [1, 1]} : vector<16x256xf32> to vector<8x256xf32>
    %294 = tpu.concatenate %285, %286, %287, %288, %289, %290, %291, %292, %293 in 0 : vector<8x256xf32>, vector<8x256xf32>, vector<8x256xf32>, vector<8x256xf32>, vector<8x256xf32>, vector<8x256xf32>, vector<8x256xf32>, vector<8x256xf32>, vector<8x256xf32> -> vector<72x256xf32>
    %cst_40 = arith.constant dense<0.000000e+00> : vector<8x256xf32>
    %295 = tpu.matmul %233, %294, %cst_40 {dimension_numbers = #tpu.dot_dimension_numbers<[1], [0], [0], [1], [0, 0, 1, 1], [], []>} : vector<8x72xf32>, vector<72x256xf32>, vector<8x256xf32> -> vector<8x256xf32>
    %296 = vector.broadcast %234 : vector<8x1xf32> to vector<8x256xf32>
    %297 = arith.addf %295, %296 : vector<8x256xf32>
    %cst_41 = arith.constant 0.000000e+00 : f32
    %298 = vector.broadcast %cst_41 : f32 to vector<8x256xf32>
    %299 = arith.maximumf %297, %298 : vector<8x256xf32>
    %300 = tpu.concatenate %284, %299 in 0 : vector<8x256xf32>, vector<8x256xf32> -> vector<16x256xf32>
    %c0_42 = arith.constant 0 : index
    %c0_43 = arith.constant 0 : index
    %301 = vector.load %arg8[%c0_42, %c0_43] : memref<8x72xf32, #tpu.memory_space<vmem>>, vector<8x72xf32>
    %c0_44 = arith.constant 0 : index
    %c0_45 = arith.constant 0 : index
    %302 = vector.load %arg9[%c0_44, %c0_45] : memref<8x1xf32, #tpu.memory_space<vmem>>, vector<8x1xf32>
    %c15_i32_46 = arith.constant 15 : i32
    %303 = tpu.dynamic_rotate %300 by %c15_i32_46 dim 1 : vector<16x256xf32>, i32 -> vector<16x256xf32>
    %304 = vector.extract_strided_slice %2 {offsets = [0, 0], sizes = [1, 256], strides = [1, 1]} : vector<9x256xf32> to vector<1x256xf32>
    %305 = vector.broadcast %304 : vector<1x256xf32> to vector<16x256xf32>
    %306 = arith.mulf %303, %305 : vector<16x256xf32>
    %c14_i32_47 = arith.constant 14 : i32
    %307 = tpu.dynamic_rotate %300 by %c14_i32_47 dim 1 : vector<16x256xf32>, i32 -> vector<16x256xf32>
    %308 = vector.extract_strided_slice %2 {offsets = [1, 0], sizes = [1, 256], strides = [1, 1]} : vector<9x256xf32> to vector<1x256xf32>
    %309 = vector.broadcast %308 : vector<1x256xf32> to vector<16x256xf32>
    %310 = arith.mulf %307, %309 : vector<16x256xf32>
    %c13_i32_48 = arith.constant 13 : i32
    %311 = tpu.dynamic_rotate %300 by %c13_i32_48 dim 1 : vector<16x256xf32>, i32 -> vector<16x256xf32>
    %312 = vector.extract_strided_slice %2 {offsets = [2, 0], sizes = [1, 256], strides = [1, 1]} : vector<9x256xf32> to vector<1x256xf32>
    %313 = vector.broadcast %312 : vector<1x256xf32> to vector<16x256xf32>
    %314 = arith.mulf %311, %313 : vector<16x256xf32>
    %c1_i32_49 = arith.constant 1 : i32
    %315 = tpu.dynamic_rotate %300 by %c1_i32_49 dim 1 : vector<16x256xf32>, i32 -> vector<16x256xf32>
    %316 = vector.extract_strided_slice %2 {offsets = [3, 0], sizes = [1, 256], strides = [1, 1]} : vector<9x256xf32> to vector<1x256xf32>
    %317 = vector.broadcast %316 : vector<1x256xf32> to vector<16x256xf32>
    %318 = arith.mulf %315, %317 : vector<16x256xf32>
    %319 = vector.extract_strided_slice %2 {offsets = [4, 0], sizes = [1, 256], strides = [1, 1]} : vector<9x256xf32> to vector<1x256xf32>
    %320 = vector.broadcast %319 : vector<1x256xf32> to vector<16x256xf32>
    %321 = arith.mulf %300, %320 : vector<16x256xf32>
    %c255_i32_50 = arith.constant 255 : i32
    %322 = tpu.dynamic_rotate %300 by %c255_i32_50 dim 1 : vector<16x256xf32>, i32 -> vector<16x256xf32>
    %323 = vector.extract_strided_slice %2 {offsets = [5, 0], sizes = [1, 256], strides = [1, 1]} : vector<9x256xf32> to vector<1x256xf32>
    %324 = vector.broadcast %323 : vector<1x256xf32> to vector<16x256xf32>
    %325 = arith.mulf %322, %324 : vector<16x256xf32>
    %c243_i32_51 = arith.constant 243 : i32
    %326 = tpu.dynamic_rotate %300 by %c243_i32_51 dim 1 : vector<16x256xf32>, i32 -> vector<16x256xf32>
    %327 = vector.extract_strided_slice %2 {offsets = [6, 0], sizes = [1, 256], strides = [1, 1]} : vector<9x256xf32> to vector<1x256xf32>
    %328 = vector.broadcast %327 : vector<1x256xf32> to vector<16x256xf32>
    %329 = arith.mulf %326, %328 : vector<16x256xf32>
    %c242_i32_52 = arith.constant 242 : i32
    %330 = tpu.dynamic_rotate %300 by %c242_i32_52 dim 1 : vector<16x256xf32>, i32 -> vector<16x256xf32>
    %331 = vector.extract_strided_slice %2 {offsets = [7, 0], sizes = [1, 256], strides = [1, 1]} : vector<9x256xf32> to vector<1x256xf32>
    %332 = vector.broadcast %331 : vector<1x256xf32> to vector<16x256xf32>
    %333 = arith.mulf %330, %332 : vector<16x256xf32>
    %c241_i32_53 = arith.constant 241 : i32
    %334 = tpu.dynamic_rotate %300 by %c241_i32_53 dim 1 : vector<16x256xf32>, i32 -> vector<16x256xf32>
    %335 = vector.extract_strided_slice %2 {offsets = [8, 0], sizes = [1, 256], strides = [1, 1]} : vector<9x256xf32> to vector<1x256xf32>
    %336 = vector.broadcast %335 : vector<1x256xf32> to vector<16x256xf32>
    %337 = arith.mulf %334, %336 : vector<16x256xf32>
    %338 = vector.extract_strided_slice %306 {offsets = [0, 0], sizes = [8, 256], strides = [1, 1]} : vector<16x256xf32> to vector<8x256xf32>
    %339 = vector.extract_strided_slice %310 {offsets = [0, 0], sizes = [8, 256], strides = [1, 1]} : vector<16x256xf32> to vector<8x256xf32>
    %340 = vector.extract_strided_slice %314 {offsets = [0, 0], sizes = [8, 256], strides = [1, 1]} : vector<16x256xf32> to vector<8x256xf32>
    %341 = vector.extract_strided_slice %318 {offsets = [0, 0], sizes = [8, 256], strides = [1, 1]} : vector<16x256xf32> to vector<8x256xf32>
    %342 = vector.extract_strided_slice %321 {offsets = [0, 0], sizes = [8, 256], strides = [1, 1]} : vector<16x256xf32> to vector<8x256xf32>
    %343 = vector.extract_strided_slice %325 {offsets = [0, 0], sizes = [8, 256], strides = [1, 1]} : vector<16x256xf32> to vector<8x256xf32>
    %344 = vector.extract_strided_slice %329 {offsets = [0, 0], sizes = [8, 256], strides = [1, 1]} : vector<16x256xf32> to vector<8x256xf32>
    %345 = vector.extract_strided_slice %333 {offsets = [0, 0], sizes = [8, 256], strides = [1, 1]} : vector<16x256xf32> to vector<8x256xf32>
    %346 = vector.extract_strided_slice %337 {offsets = [0, 0], sizes = [8, 256], strides = [1, 1]} : vector<16x256xf32> to vector<8x256xf32>
    %347 = tpu.concatenate %338, %339, %340, %341, %342, %343, %344, %345, %346 in 0 : vector<8x256xf32>, vector<8x256xf32>, vector<8x256xf32>, vector<8x256xf32>, vector<8x256xf32>, vector<8x256xf32>, vector<8x256xf32>, vector<8x256xf32>, vector<8x256xf32> -> vector<72x256xf32>
    %cst_54 = arith.constant dense<0.000000e+00> : vector<8x256xf32>
    %348 = tpu.matmul %301, %347, %cst_54 {dimension_numbers = #tpu.dot_dimension_numbers<[1], [0], [0], [1], [0, 0, 1, 1], [], []>} : vector<8x72xf32>, vector<72x256xf32>, vector<8x256xf32> -> vector<8x256xf32>
    %349 = vector.broadcast %302 : vector<8x1xf32> to vector<8x256xf32>
    %350 = arith.addf %348, %349 : vector<8x256xf32>
    %cst_55 = arith.constant 0.000000e+00 : f32
    %351 = vector.broadcast %cst_55 : f32 to vector<8x256xf32>
    %352 = arith.maximumf %350, %351 : vector<8x256xf32>
    %353 = vector.extract_strided_slice %306 {offsets = [8, 0], sizes = [8, 256], strides = [1, 1]} : vector<16x256xf32> to vector<8x256xf32>
    %354 = vector.extract_strided_slice %310 {offsets = [8, 0], sizes = [8, 256], strides = [1, 1]} : vector<16x256xf32> to vector<8x256xf32>
    %355 = vector.extract_strided_slice %314 {offsets = [8, 0], sizes = [8, 256], strides = [1, 1]} : vector<16x256xf32> to vector<8x256xf32>
    %356 = vector.extract_strided_slice %318 {offsets = [8, 0], sizes = [8, 256], strides = [1, 1]} : vector<16x256xf32> to vector<8x256xf32>
    %357 = vector.extract_strided_slice %321 {offsets = [8, 0], sizes = [8, 256], strides = [1, 1]} : vector<16x256xf32> to vector<8x256xf32>
    %358 = vector.extract_strided_slice %325 {offsets = [8, 0], sizes = [8, 256], strides = [1, 1]} : vector<16x256xf32> to vector<8x256xf32>
    %359 = vector.extract_strided_slice %329 {offsets = [8, 0], sizes = [8, 256], strides = [1, 1]} : vector<16x256xf32> to vector<8x256xf32>
    %360 = vector.extract_strided_slice %333 {offsets = [8, 0], sizes = [8, 256], strides = [1, 1]} : vector<16x256xf32> to vector<8x256xf32>
    %361 = vector.extract_strided_slice %337 {offsets = [8, 0], sizes = [8, 256], strides = [1, 1]} : vector<16x256xf32> to vector<8x256xf32>
    %362 = tpu.concatenate %353, %354, %355, %356, %357, %358, %359, %360, %361 in 0 : vector<8x256xf32>, vector<8x256xf32>, vector<8x256xf32>, vector<8x256xf32>, vector<8x256xf32>, vector<8x256xf32>, vector<8x256xf32>, vector<8x256xf32>, vector<8x256xf32> -> vector<72x256xf32>
    %cst_56 = arith.constant dense<0.000000e+00> : vector<8x256xf32>
    %363 = tpu.matmul %301, %362, %cst_56 {dimension_numbers = #tpu.dot_dimension_numbers<[1], [0], [0], [1], [0, 0, 1, 1], [], []>} : vector<8x72xf32>, vector<72x256xf32>, vector<8x256xf32> -> vector<8x256xf32>
    %364 = vector.broadcast %302 : vector<8x1xf32> to vector<8x256xf32>
    %365 = arith.addf %363, %364 : vector<8x256xf32>
    %cst_57 = arith.constant 0.000000e+00 : f32
    %366 = vector.broadcast %cst_57 : f32 to vector<8x256xf32>
    %367 = arith.maximumf %365, %366 : vector<8x256xf32>
    %368 = tpu.concatenate %352, %367 in 0 : vector<8x256xf32>, vector<8x256xf32> -> vector<16x256xf32>
    %c0_58 = arith.constant 0 : index
    %c0_59 = arith.constant 0 : index
    %369 = vector.load %arg15[%c0_58, %c0_59] : memref<256x128xf32, #tpu.memory_space<vmem>>, vector<256x128xf32>
    %c255_i32_60 = arith.constant 255 : i32
    %370 = tpu.dynamic_rotate %368 by %c255_i32_60 dim 1 : vector<16x256xf32>, i32 -> vector<16x256xf32>
    %371 = arith.maximumf %368, %370 : vector<16x256xf32>
    %c242_i32_61 = arith.constant 242 : i32
    %372 = tpu.dynamic_rotate %371 by %c242_i32_61 dim 1 : vector<16x256xf32>, i32 -> vector<16x256xf32>
    %373 = arith.maximumf %371, %372 : vector<16x256xf32>
    %cst_62 = arith.constant dense<0.000000e+00> : vector<16x128xf32>
    %374 = tpu.matmul %373, %369, %cst_62 {dimension_numbers = #tpu.dot_dimension_numbers<[1], [0], [0], [1], [0, 0, 1, 1], [], []>} : vector<16x256xf32>, vector<256x128xf32>, vector<16x128xf32> -> vector<16x128xf32>
    %c0_63 = arith.constant 0 : index
    %c0_64 = arith.constant 0 : index
    %375 = vector.load %arg10[%c0_63, %c0_64] : memref<1024x10xf32, #tpu.memory_space<vmem>>, vector<1024x10xf32>
    %c0_65 = arith.constant 0 : index
    %c0_66 = arith.constant 0 : index
    %376 = vector.load %arg11[%c0_65, %c0_66] : memref<1x10xf32, #tpu.memory_space<vmem>>, vector<1x10xf32>
    %377 = vector.extract_strided_slice %374 {offsets = [0, 0], sizes = [1, 128], strides = [1, 1]} : vector<16x128xf32> to vector<1x128xf32>
    %378 = vector.extract_strided_slice %374 {offsets = [1, 0], sizes = [1, 128], strides = [1, 1]} : vector<16x128xf32> to vector<1x128xf32>
    %379 = vector.extract_strided_slice %374 {offsets = [2, 0], sizes = [1, 128], strides = [1, 1]} : vector<16x128xf32> to vector<1x128xf32>
    %380 = vector.extract_strided_slice %374 {offsets = [3, 0], sizes = [1, 128], strides = [1, 1]} : vector<16x128xf32> to vector<1x128xf32>
    %381 = vector.extract_strided_slice %374 {offsets = [4, 0], sizes = [1, 128], strides = [1, 1]} : vector<16x128xf32> to vector<1x128xf32>
    %382 = vector.extract_strided_slice %374 {offsets = [5, 0], sizes = [1, 128], strides = [1, 1]} : vector<16x128xf32> to vector<1x128xf32>
    %383 = vector.extract_strided_slice %374 {offsets = [6, 0], sizes = [1, 128], strides = [1, 1]} : vector<16x128xf32> to vector<1x128xf32>
    %384 = vector.extract_strided_slice %374 {offsets = [7, 0], sizes = [1, 128], strides = [1, 1]} : vector<16x128xf32> to vector<1x128xf32>
    %385 = tpu.concatenate %377, %378, %379, %380, %381, %382, %383, %384 in 1 : vector<1x128xf32>, vector<1x128xf32>, vector<1x128xf32>, vector<1x128xf32>, vector<1x128xf32>, vector<1x128xf32>, vector<1x128xf32>, vector<1x128xf32> -> vector<1x1024xf32>
    %cst_67 = arith.constant dense<0.000000e+00> : vector<1x10xf32>
    %386 = tpu.matmul %385, %375, %cst_67 {dimension_numbers = #tpu.dot_dimension_numbers<[1], [0], [0], [1], [0, 0, 1, 1], [], []>} : vector<1x1024xf32>, vector<1024x10xf32>, vector<1x10xf32> -> vector<1x10xf32>
    %387 = arith.addf %386, %376 : vector<1x10xf32>
    %c0_68 = arith.constant 0 : index
    %c0_69 = arith.constant 0 : index
    %388 = vector.load %arg16[%c0_68, %c0_69] : memref<2x10xf32, #tpu.memory_space<vmem>>, vector<1x10xf32>
    tpu.vector_store %arg16[%c0_68, %c0_69], %387 {strides = array<i32>} : memref<2x10xf32, #tpu.memory_space<vmem>>, vector<1x10xf32>,
    %389 = vector.extract_strided_slice %374 {offsets = [8, 0], sizes = [1, 128], strides = [1, 1]} : vector<16x128xf32> to vector<1x128xf32>
    %390 = vector.extract_strided_slice %374 {offsets = [9, 0], sizes = [1, 128], strides = [1, 1]} : vector<16x128xf32> to vector<1x128xf32>
    %391 = vector.extract_strided_slice %374 {offsets = [10, 0], sizes = [1, 128], strides = [1, 1]} : vector<16x128xf32> to vector<1x128xf32>
    %392 = vector.extract_strided_slice %374 {offsets = [11, 0], sizes = [1, 128], strides = [1, 1]} : vector<16x128xf32> to vector<1x128xf32>
    %393 = vector.extract_strided_slice %374 {offsets = [12, 0], sizes = [1, 128], strides = [1, 1]} : vector<16x128xf32> to vector<1x128xf32>
    %394 = vector.extract_strided_slice %374 {offsets = [13, 0], sizes = [1, 128], strides = [1, 1]} : vector<16x128xf32> to vector<1x128xf32>
    %395 = vector.extract_strided_slice %374 {offsets = [14, 0], sizes = [1, 128], strides = [1, 1]} : vector<16x128xf32> to vector<1x128xf32>
    %396 = vector.extract_strided_slice %374 {offsets = [15, 0], sizes = [1, 128], strides = [1, 1]} : vector<16x128xf32> to vector<1x128xf32>
    %397 = tpu.concatenate %389, %390, %391, %392, %393, %394, %395, %396 in 1 : vector<1x128xf32>, vector<1x128xf32>, vector<1x128xf32>, vector<1x128xf32>, vector<1x128xf32>, vector<1x128xf32>, vector<1x128xf32>, vector<1x128xf32> -> vector<1x1024xf32>
    %cst_70 = arith.constant dense<0.000000e+00> : vector<1x10xf32>
    %398 = tpu.matmul %397, %375, %cst_70 {dimension_numbers = #tpu.dot_dimension_numbers<[1], [0], [0], [1], [0, 0, 1, 1], [], []>} : vector<1x1024xf32>, vector<1024x10xf32>, vector<1x10xf32> -> vector<1x10xf32>
    %399 = arith.addf %398, %376 : vector<1x10xf32>
    %c1 = arith.constant 1 : index
    %c0_71 = arith.constant 0 : index
    %400 = vector.load %arg16[%c1, %c0_71] : memref<2x10xf32, #tpu.memory_space<vmem>>, vector<1x10xf32>
    tpu.vector_store %arg16[%c1, %c0_71], %399 {strides = array<i32>} : memref<2x10xf32, #tpu.memory_space<vmem>>, vector<1x10xf32>,
    return
  }
  func.func @transform_0(%arg0: i32) -> (i32, i32) {
    %c0_i32 = arith.constant 0 : i32
    %c0_i32_0 = arith.constant 0 : i32
    %c0_i32_1 = arith.constant 0 : i32
    return %c0_i32, %c0_i32_0 : i32, i32
  }
  func.func @transform_1(%arg0: i32) -> (i32, i32) {
    %c0_i32 = arith.constant 0 : i32
    %c0_i32_0 = arith.constant 0 : i32
    %c0_i32_1 = arith.constant 0 : i32
    return %c0_i32, %c0_i32_0 : i32, i32
  }
  func.func @transform_2(%arg0: i32) -> (i32, i32) {
    %c0_i32 = arith.constant 0 : i32
    %c0_i32_0 = arith.constant 0 : i32
    %c0_i32_1 = arith.constant 0 : i32
    return %c0_i32, %c0_i32_0 : i32, i32
  }
  func.func @transform_3(%arg0: i32) -> (i32, i32) {
    %c0_i32 = arith.constant 0 : i32
    %c0_i32_0 = arith.constant 0 : i32
    %c0_i32_1 = arith.constant 0 : i32
    return %c0_i32, %c0_i32_0 : i32, i32
  }
  func.func @transform_4(%arg0: i32) -> (i32, i32) {
    %c0_i32 = arith.constant 0 : i32
    %c0_i32_0 = arith.constant 0 : i32
    %c0_i32_1 = arith.constant 0 : i32
    return %c0_i32, %c0_i32_0 : i32, i32
  }
  func.func @transform_5(%arg0: i32) -> (i32, i32) {
    %c0_i32 = arith.constant 0 : i32
    %c0_i32_0 = arith.constant 0 : i32
    %c0_i32_1 = arith.constant 0 : i32
    return %c0_i32, %c0_i32_0 : i32, i32
  }
  func.func @transform_6(%arg0: i32) -> (i32, i32) {
    %c0_i32 = arith.constant 0 : i32
    %c0_i32_0 = arith.constant 0 : i32
    %c0_i32_1 = arith.constant 0 : i32
    return %c0_i32, %c0_i32_0 : i32, i32
  }
  func.func @transform_7(%arg0: i32) -> (i32, i32) {
    %c0_i32 = arith.constant 0 : i32
    %c0_i32_0 = arith.constant 0 : i32
    %c0_i32_1 = arith.constant 0 : i32
    return %c0_i32, %c0_i32_0 : i32, i32
  }
  func.func @transform_8(%arg0: i32) -> (i32, i32) {
    %c0_i32 = arith.constant 0 : i32
    %c0_i32_0 = arith.constant 0 : i32
    %c0_i32_1 = arith.constant 0 : i32
    return %c0_i32, %c0_i32_0 : i32, i32
  }
  func.func @transform_9(%arg0: i32) -> (i32, i32) {
    %c0_i32 = arith.constant 0 : i32
    %c0_i32_0 = arith.constant 0 : i32
    %c0_i32_1 = arith.constant 0 : i32
    return %c0_i32, %c0_i32_0 : i32, i32
  }
  func.func @transform_10(%arg0: i32) -> (i32, i32) {
    %c0_i32 = arith.constant 0 : i32
    %c0_i32_0 = arith.constant 0 : i32
    %c0_i32_1 = arith.constant 0 : i32
    return %c0_i32, %c0_i32_0 : i32, i32
  }
  func.func @transform_11(%arg0: i32) -> (i32, i32) {
    %c0_i32 = arith.constant 0 : i32
    %c0_i32_0 = arith.constant 0 : i32
    %c0_i32_1 = arith.constant 0 : i32
    return %c0_i32, %c0_i32_0 : i32, i32
  }
  func.func @transform_12(%arg0: i32) -> (i32, i32) {
    %c0_i32 = arith.constant 0 : i32
    %c0_i32_0 = arith.constant 0 : i32
    %c0_i32_1 = arith.constant 0 : i32
    return %c0_i32, %c0_i32_0 : i32, i32
  }
  func.func @transform_13(%arg0: i32) -> (i32, i32) {
    %c0_i32 = arith.constant 0 : i32
    %c0_i32_0 = arith.constant 0 : i32
    %c0_i32_1 = arith.constant 0 : i32
    return %c0_i32, %c0_i32_0 : i32, i32
  }
  func.func @transform_14(%arg0: i32) -> (i32, i32) {
    %c0_i32 = arith.constant 0 : i32
    %c0_i32_0 = arith.constant 0 : i32
    %c0_i32_1 = arith.constant 0 : i32
    return %c0_i32, %c0_i32_0 : i32, i32
  }
  func.func @transform_15(%arg0: i32) -> (i32, i32) {
    %c0_i32 = arith.constant 0 : i32
    %c0_i32_0 = arith.constant 0 : i32
    %c0_i32_1 = arith.constant 0 : i32
    return %c0_i32, %c0_i32_0 : i32, i32
  }
}

</mosaic_0001>

<llo_original>
// kernel: mnist_model_v1_forward.1
$region0: #{mnist_model_v1_forward.1}
  #allocation0 [shape = 'u32[]', space=smem, size = 0x4, offset = 0x4, fixed_abs, tag = 'smem constant byte address 0x4 - core index']
  #allocation1 [shape = 'u32[72,128]{1,0:T(1,128)}', space=vmem, size = 0x9000, scoped, tag = 'internal scratch']
  %s0 = inlined_call_operand.vmem [shape: f32[2,896], index: 0, kind: input, shape index: {}]
  %s1 = inlined_call_operand.vmem [shape: f32[8,9], index: 1, kind: input, shape index: {}]
  %s2 = inlined_call_operand.vmem [shape: f32[8,1], index: 2, kind: input, shape index: {}]
  %s3 = inlined_call_operand.vmem [shape: f32[8,72], index: 3, kind: input, shape index: {}]
  %s4 = inlined_call_operand.vmem [shape: f32[8,1], index: 4, kind: input, shape index: {}]
  %s5 = inlined_call_operand.vmem [shape: f32[8,72], index: 5, kind: input, shape index: {}]
  %s6 = inlined_call_operand.vmem [shape: f32[8,1], index: 6, kind: input, shape index: {}]
  %s7 = inlined_call_operand.vmem [shape: f32[8,72], index: 7, kind: input, shape index: {}]
  %s8 = inlined_call_operand.vmem [shape: f32[8,1], index: 8, kind: input, shape index: {}]
  %s9 = inlined_call_operand.vmem [shape: f32[1024,10], index: 9, kind: input, shape index: {}]
  %s10 = inlined_call_operand.vmem [shape: f32[1,10], index: 10, kind: input, shape index: {}]
  %s11 = inlined_call_operand.vmem [shape: f32[9,896], index: 11, kind: input, shape index: {}]
  %s12 = inlined_call_operand.vmem [shape: f32[9,256], index: 12, kind: input, shape index: {}]
  %s13 = inlined_call_operand.hbm [shape: f32[896,256], index: 13, kind: input, shape index: {}]
  %s14 = inlined_call_operand.vmem [shape: f32[256,128], index: 14, kind: input, shape index: {}]
  %s15 = inlined_call_operand.hbm [shape: f32[2,10], index: 15, kind: output, shape index: {}]
  %s16 = sld [smem:[#allocation0]]
  $region74: #{mnist_model_v1_forward.1} parent=0
    _
  %s18 = ssub.s32 1, %s16
  %s19 = scalar_select 0, %s18, %s16
  $region1: #{mnist_model_v1_forward.1} parent=0
    #allocation2 [shape = 'u8[917504]{0}', space=vmem, size = 0xe0000, scoped, tag = 'input window, operand 13, single buffered']
    #allocation3 [shape = 's32[1]{0}', space=sflag, size = 0x4, scoped, tag = 'scoped memory for mnist_model_v1_forward.1']
    #allocation4 [shape = 's32[1]{0}', space=sflag, size = 0x4, scoped, tag = 'scoped memory for mnist_model_v1_forward.1']
    #allocation5 [shape = 'u8[1024]{0}', space=vmem, size = 0x400, scoped, tag = 'output window, operand 0, single buffered']
    %20 = vsyncpa [#allocation3], 0
    %21 = vsyncpa [#allocation4], 0
    // Predicated region
    $region2: #{mnist_model_v1_forward.1} parent=1 // pred_check
      _
    $region3: #{mnist_model_v1_forward.1} parent=1 // pred_check_branch
      %23 = sbr.rel (0) target = $region5
    $region4: #{mnist_model_v1_forward.1} parent=1 // pred_region
      _
    $region5: #{mnist_model_v1_forward.1} parent=1 // pred_fallthru
      _
    // Predicated region
    $region6: #{mnist_model_v1_forward.1} parent=1 // pred_check
      _
    $region7: #{mnist_model_v1_forward.1} parent=1 // pred_check_branch
      %25 = sbr.rel (0) target = $region9
    $region8: #{mnist_model_v1_forward.1} parent=1 // pred_region
      _
    $region9: #{mnist_model_v1_forward.1} parent=1 // pred_fallthru
      _
    // Predicated region
    $region10: #{mnist_model_v1_forward.1} parent=1 // pred_check
      _
    $region11: #{mnist_model_v1_forward.1} parent=1 // pred_check_branch
      %27 = sbr.rel (0) target = $region13
    $region12: #{mnist_model_v1_forward.1} parent=1 // pred_region
      _
    $region13: #{mnist_model_v1_forward.1} parent=1 // pred_fallthru
      _
    // Predicated region
    $region14: #{mnist_model_v1_forward.1} parent=1 // pred_check
      _
    $region15: #{mnist_model_v1_forward.1} parent=1 // pred_check_branch
      %29 = sbr.rel (0) target = $region17
    $region16: #{mnist_model_v1_forward.1} parent=1 // pred_region
      _
    $region17: #{mnist_model_v1_forward.1} parent=1 // pred_fallthru
      _
    // Predicated region
    $region18: #{mnist_model_v1_forward.1} parent=1 // pred_check
      _
    $region19: #{mnist_model_v1_forward.1} parent=1 // pred_check_branch
      %31 = sbr.rel (0) target = $region21
    $region20: #{mnist_model_v1_forward.1} parent=1 // pred_region
      _
    $region21: #{mnist_model_v1_forward.1} parent=1 // pred_fallthru
      _
    // Predicated region
    $region22: #{mnist_model_v1_forward.1} parent=1 // pred_check
      _
    $region23: #{mnist_model_v1_forward.1} parent=1 // pred_check_branch
      %33 = sbr.rel (0) target = $region25
    $region24: #{mnist_model_v1_forward.1} parent=1 // pred_region
      _
    $region25: #{mnist_model_v1_forward.1} parent=1 // pred_fallthru
      _
    // Predicated region
    $region26: #{mnist_model_v1_forward.1} parent=1 // pred_check
      _
    $region27: #{mnist_model_v1_forward.1} parent=1 // pred_check_branch
      %35 = sbr.rel (0) target = $region29
    $region28: #{mnist_model_v1_forward.1} parent=1 // pred_region
      _
    $region29: #{mnist_model_v1_forward.1} parent=1 // pred_fallthru
      _
    // Predicated region
    $region30: #{mnist_model_v1_forward.1} parent=1 // pred_check
      _
    $region31: #{mnist_model_v1_forward.1} parent=1 // pred_check_branch
      %37 = sbr.rel (0) target = $region33
    $region32: #{mnist_model_v1_forward.1} parent=1 // pred_region
      _
    $region33: #{mnist_model_v1_forward.1} parent=1 // pred_fallthru
      _
    // Predicated region
    $region34: #{mnist_model_v1_forward.1} parent=1 // pred_check
      _
    $region35: #{mnist_model_v1_forward.1} parent=1 // pred_check_branch
      %39 = sbr.rel (0) target = $region37
    $region36: #{mnist_model_v1_forward.1} parent=1 // pred_region
      _
    $region37: #{mnist_model_v1_forward.1} parent=1 // pred_fallthru
      _
    // Predicated region
    $region38: #{mnist_model_v1_forward.1} parent=1 // pred_check
      _
    $region39: #{mnist_model_v1_forward.1} parent=1 // pred_check_branch
      %41 = sbr.rel (0) target = $region41
    $region40: #{mnist_model_v1_forward.1} parent=1 // pred_region
      _
    $region41: #{mnist_model_v1_forward.1} parent=1 // pred_fallthru
      _
    // Predicated region
    $region42: #{mnist_model_v1_forward.1} parent=1 // pred_check
      _
    $region43: #{mnist_model_v1_forward.1} parent=1 // pred_check_branch
      %43 = sbr.rel (0) target = $region45
    $region44: #{mnist_model_v1_forward.1} parent=1 // pred_region
      _
    $region45: #{mnist_model_v1_forward.1} parent=1 // pred_fallthru
      _
    // Predicated region
    $region46: #{mnist_model_v1_forward.1} parent=1 // pred_check
      _
    $region47: #{mnist_model_v1_forward.1} parent=1 // pred_check_branch
      %45 = sbr.rel (0) target = $region49
    $region48: #{mnist_model_v1_forward.1} parent=1 // pred_region
      _
    $region49: #{mnist_model_v1_forward.1} parent=1 // pred_fallthru
      _
    // Predicated region
    $region50: #{mnist_model_v1_forward.1} parent=1 // pred_check
      _
    $region51: #{mnist_model_v1_forward.1} parent=1 // pred_check_branch
      %47 = sbr.rel (0) target = $region53
    $region52: #{mnist_model_v1_forward.1} parent=1 // pred_region
      _
    $region53: #{mnist_model_v1_forward.1} parent=1 // pred_fallthru
      _
    // Predicated region
    $region54: #{mnist_model_v1_forward.1} parent=1 // pred_check
      _
    $region55: #{mnist_model_v1_forward.1} parent=1 // pred_check_branch
      %49 = sbr.rel (0) target = $region57
    $region56: #{mnist_model_v1_forward.1} parent=1 // pred_region
      %51 = vsyncadd [#allocation3], 0
      %s52 = sshll.u32 %s13, 4
      %s53 = int_to_ptr.hbm [resolvable:$true] %s52
      %s54 = sshll.u32 [#allocation2], 4
      %s55 = int_to_ptr.vmem [resolvable:$true] %s54
      %60 = dma.hbm_to_vmem [thread:$0]  %s53, 28672, %s55, [#allocation3], 256, 256, 16
    $region57: #{mnist_model_v1_forward.1} parent=1 // pred_fallthru
      _
    // Predicated region
    $region58: #{mnist_model_v1_forward.1} parent=1 // pred_check
      _
    $region59: #{mnist_model_v1_forward.1} parent=1 // pred_check_branch
      %62 = sbr.rel (0) target = $region61
    $region60: #{mnist_model_v1_forward.1} parent=1 // pred_region
      _
    $region61: #{mnist_model_v1_forward.1} parent=1 // pred_fallthru
      _
    // Predicated region
    $region62: #{mnist_model_v1_forward.1} parent=1 // pred_check
      _
    $region63: #{mnist_model_v1_forward.1} parent=1 // pred_check_branch
      %64 = sbr.rel (0) target = $region65
    $region64: #{mnist_model_v1_forward.1} parent=1 // pred_region
      %66 = dma.done [#allocation3], 28672
    $region65: #{mnist_model_v1_forward.1} parent=1 // pred_fallthru
      _
    %v67 = vld [vmem:[%s0] sm:$0xff]
    %v68 = vld [vmem:[%s0 + $0x8] sm:$0x3f]
    %v69 = vld [vmem:[%s11] sm:$0xff]
    %v70 = vld [vmem:[%s11 + $0x8] sm:$0xff]
    %v71 = vld [vmem:[%s11 + $0x10] sm:$0xff]
    %v72 = vld [vmem:[%s11 + $0x18] sm:$0xff]
    %v73 = vld [vmem:[%s11 + $0x20] sm:$0xff]
    %v74 = vld [vmem:[%s11 + $0x28] sm:$0xff]
    %v75 = vld [vmem:[%s11 + $0x30] sm:$0xff]
    %v76 = vld [vmem:[%s11 + $0x38] sm:$0x1]
    %v77 = vld [vmem:[%s11 + $0x40] sm:$0x1]
    %v78 = vld [vmem:[%s11 + $0x48] sm:$0x1]
    %v79 = vld [vmem:[%s11 + $0x50] sm:$0x1]
    %v80 = vld [vmem:[%s11 + $0x58] sm:$0x1]
    %v81 = vld [vmem:[%s11 + $0x60] sm:$0x1]
    %v82 = vld [vmem:[%s11 + $0x68] sm:$0x1]
    %v83 = vld [vmem:[%s12] sm:$0xff]
    %v84 = vld [vmem:[%s12 + $0x8] sm:$0xff]
    %v85 = vld [vmem:[%s12 + $0x10] sm:$0x1]
    %v86 = vld [vmem:[%s12 + $0x18] sm:$0x1]
    %v87 = vld [vmem:[%s1] sm:$0xff]
    %v88 = vld [vmem:[%s2] sm:$0xff]
    %91 = vst [vmem:[#allocation1] ss:$4 sm:$0xff] %v67
    %s92 = scalar_lea.vmem [#allocation1], 32
    %93 = vst [vmem:[%s92] ss:$4 sm:$0xff] %v68
    %v94 = vld.sshfl [vmem:[#allocation1] sm:$0xff pattern:$0x73625140]
    %v95 = vld.sshfl [vmem:[#allocation1 + $0x8] sm:$0xff pattern:$0x73625140]
    %v96 = vld.sshfl [vmem:[#allocation1 + $0x10] sm:$0xff pattern:$0x73625140]
    %v97 = vld.sshfl [vmem:[#allocation1 + $0x18] sm:$0xff pattern:$0x73625140]
    %v98 = vld.sshfl [vmem:[#allocation1 + $0x20] sm:$0xff pattern:$0x73625140]
    %v99 = vld.sshfl [vmem:[#allocation1 + $0x28] sm:$0xff pattern:$0x73625140]
    %v100 = vld.sshfl [vmem:[#allocation1 + $0x30] sm:$0xff pattern:$0x73625140]
    %108 = vrot.lane.b32.xlu0 %v94, 29
    %v109 = vpop.permute.xlu0 %108
    %110 = vrot.lane.b32.xlu0 %v95, 29
    %v111 = vpop.permute.xlu0 %110
    %112 = vrot.lane.b32.xlu0 %v96, 29
    %v113 = vpop.permute.xlu0 %112
    %114 = vrot.lane.b32.xlu0 %v97, 29
    %v115 = vpop.permute.xlu0 %114
    %116 = vrot.lane.b32.xlu0 %v98, 29
    %v117 = vpop.permute.xlu0 %116
    %118 = vrot.lane.b32.xlu0 %v99, 29
    %v119 = vpop.permute.xlu0 %118
    %120 = vrot.lane.b32.xlu0 %v100, 29
    %v121 = vpop.permute.xlu0 %120
    %v122 = vlaneseq
    %v123 = vand.u32 %v122, 127
    %vm124 = vcmp.lt.s32.totalorder %v123, 29
    %v125 = vsel %vm124, %v119, %v121
    %v126 = vsel %vm124, %v117, %v119
    %v127 = vsel %vm124, %v115, %v117
    %v128 = vsel %vm124, %v113, %v115
    %v129 = vsel %vm124, %v111, %v113
    %v130 = vsel %vm124, %v109, %v111
    %v131 = vsel %vm124, %v121, %v109
    %v132 = vperm.slane %v69, 0
    %v133 = vperm.slane %v70, 0
    %v134 = vperm.slane %v71, 0
    %v135 = vperm.slane %v72, 0
    %v136 = vperm.slane %v73, 0
    %v137 = vperm.slane %v74, 0
    %v138 = vperm.slane %v75, 0
    %v139 = vmul.f32 %v131, %v132
    %v140 = vmul.f32 %v130, %v133
    %v141 = vmul.f32 %v129, %v134
    %v142 = vmul.f32 %v128, %v135
    %v143 = vmul.f32 %v127, %v136
    %v144 = vmul.f32 %v126, %v137
    %v145 = vmul.f32 %v125, %v138
    %146 = vst [vmem:[#allocation1] ss:$4 sm:$0xff] %v67
    %s147 = scalar_lea.vmem [#allocation1], 32
    %148 = vst [vmem:[%s147] ss:$4 sm:$0xff] %v68
    %v149 = vld.sshfl [vmem:[#allocation1] sm:$0xff pattern:$0x73625140]
    %v150 = vld.sshfl [vmem:[#allocation1 + $0x8] sm:$0xff pattern:$0x73625140]
    %v151 = vld.sshfl [vmem:[#allocation1 + $0x10] sm:$0xff pattern:$0x73625140]
    %v152 = vld.sshfl [vmem:[#allocation1 + $0x18] sm:$0xff pattern:$0x73625140]
    %v153 = vld.sshfl [vmem:[#allocation1 + $0x20] sm:$0xff pattern:$0x73625140]
    %v154 = vld.sshfl [vmem:[#allocation1 + $0x28] sm:$0xff pattern:$0x73625140]
    %v155 = vld.sshfl [vmem:[#allocation1 + $0x30] sm:$0xff pattern:$0x73625140]
    %163 = vrot.lane.b32.xlu0 %v149, 28
    %v164 = vpop.permute.xlu0 %163
    %165 = vrot.lane.b32.xlu0 %v150, 28
    %v166 = vpop.permute.xlu0 %165
    %167 = vrot.lane.b32.xlu0 %v151, 28
    %v168 = vpop.permute.xlu0 %167
    %169 = vrot.lane.b32.xlu0 %v152, 28
    %v170 = vpop.permute.xlu0 %169
    %171 = vrot.lane.b32.xlu0 %v153, 28
    %v172 = vpop.permute.xlu0 %171
    %173 = vrot.lane.b32.xlu0 %v154, 28
    %v174 = vpop.permute.xlu0 %173
    %175 = vrot.lane.b32.xlu0 %v155, 28
    %v176 = vpop.permute.xlu0 %175
    %vm177 = vcmp.lt.s32.totalorder %v123, 28
    %v178 = vsel %vm177, %v174, %v176
    %v179 = vsel %vm177, %v172, %v174
    %v180 = vsel %vm177, %v170, %v172
    %v181 = vsel %vm177, %v168, %v170
    %v182 = vsel %vm177, %v166, %v168
    %v183 = vsel %vm177, %v164, %v166
    %v184 = vsel %vm177, %v176, %v164
    %v185 = vperm.slane %v69, 1
    %v186 = vperm.slane %v70, 1
    %v187 = vperm.slane %v71, 1
    %v188 = vperm.slane %v72, 1
    %v189 = vperm.slane %v73, 1
    %v190 = vperm.slane %v74, 1
    %v191 = vperm.slane %v75, 1
    %v192 = vmul.f32 %v184, %v185
    %v193 = vmul.f32 %v183, %v186
    %v194 = vmul.f32 %v182, %v187
    %v195 = vmul.f32 %v181, %v188
    %v196 = vmul.f32 %v180, %v189
    %v197 = vmul.f32 %v179, %v190
    %v198 = vmul.f32 %v178, %v191
    %199 = vst [vmem:[#allocation1] ss:$4 sm:$0xff] %v67
    %s200 = scalar_lea.vmem [#allocation1], 32
    %201 = vst [vmem:[%s200] ss:$4 sm:$0xff] %v68
    %v202 = vld.sshfl [vmem:[#allocation1] sm:$0xff pattern:$0x73625140]
    %v203 = vld.sshfl [vmem:[#allocation1 + $0x8] sm:$0xff pattern:$0x73625140]
    %v204 = vld.sshfl [vmem:[#allocation1 + $0x10] sm:$0xff pattern:$0x73625140]
    %v205 = vld.sshfl [vmem:[#allocation1 + $0x18] sm:$0xff pattern:$0x73625140]
    %v206 = vld.sshfl [vmem:[#allocation1 + $0x20] sm:$0xff pattern:$0x73625140]
    %v207 = vld.sshfl [vmem:[#allocation1 + $0x28] sm:$0xff pattern:$0x73625140]
    %v208 = vld.sshfl [vmem:[#allocation1 + $0x30] sm:$0xff pattern:$0x73625140]
    %216 = vrot.lane.b32.xlu0 %v202, 27
    %v217 = vpop.permute.xlu0 %216
    %218 = vrot.lane.b32.xlu0 %v203, 27
    %v219 = vpop.permute.xlu0 %218
    %220 = vrot.lane.b32.xlu0 %v204, 27
    %v221 = vpop.permute.xlu0 %220
    %222 = vrot.lane.b32.xlu0 %v205, 27
    %v223 = vpop.permute.xlu0 %222
    %224 = vrot.lane.b32.xlu0 %v206, 27
    %v225 = vpop.permute.xlu0 %224
    %226 = vrot.lane.b32.xlu0 %v207, 27
    %v227 = vpop.permute.xlu0 %226
    %228 = vrot.lane.b32.xlu0 %v208, 27
    %v229 = vpop.permute.xlu0 %228
    %vm230 = vcmp.lt.s32.totalorder %v123, 27
    %v231 = vsel %vm230, %v227, %v229
    %v232 = vsel %vm230, %v225, %v227
    %v233 = vsel %vm230, %v223, %v225
    %v234 = vsel %vm230, %v221, %v223
    %v235 = vsel %vm230, %v219, %v221
    %v236 = vsel %vm230, %v217, %v219
    %v237 = vsel %vm230, %v229, %v217
    %v238 = vperm.slane %v69, 2
    %v239 = vperm.slane %v70, 2
    %v240 = vperm.slane %v71, 2
    %v241 = vperm.slane %v72, 2
    %v242 = vperm.slane %v73, 2
    %v243 = vperm.slane %v74, 2
    %v244 = vperm.slane %v75, 2
    %v245 = vmul.f32 %v237, %v238
    %v246 = vmul.f32 %v236, %v239
    %v247 = vmul.f32 %v235, %v240
    %v248 = vmul.f32 %v234, %v241
    %v249 = vmul.f32 %v233, %v242
    %v250 = vmul.f32 %v232, %v243
    %v251 = vmul.f32 %v231, %v244
    %252 = vst [vmem:[#allocation1] ss:$4 sm:$0xff] %v67
    %s253 = scalar_lea.vmem [#allocation1], 32
    %254 = vst [vmem:[%s253] ss:$4 sm:$0xff] %v68
    %v255 = vld.sshfl [vmem:[#allocation1] sm:$0xff pattern:$0x73625140]
    %v256 = vld.sshfl [vmem:[#allocation1 + $0x8] sm:$0xff pattern:$0x73625140]
    %v257 = vld.sshfl [vmem:[#allocation1 + $0x10] sm:$0xff pattern:$0x73625140]
    %v258 = vld.sshfl [vmem:[#allocation1 + $0x18] sm:$0xff pattern:$0x73625140]
    %v259 = vld.sshfl [vmem:[#allocation1 + $0x20] sm:$0xff pattern:$0x73625140]
    %v260 = vld.sshfl [vmem:[#allocation1 + $0x28] sm:$0xff pattern:$0x73625140]
    %v261 = vld.sshfl [vmem:[#allocation1 + $0x30] sm:$0xff pattern:$0x73625140]
    %269 = vrot.lane.b32.xlu0 %v255, 1
    %v270 = vpop.permute.xlu0 %269
    %271 = vrot.lane.b32.xlu0 %v256, 1
    %v272 = vpop.permute.xlu0 %271
    %273 = vrot.lane.b32.xlu0 %v257, 1
    %v274 = vpop.permute.xlu0 %273
    %275 = vrot.lane.b32.xlu0 %v258, 1
    %v276 = vpop.permute.xlu0 %275
    %277 = vrot.lane.b32.xlu0 %v259, 1
    %v278 = vpop.permute.xlu0 %277
    %279 = vrot.lane.b32.xlu0 %v260, 1
    %v280 = vpop.permute.xlu0 %279
    %281 = vrot.lane.b32.xlu0 %v261, 1
    %v282 = vpop.permute.xlu0 %281
    %vm283 = vcmp.lt.s32.totalorder %v123, 1
    %v284 = vsel %vm283, %v280, %v282
    %v285 = vsel %vm283, %v278, %v280
    %v286 = vsel %vm283, %v276, %v278
    %v287 = vsel %vm283, %v274, %v276
    %v288 = vsel %vm283, %v272, %v274
    %v289 = vsel %vm283, %v270, %v272
    %v290 = vsel %vm283, %v282, %v270
    %v291 = vperm.slane %v69, 3
    %v292 = vperm.slane %v70, 3
    %v293 = vperm.slane %v71, 3
    %v294 = vperm.slane %v72, 3
    %v295 = vperm.slane %v73, 3
    %v296 = vperm.slane %v74, 3
    %v297 = vperm.slane %v75, 3
    %v298 = vmul.f32 %v290, %v291
    %v299 = vmul.f32 %v289, %v292
    %v300 = vmul.f32 %v288, %v293
    %v301 = vmul.f32 %v287, %v294
    %v302 = vmul.f32 %v286, %v295
    %v303 = vmul.f32 %v285, %v296
    %v304 = vmul.f32 %v284, %v297
    %v305 = vperm.slane %v69, 4
    %v306 = vperm.slane %v70, 4
    %v307 = vperm.slane %v71, 4
    %v308 = vperm.slane %v72, 4
    %v309 = vperm.slane %v73, 4
    %v310 = vperm.slane %v74, 4
    %v311 = vperm.slane %v75, 4
    %v319 = vrot.slane %v306, 6
    %v320 = vrot.slane %v307, 4
    %v321 = vrot.slane %v308, 2
    %v322 = vrot.slane %v310, 6
    %v323 = vrot.slane %v311, 4
    %vm324 = vcmask 1041408
    %v325 = vsel %vm324, %v305, %v319
    %vm326 = vcmask 1045508
    %v327 = vsel %vm326, %v320, %v321
    %vm328 = vcmask 1043456
    %v329 = vsel %vm328, %v325, %v327
    %v330 = vsel %vm324, %v309, %v322
    %v331 = vsel %vm328, %v330, %v323
    %v334 = vmul.f32 %v67, %v329
    %v335 = vmul.f32 %v68, %v331
    %336 = vst [vmem:[#allocation1] ss:$4 sm:$0xff] %v67
    %s337 = scalar_lea.vmem [#allocation1], 32
    %338 = vst [vmem:[%s337] ss:$4 sm:$0xff] %v68
    %v339 = vld.sshfl [vmem:[#allocation1] sm:$0xff pattern:$0x73625140]
    %v340 = vld.sshfl [vmem:[#allocation1 + $0x8] sm:$0xff pattern:$0x73625140]
    %v341 = vld.sshfl [vmem:[#allocation1 + $0x10] sm:$0xff pattern:$0x73625140]
    %v342 = vld.sshfl [vmem:[#allocation1 + $0x18] sm:$0xff pattern:$0x73625140]
    %v343 = vld.sshfl [vmem:[#allocation1 + $0x20] sm:$0xff pattern:$0x73625140]
    %v344 = vld.sshfl [vmem:[#allocation1 + $0x28] sm:$0xff pattern:$0x73625140]
    %v345 = vld.sshfl [vmem:[#allocation1 + $0x30] sm:$0xff pattern:$0x73625140]
    %353 = vrot.lane.b32.xlu0 %v339, 127
    %v354 = vpop.permute.xlu0 %353
    %355 = vrot.lane.b32.xlu0 %v340, 127
    %v356 = vpop.permute.xlu0 %355
    %357 = vrot.lane.b32.xlu0 %v341, 127
    %v358 = vpop.permute.xlu0 %357
    %359 = vrot.lane.b32.xlu0 %v342, 127
    %v360 = vpop.permute.xlu0 %359
    %361 = vrot.lane.b32.xlu0 %v343, 127
    %v362 = vpop.permute.xlu0 %361
    %363 = vrot.lane.b32.xlu0 %v344, 127
    %v364 = vpop.permute.xlu0 %363
    %365 = vrot.lane.b32.xlu0 %v345, 127
    %v366 = vpop.permute.xlu0 %365
    %vm367 = vcmp.lt.s32.totalorder %v123, 127
    %v368 = vsel %vm367, %v364, %v366
    %v369 = vsel %vm367, %v362, %v364
    %v370 = vsel %vm367, %v360, %v362
    %v371 = vsel %vm367, %v358, %v360
    %v372 = vsel %vm367, %v356, %v358
    %v373 = vsel %vm367, %v354, %v356
    %v374 = vsel %vm367, %v366, %v354
    %v375 = vperm.slane %v69, 5
    %v376 = vperm.slane %v70, 5
    %v377 = vperm.slane %v71, 5
    %v378 = vperm.slane %v72, 5
    %v379 = vperm.slane %v73, 5
    %v380 = vperm.slane %v74, 5
    %v381 = vperm.slane %v75, 5
    %v382 = vmul.f32 %v373, %v375
    %v383 = vmul.f32 %v372, %v376
    %v384 = vmul.f32 %v371, %v377
    %v385 = vmul.f32 %v370, %v378
    %v386 = vmul.f32 %v369, %v379
    %v387 = vmul.f32 %v368, %v380
    %v388 = vmul.f32 %v374, %v381
    %389 = vst [vmem:[#allocation1] ss:$4 sm:$0xff] %v67
    %s390 = scalar_lea.vmem [#allocation1], 32
    %391 = vst [vmem:[%s390] ss:$4 sm:$0xff] %v68
    %v392 = vld.sshfl [vmem:[#allocation1] sm:$0xff pattern:$0x73625140]
    %v393 = vld.sshfl [vmem:[#allocation1 + $0x8] sm:$0xff pattern:$0x73625140]
    %v394 = vld.sshfl [vmem:[#allocation1 + $0x10] sm:$0xff pattern:$0x73625140]
    %v395 = vld.sshfl [vmem:[#allocation1 + $0x18] sm:$0xff pattern:$0x73625140]
    %v396 = vld.sshfl [vmem:[#allocation1 + $0x20] sm:$0xff pattern:$0x73625140]
    %v397 = vld.sshfl [vmem:[#allocation1 + $0x28] sm:$0xff pattern:$0x73625140]
    %v398 = vld.sshfl [vmem:[#allocation1 + $0x30] sm:$0xff pattern:$0x73625140]
    %406 = vrot.lane.b32.xlu0 %v392, 101
    %v407 = vpop.permute.xlu0 %406
    %408 = vrot.lane.b32.xlu0 %v393, 101
    %v409 = vpop.permute.xlu0 %408
    %410 = vrot.lane.b32.xlu0 %v394, 101
    %v411 = vpop.permute.xlu0 %410
    %412 = vrot.lane.b32.xlu0 %v395, 101
    %v413 = vpop.permute.xlu0 %412
    %414 = vrot.lane.b32.xlu0 %v396, 101
    %v415 = vpop.permute.xlu0 %414
    %416 = vrot.lane.b32.xlu0 %v397, 101
    %v417 = vpop.permute.xlu0 %416
    %418 = vrot.lane.b32.xlu0 %v398, 101
    %v419 = vpop.permute.xlu0 %418
    %vm420 = vcmp.lt.s32.totalorder %v123, 101
    %v421 = vsel %vm420, %v417, %v419
    %v422 = vsel %vm420, %v415, %v417
    %v423 = vsel %vm420, %v413, %v415
    %v424 = vsel %vm420, %v411, %v413
    %v425 = vsel %vm420, %v409, %v411
    %v426 = vsel %vm420, %v407, %v409
    %v427 = vsel %vm420, %v419, %v407
    %v428 = vperm.slane %v69, 6
    %v429 = vperm.slane %v70, 6
    %v430 = vperm.slane %v71, 6
    %v431 = vperm.slane %v72, 6
    %v432 = vperm.slane %v73, 6
    %v433 = vperm.slane %v74, 6
    %v434 = vperm.slane %v75, 6
    %v435 = vmul.f32 %v426, %v428
    %v436 = vmul.f32 %v425, %v429
    %v437 = vmul.f32 %v424, %v430
    %v438 = vmul.f32 %v423, %v431
    %v439 = vmul.f32 %v422, %v432
    %v440 = vmul.f32 %v421, %v433
    %v441 = vmul.f32 %v427, %v434
    %442 = vst [vmem:[#allocation1] ss:$4 sm:$0xff] %v67
    %s443 = scalar_lea.vmem [#allocation1], 32
    %444 = vst [vmem:[%s443] ss:$4 sm:$0xff] %v68
    %v445 = vld.sshfl [vmem:[#allocation1] sm:$0xff pattern:$0x73625140]
    %v446 = vld.sshfl [vmem:[#allocation1 + $0x8] sm:$0xff pattern:$0x73625140]
    %v447 = vld.sshfl [vmem:[#allocation1 + $0x10] sm:$0xff pattern:$0x73625140]
    %v448 = vld.sshfl [vmem:[#allocation1 + $0x18] sm:$0xff pattern:$0x73625140]
    %v449 = vld.sshfl [vmem:[#allocation1 + $0x20] sm:$0xff pattern:$0x73625140]
    %v450 = vld.sshfl [vmem:[#allocation1 + $0x28] sm:$0xff pattern:$0x73625140]
    %v451 = vld.sshfl [vmem:[#allocation1 + $0x30] sm:$0xff pattern:$0x73625140]
    %459 = vrot.lane.b32.xlu0 %v445, 100
    %v460 = vpop.permute.xlu0 %459
    %461 = vrot.lane.b32.xlu0 %v446, 100
    %v462 = vpop.permute.xlu0 %461
    %463 = vrot.lane.b32.xlu0 %v447, 100
    %v464 = vpop.permute.xlu0 %463
    %465 = vrot.lane.b32.xlu0 %v448, 100
    %v466 = vpop.permute.xlu0 %465
    %467 = vrot.lane.b32.xlu0 %v449, 100
    %v468 = vpop.permute.xlu0 %467
    %469 = vrot.lane.b32.xlu0 %v450, 100
    %v470 = vpop.permute.xlu0 %469
    %471 = vrot.lane.b32.xlu0 %v451, 100
    %v472 = vpop.permute.xlu0 %471
    %vm473 = vcmp.lt.s32.totalorder %v123, 100
    %v474 = vsel %vm473, %v470, %v472
    %v475 = vsel %vm473, %v468, %v470
    %v476 = vsel %vm473, %v466, %v468
    %v477 = vsel %vm473, %v464, %v466
    %v478 = vsel %vm473, %v462, %v464
    %v479 = vsel %vm473, %v460, %v462
    %v480 = vsel %vm473, %v472, %v460
    %v481 = vperm.slane %v69, 7
    %v482 = vperm.slane %v70, 7
    %v483 = vperm.slane %v71, 7
    %v484 = vperm.slane %v72, 7
    %v485 = vperm.slane %v73, 7
    %v486 = vperm.slane %v74, 7
    %v487 = vperm.slane %v75, 7
    %v488 = vmul.f32 %v479, %v481
    %v489 = vmul.f32 %v478, %v482
    %v490 = vmul.f32 %v477, %v483
    %v491 = vmul.f32 %v476, %v484
    %v492 = vmul.f32 %v475, %v485
    %v493 = vmul.f32 %v474, %v486
    %v494 = vmul.f32 %v480, %v487
    %495 = vst [vmem:[#allocation1] ss:$4 sm:$0xff] %v67
    %s496 = scalar_lea.vmem [#allocation1], 32
    %497 = vst [vmem:[%s496] ss:$4 sm:$0xff] %v68
    %v498 = vld.sshfl [vmem:[#allocation1] sm:$0xff pattern:$0x73625140]
    %v499 = vld.sshfl [vmem:[#allocation1 + $0x8] sm:$0xff pattern:$0x73625140]
    %v500 = vld.sshfl [vmem:[#allocation1 + $0x10] sm:$0xff pattern:$0x73625140]
    %v501 = vld.sshfl [vmem:[#allocation1 + $0x18] sm:$0xff pattern:$0x73625140]
    %v502 = vld.sshfl [vmem:[#allocation1 + $0x20] sm:$0xff pattern:$0x73625140]
    %v503 = vld.sshfl [vmem:[#allocation1 + $0x28] sm:$0xff pattern:$0x73625140]
    %v504 = vld.sshfl [vmem:[#allocation1 + $0x30] sm:$0xff pattern:$0x73625140]
    %512 = vrot.lane.b32.xlu0 %v498, 99
    %v513 = vpop.permute.xlu0 %512
    %514 = vrot.lane.b32.xlu0 %v499, 99
    %v515 = vpop.permute.xlu0 %514
    %516 = vrot.lane.b32.xlu0 %v500, 99
    %v517 = vpop.permute.xlu0 %516
    %518 = vrot.lane.b32.xlu0 %v501, 99
    %v519 = vpop.permute.xlu0 %518
    %520 = vrot.lane.b32.xlu0 %v502, 99
    %v521 = vpop.permute.xlu0 %520
    %522 = vrot.lane.b32.xlu0 %v503, 99
    %v523 = vpop.permute.xlu0 %522
    %524 = vrot.lane.b32.xlu0 %v504, 99
    %v525 = vpop.permute.xlu0 %524
    %vm526 = vcmp.lt.s32.totalorder %v123, 99
    %v527 = vsel %vm526, %v523, %v525
    %v528 = vsel %vm526, %v521, %v523
    %v529 = vsel %vm526, %v519, %v521
    %v530 = vsel %vm526, %v517, %v519
    %v531 = vsel %vm526, %v515, %v517
    %v532 = vsel %vm526, %v513, %v515
    %v533 = vsel %vm526, %v525, %v513
    %v534 = vperm.slane %v76, 0
    %v535 = vperm.slane %v77, 0
    %v536 = vperm.slane %v78, 0
    %v537 = vperm.slane %v79, 0
    %v538 = vperm.slane %v80, 0
    %v539 = vperm.slane %v81, 0
    %v540 = vperm.slane %v82, 0
    %v541 = vmul.f32 %v532, %v534
    %v542 = vmul.f32 %v531, %v535
    %v543 = vmul.f32 %v530, %v536
    %v544 = vmul.f32 %v529, %v537
    %v545 = vmul.f32 %v528, %v538
    %v546 = vmul.f32 %v527, %v539
    %v547 = vmul.f32 %v533, %v540
    %549 = vset.pattern.permute.xlu0 0
    %550 = vperm.xlu0 %549, %v88
    %v551 = vpop.permute.xlu0 %550
    %v553 = vadd.f32 %v551, 0.0
    %555 = vset.pattern.permute.xlu0 0
    %556 = vperm.xlu0 %555, %v87
    %v557 = vpop.permute.xlu0 %556
    %v559 = vperm.slane %v139, 0
    %v560 = vperm.slane %v140, 0
    %v561 = vperm.slane %v141, 0
    %v562 = vperm.slane %v142, 0
    %v563 = vperm.slane %v143, 0
    %v564 = vperm.slane %v144, 0
    %v565 = vperm.slane %v145, 0
    %v566 = vmul.f32 %v557, %v559
    %v567 = vmul.f32 %v557, %v560
    %v568 = vmul.f32 %v557, %v561
    %v569 = vmul.f32 %v557, %v562
    %v570 = vmul.f32 %v557, %v563
    %v571 = vmul.f32 %v557, %v564
    %v572 = vmul.f32 %v557, %v565
    %v573 = vadd.f32 %v553, %v566
    %v574 = vadd.f32 %v553, %v567
    %v575 = vadd.f32 %v553, %v568
    %v576 = vadd.f32 %v553, %v569
    %v577 = vadd.f32 %v553, %v570
    %v578 = vadd.f32 %v553, %v571
    %v579 = vadd.f32 %v553, %v572
    %580 = vset.pattern.permute.xlu0 1
    %581 = vperm.xlu0 %580, %v87
    %v582 = vpop.permute.xlu0 %581
    %v584 = vperm.slane %v192, 0
    %v585 = vperm.slane %v193, 0
    %v586 = vperm.slane %v194, 0
    %v587 = vperm.slane %v195, 0
    %v588 = vperm.slane %v196, 0
    %v589 = vperm.slane %v197, 0
    %v590 = vperm.slane %v198, 0
    %v591 = vmul.f32 %v582, %v584
    %v592 = vmul.f32 %v582, %v585
    %v593 = vmul.f32 %v582, %v586
    %v594 = vmul.f32 %v582, %v587
    %v595 = vmul.f32 %v582, %v588
    %v596 = vmul.f32 %v582, %v589
    %v597 = vmul.f32 %v582, %v590
    %v598 = vadd.f32 %v573, %v591
    %v599 = vadd.f32 %v574, %v592
    %v600 = vadd.f32 %v575, %v593
    %v601 = vadd.f32 %v576, %v594
    %v602 = vadd.f32 %v577, %v595
    %v603 = vadd.f32 %v578, %v596
    %v604 = vadd.f32 %v579, %v597
    %605 = vset.pattern.permute.xlu0 2
    %606 = vperm.xlu0 %605, %v87
    %v607 = vpop.permute.xlu0 %606
    %v609 = vperm.slane %v245, 0
    %v610 = vperm.slane %v246, 0
    %v611 = vperm.slane %v247, 0
    %v612 = vperm.slane %v248, 0
    %v613 = vperm.slane %v249, 0
    %v614 = vperm.slane %v250, 0
    %v615 = vperm.slane %v251, 0
    %v616 = vmul.f32 %v607, %v609
    %v617 = vmul.f32 %v607, %v610
    %v618 = vmul.f32 %v607, %v611
    %v619 = vmul.f32 %v607, %v612
    %v620 = vmul.f32 %v607, %v613
    %v621 = vmul.f32 %v607, %v614
    %v622 = vmul.f32 %v607, %v615
    %v623 = vadd.f32 %v598, %v616
    %v624 = vadd.f32 %v599, %v617
    %v625 = vadd.f32 %v600, %v618
    %v626 = vadd.f32 %v601, %v619
    %v627 = vadd.f32 %v602, %v620
    %v628 = vadd.f32 %v603, %v621
    %v629 = vadd.f32 %v604, %v622
    %630 = vset.pattern.permute.xlu0 3
    %631 = vperm.xlu0 %630, %v87
    %v632 = vpop.permute.xlu0 %631
    %v634 = vperm.slane %v298, 0
    %v635 = vperm.slane %v299, 0
    %v636 = vperm.slane %v300, 0
    %v637 = vperm.slane %v301, 0
    %v638 = vperm.slane %v302, 0
    %v639 = vperm.slane %v303, 0
    %v640 = vperm.slane %v304, 0
    %v641 = vmul.f32 %v632, %v634
    %v642 = vmul.f32 %v632, %v635
    %v643 = vmul.f32 %v632, %v636
    %v644 = vmul.f32 %v632, %v637
    %v645 = vmul.f32 %v632, %v638
    %v646 = vmul.f32 %v632, %v639
    %v647 = vmul.f32 %v632, %v640
    %v648 = vadd.f32 %v623, %v641
    %v649 = vadd.f32 %v624, %v642
    %v650 = vadd.f32 %v625, %v643
    %v651 = vadd.f32 %v626, %v644
    %v652 = vadd.f32 %v627, %v645
    %v653 = vadd.f32 %v628, %v646
    %v654 = vadd.f32 %v629, %v647
    %655 = vset.pattern.permute.xlu0 4
    %656 = vperm.xlu0 %655, %v87
    %v657 = vpop.permute.xlu0 %656
    %v661 = vperm.slane %v334, 0
    %v662 = vperm.slane %v334, 2
    %v663 = vperm.slane %v334, 4
    %v664 = vperm.slane %v334, 6
    %v665 = vperm.slane %v335, 0
    %v666 = vperm.slane %v335, 2
    %v667 = vperm.slane %v335, 4
    %v675 = vperm.slane %v661, 0
    %v676 = vperm.slane %v662, 0
    %v677 = vperm.slane %v663, 0
    %v678 = vperm.slane %v664, 0
    %v679 = vperm.slane %v665, 0
    %v680 = vperm.slane %v666, 0
    %v681 = vperm.slane %v667, 0
    %v682 = vmul.f32 %v657, %v675
    %v683 = vmul.f32 %v657, %v676
    %v684 = vmul.f32 %v657, %v677
    %v685 = vmul.f32 %v657, %v678
    %v686 = vmul.f32 %v657, %v679
    %v687 = vmul.f32 %v657, %v680
    %v688 = vmul.f32 %v657, %v681
    %v689 = vadd.f32 %v648, %v682
    %v690 = vadd.f32 %v649, %v683
    %v691 = vadd.f32 %v650, %v684
    %v692 = vadd.f32 %v651, %v685
    %v693 = vadd.f32 %v652, %v686
    %v694 = vadd.f32 %v653, %v687
    %v695 = vadd.f32 %v654, %v688
    %696 = vset.pattern.permute.xlu0 5
    %697 = vperm.xlu0 %696, %v87
    %v698 = vpop.permute.xlu0 %697
    %v700 = vperm.slane %v382, 0
    %v701 = vperm.slane %v383, 0
    %v702 = vperm.slane %v384, 0
    %v703 = vperm.slane %v385, 0
    %v704 = vperm.slane %v386, 0
    %v705 = vperm.slane %v387, 0
    %v706 = vperm.slane %v388, 0
    %v707 = vmul.f32 %v698, %v700
    %v708 = vmul.f32 %v698, %v701
    %v709 = vmul.f32 %v698, %v702
    %v710 = vmul.f32 %v698, %v703
    %v711 = vmul.f32 %v698, %v704
    %v712 = vmul.f32 %v698, %v705
    %v713 = vmul.f32 %v698, %v706
    %v714 = vadd.f32 %v689, %v707
    %v715 = vadd.f32 %v690, %v708
    %v716 = vadd.f32 %v691, %v709
    %v717 = vadd.f32 %v692, %v710
    %v718 = vadd.f32 %v693, %v711
    %v719 = vadd.f32 %v694, %v712
    %v720 = vadd.f32 %v695, %v713
    %721 = vset.pattern.permute.xlu0 6
    %722 = vperm.xlu0 %721, %v87
    %v723 = vpop.permute.xlu0 %722
    %v725 = vperm.slane %v435, 0
    %v726 = vperm.slane %v436, 0
    %v727 = vperm.slane %v437, 0
    %v728 = vperm.slane %v438, 0
    %v729 = vperm.slane %v439, 0
    %v730 = vperm.slane %v440, 0
    %v731 = vperm.slane %v441, 0
    %v732 = vmul.f32 %v723, %v725
    %v733 = vmul.f32 %v723, %v726
    %v734 = vmul.f32 %v723, %v727
    %v735 = vmul.f32 %v723, %v728
    %v736 = vmul.f32 %v723, %v729
    %v737 = vmul.f32 %v723, %v730
    %v738 = vmul.f32 %v723, %v731
    %v739 = vadd.f32 %v714, %v732
    %v740 = vadd.f32 %v715, %v733
    %v741 = vadd.f32 %v716, %v734
    %v742 = vadd.f32 %v717, %v735
    %v743 = vadd.f32 %v718, %v736
    %v744 = vadd.f32 %v719, %v737
    %v745 = vadd.f32 %v720, %v738
    %746 = vset.pattern.permute.xlu0 7
    %747 = vperm.xlu0 %746, %v87
    %v748 = vpop.permute.xlu0 %747
    %v750 = vperm.slane %v488, 0
    %v751 = vperm.slane %v489, 0
    %v752 = vperm.slane %v490, 0
    %v753 = vperm.slane %v491, 0
    %v754 = vperm.slane %v492, 0
    %v755 = vperm.slane %v493, 0
    %v756 = vperm.slane %v494, 0
    %v757 = vmul.f32 %v748, %v750
    %v758 = vmul.f32 %v748, %v751
    %v759 = vmul.f32 %v748, %v752
    %v760 = vmul.f32 %v748, %v753
    %v761 = vmul.f32 %v748, %v754
    %v762 = vmul.f32 %v748, %v755
    %v763 = vmul.f32 %v748, %v756
    %v764 = vadd.f32 %v739, %v757
    %v765 = vadd.f32 %v740, %v758
    %v766 = vadd.f32 %v741, %v759
    %v767 = vadd.f32 %v742, %v760
    %v768 = vadd.f32 %v743, %v761
    %v769 = vadd.f32 %v744, %v762
    %v770 = vadd.f32 %v745, %v763
    %771 = vset.pattern.permute.xlu0 8
    %772 = vperm.xlu0 %771, %v87
    %v773 = vpop.permute.xlu0 %772
    %v775 = vperm.slane %v541, 0
    %v776 = vperm.slane %v542, 0
    %v777 = vperm.slane %v543, 0
    %v778 = vperm.slane %v544, 0
    %v779 = vperm.slane %v545, 0
    %v780 = vperm.slane %v546, 0
    %v781 = vperm.slane %v547, 0
    %v782 = vmul.f32 %v773, %v775
    %v783 = vmul.f32 %v773, %v776
    %v784 = vmul.f32 %v773, %v777
    %v785 = vmul.f32 %v773, %v778
    %v786 = vmul.f32 %v773, %v779
    %v787 = vmul.f32 %v773, %v780
    %v788 = vmul.f32 %v773, %v781
    %v789 = vadd.f32 %v764, %v782
    %v790 = vadd.f32 %v765, %v783
    %v791 = vadd.f32 %v766, %v784
    %v792 = vadd.f32 %v767, %v785
    %v793 = vadd.f32 %v768, %v786
    %v794 = vadd.f32 %v769, %v787
    %v795 = vadd.f32 %v770, %v788
    %v796 = vmax.f32 %v789, 0.0
    %v797 = vmax.f32 %v790, 0.0
    %v798 = vmax.f32 %v791, 0.0
    %v799 = vmax.f32 %v792, 0.0
    %v800 = vmax.f32 %v793, 0.0
    %v801 = vmax.f32 %v794, 0.0
    %v802 = vmax.f32 %v795, 0.0
    %v803 = vperm.slane %v139, 1
    %v804 = vperm.slane %v140, 1
    %v805 = vperm.slane %v141, 1
    %v806 = vperm.slane %v142, 1
    %v807 = vperm.slane %v143, 1
    %v808 = vperm.slane %v144, 1
    %v809 = vperm.slane %v145, 1
    %v810 = vmul.f32 %v557, %v803
    %v811 = vmul.f32 %v557, %v804
    %v812 = vmul.f32 %v557, %v805
    %v813 = vmul.f32 %v557, %v806
    %v814 = vmul.f32 %v557, %v807
    %v815 = vmul.f32 %v557, %v808
    %v816 = vmul.f32 %v557, %v809
    %v817 = vadd.f32 %v553, %v810
    %v818 = vadd.f32 %v553, %v811
    %v819 = vadd.f32 %v553, %v812
    %v820 = vadd.f32 %v553, %v813
    %v821 = vadd.f32 %v553, %v814
    %v822 = vadd.f32 %v553, %v815
    %v823 = vadd.f32 %v553, %v816
    %v824 = vperm.slane %v192, 1
    %v825 = vperm.slane %v193, 1
    %v826 = vperm.slane %v194, 1
    %v827 = vperm.slane %v195, 1
    %v828 = vperm.slane %v196, 1
    %v829 = vperm.slane %v197, 1
    %v830 = vperm.slane %v198, 1
    %v831 = vmul.f32 %v582, %v824
    %v832 = vmul.f32 %v582, %v825
    %v833 = vmul.f32 %v582, %v826
    %v834 = vmul.f32 %v582, %v827
    %v835 = vmul.f32 %v582, %v828
    %v836 = vmul.f32 %v582, %v829
    %v837 = vmul.f32 %v582, %v830
    %v838 = vadd.f32 %v817, %v831
    %v839 = vadd.f32 %v818, %v832
    %v840 = vadd.f32 %v819, %v833
    %v841 = vadd.f32 %v820, %v834
    %v842 = vadd.f32 %v821, %v835
    %v843 = vadd.f32 %v822, %v836
    %v844 = vadd.f32 %v823, %v837
    %v845 = vperm.slane %v245, 1
    %v846 = vperm.slane %v246, 1
    %v847 = vperm.slane %v247, 1
    %v848 = vperm.slane %v248, 1
    %v849 = vperm.slane %v249, 1
    %v850 = vperm.slane %v250, 1
    %v851 = vperm.slane %v251, 1
    %v852 = vmul.f32 %v607, %v845
    %v853 = vmul.f32 %v607, %v846
    %v854 = vmul.f32 %v607, %v847
    %v855 = vmul.f32 %v607, %v848
    %v856 = vmul.f32 %v607, %v849
    %v857 = vmul.f32 %v607, %v850
    %v858 = vmul.f32 %v607, %v851
    %v859 = vadd.f32 %v838, %v852
    %v860 = vadd.f32 %v839, %v853
    %v861 = vadd.f32 %v840, %v854
    %v862 = vadd.f32 %v841, %v855
    %v863 = vadd.f32 %v842, %v856
    %v864 = vadd.f32 %v843, %v857
    %v865 = vadd.f32 %v844, %v858
    %v866 = vperm.slane %v298, 1
    %v867 = vperm.slane %v299, 1
    %v868 = vperm.slane %v300, 1
    %v869 = vperm.slane %v301, 1
    %v870 = vperm.slane %v302, 1
    %v871 = vperm.slane %v303, 1
    %v872 = vperm.slane %v304, 1
    %v873 = vmul.f32 %v632, %v866
    %v874 = vmul.f32 %v632, %v867
    %v875 = vmul.f32 %v632, %v868
    %v876 = vmul.f32 %v632, %v869
    %v877 = vmul.f32 %v632, %v870
    %v878 = vmul.f32 %v632, %v871
    %v879 = vmul.f32 %v632, %v872
    %v880 = vadd.f32 %v859, %v873
    %v881 = vadd.f32 %v860, %v874
    %v882 = vadd.f32 %v861, %v875
    %v883 = vadd.f32 %v862, %v876
    %v884 = vadd.f32 %v863, %v877
    %v885 = vadd.f32 %v864, %v878
    %v886 = vadd.f32 %v865, %v879
    %v887 = vperm.slane %v334, 1
    %v888 = vperm.slane %v334, 3
    %v889 = vperm.slane %v334, 5
    %v890 = vperm.slane %v334, 7
    %v891 = vperm.slane %v335, 1
    %v892 = vperm.slane %v335, 3
    %v893 = vperm.slane %v335, 5
    %v901 = vperm.slane %v887, 1
    %v902 = vperm.slane %v888, 1
    %v903 = vperm.slane %v889, 1
    %v904 = vperm.slane %v890, 1
    %v905 = vperm.slane %v891, 1
    %v906 = vperm.slane %v892, 1
    %v907 = vperm.slane %v893, 1
    %v908 = vmul.f32 %v657, %v901
    %v909 = vmul.f32 %v657, %v902
    %v910 = vmul.f32 %v657, %v903
    %v911 = vmul.f32 %v657, %v904
    %v912 = vmul.f32 %v657, %v905
    %v913 = vmul.f32 %v657, %v906
    %v914 = vmul.f32 %v657, %v907
    %v915 = vadd.f32 %v880, %v908
    %v916 = vadd.f32 %v881, %v909
    %v917 = vadd.f32 %v882, %v910
    %v918 = vadd.f32 %v883, %v911
    %v919 = vadd.f32 %v884, %v912
    %v920 = vadd.f32 %v885, %v913
    %v921 = vadd.f32 %v886, %v914
    %v922 = vperm.slane %v382, 1
    %v923 = vperm.slane %v383, 1
    %v924 = vperm.slane %v384, 1
    %v925 = vperm.slane %v385, 1
    %v926 = vperm.slane %v386, 1
    %v927 = vperm.slane %v387, 1
    %v928 = vperm.slane %v388, 1
    %v929 = vmul.f32 %v698, %v922
    %v930 = vmul.f32 %v698, %v923
    %v931 = vmul.f32 %v698, %v924
    %v932 = vmul.f32 %v698, %v925
    %v933 = vmul.f32 %v698, %v926
    %v934 = vmul.f32 %v698, %v927
    %v935 = vmul.f32 %v698, %v928
    %v936 = vadd.f32 %v915, %v929
    %v937 = vadd.f32 %v916, %v930
    %v938 = vadd.f32 %v917, %v931
    %v939 = vadd.f32 %v918, %v932
    %v940 = vadd.f32 %v919, %v933
    %v941 = vadd.f32 %v920, %v934
    %v942 = vadd.f32 %v921, %v935
    %v943 = vperm.slane %v435, 1
    %v944 = vperm.slane %v436, 1
    %v945 = vperm.slane %v437, 1
    %v946 = vperm.slane %v438, 1
    %v947 = vperm.slane %v439, 1
    %v948 = vperm.slane %v440, 1
    %v949 = vperm.slane %v441, 1
    %v950 = vmul.f32 %v723, %v943
    %v951 = vmul.f32 %v723, %v944
    %v952 = vmul.f32 %v723, %v945
    %v953 = vmul.f32 %v723, %v946
    %v954 = vmul.f32 %v723, %v947
    %v955 = vmul.f32 %v723, %v948
    %v956 = vmul.f32 %v723, %v949
    %v957 = vadd.f32 %v936, %v950
    %v958 = vadd.f32 %v937, %v951
    %v959 = vadd.f32 %v938, %v952
    %v960 = vadd.f32 %v939, %v953
    %v961 = vadd.f32 %v940, %v954
    %v962 = vadd.f32 %v941, %v955
    %v963 = vadd.f32 %v942, %v956
    %v964 = vperm.slane %v488, 1
    %v965 = vperm.slane %v489, 1
    %v966 = vperm.slane %v490, 1
    %v967 = vperm.slane %v491, 1
    %v968 = vperm.slane %v492, 1
    %v969 = vperm.slane %v493, 1
    %v970 = vperm.slane %v494, 1
    %v971 = vmul.f32 %v748, %v964
    %v972 = vmul.f32 %v748, %v965
    %v973 = vmul.f32 %v748, %v966
    %v974 = vmul.f32 %v748, %v967
    %v975 = vmul.f32 %v748, %v968
    %v976 = vmul.f32 %v748, %v969
    %v977 = vmul.f32 %v748, %v970
    %v978 = vadd.f32 %v957, %v971
    %v979 = vadd.f32 %v958, %v972
    %v980 = vadd.f32 %v959, %v973
    %v981 = vadd.f32 %v960, %v974
    %v982 = vadd.f32 %v961, %v975
    %v983 = vadd.f32 %v962, %v976
    %v984 = vadd.f32 %v963, %v977
    %v985 = vperm.slane %v541, 1
    %v986 = vperm.slane %v542, 1
    %v987 = vperm.slane %v543, 1
    %v988 = vperm.slane %v544, 1
    %v989 = vperm.slane %v545, 1
    %v990 = vperm.slane %v546, 1
    %v991 = vperm.slane %v547, 1
    %v992 = vmul.f32 %v773, %v985
    %v993 = vmul.f32 %v773, %v986
    %v994 = vmul.f32 %v773, %v987
    %v995 = vmul.f32 %v773, %v988
    %v996 = vmul.f32 %v773, %v989
    %v997 = vmul.f32 %v773, %v990
    %v998 = vmul.f32 %v773, %v991
    %v999 = vadd.f32 %v978, %v992
    %v1000 = vadd.f32 %v979, %v993
    %v1001 = vadd.f32 %v980, %v994
    %v1002 = vadd.f32 %v981, %v995
    %v1003 = vadd.f32 %v982, %v996
    %v1004 = vadd.f32 %v983, %v997
    %v1005 = vadd.f32 %v984, %v998
    %v1006 = vmax.f32 %v999, 0.0
    %v1007 = vmax.f32 %v1000, 0.0
    %v1008 = vmax.f32 %v1001, 0.0
    %v1009 = vmax.f32 %v1002, 0.0
    %v1010 = vmax.f32 %v1003, 0.0
    %v1011 = vmax.f32 %v1004, 0.0
    %v1012 = vmax.f32 %v1005, 0.0
    %v1013 = vld [vmem:[%s3] sm:$0xff]
    %v1014 = vld [vmem:[%s4] sm:$0xff]
    %1015 = vrot.lane.b32.xlu0 %v796, 29
    %v1016 = vpop.permute.xlu0 %1015
    %1017 = vrot.lane.b32.xlu0 %v1006, 29
    %v1018 = vpop.permute.xlu0 %1017
    %1019 = vrot.lane.b32.xlu0 %v797, 29
    %v1020 = vpop.permute.xlu0 %1019
    %1021 = vrot.lane.b32.xlu0 %v1007, 29
    %v1022 = vpop.permute.xlu0 %1021
    %1023 = vrot.lane.b32.xlu0 %v798, 29
    %v1024 = vpop.permute.xlu0 %1023
    %1025 = vrot.lane.b32.xlu0 %v1008, 29
    %v1026 = vpop.permute.xlu0 %1025
    %1027 = vrot.lane.b32.xlu0 %v799, 29
    %v1028 = vpop.permute.xlu0 %1027
    %1029 = vrot.lane.b32.xlu0 %v1009, 29
    %v1030 = vpop.permute.xlu0 %1029
    %1031 = vrot.lane.b32.xlu0 %v800, 29
    %v1032 = vpop.permute.xlu0 %1031
    %1033 = vrot.lane.b32.xlu0 %v1010, 29
    %v1034 = vpop.permute.xlu0 %1033
    %1035 = vrot.lane.b32.xlu0 %v801, 29
    %v1036 = vpop.permute.xlu0 %1035
    %1037 = vrot.lane.b32.xlu0 %v1011, 29
    %v1038 = vpop.permute.xlu0 %1037
    %1039 = vrot.lane.b32.xlu0 %v802, 29
    %v1040 = vpop.permute.xlu0 %1039
    %1041 = vrot.lane.b32.xlu0 %v1012, 29
    %v1042 = vpop.permute.xlu0 %1041
    %v1043 = vsel %vm124, %v1036, %v1040
    %v1044 = vsel %vm124, %v1038, %v1042
    %v1045 = vsel %vm124, %v1032, %v1036
    %v1046 = vsel %vm124, %v1034, %v1038
    %v1047 = vsel %vm124, %v1028, %v1032
    %v1048 = vsel %vm124, %v1030, %v1034
    %v1049 = vsel %vm124, %v1024, %v1028
    %v1050 = vsel %vm124, %v1026, %v1030
    %v1051 = vsel %vm124, %v1020, %v1024
    %v1052 = vsel %vm124, %v1022, %v1026
    %v1053 = vsel %vm124, %v1016, %v1020
    %v1054 = vsel %vm124, %v1018, %v1022
    %v1055 = vsel %vm124, %v1040, %v1016
    %v1056 = vsel %vm124, %v1042, %v1018
    %v1057 = vmul.f32 %v1055, %v132
    %v1058 = vmul.f32 %v1053, %v133
    %v1059 = vmul.f32 %v1051, %v134
    %v1060 = vmul.f32 %v1049, %v135
    %v1061 = vmul.f32 %v1047, %v136
    %v1062 = vmul.f32 %v1045, %v137
    %v1063 = vmul.f32 %v1043, %v138
    %v1064 = vmul.f32 %v1056, %v132
    %v1065 = vmul.f32 %v1054, %v133
    %v1066 = vmul.f32 %v1052, %v134
    %v1067 = vmul.f32 %v1050, %v135
    %v1068 = vmul.f32 %v1048, %v136
    %v1069 = vmul.f32 %v1046, %v137
    %v1070 = vmul.f32 %v1044, %v138
    %1071 = vrot.lane.b32.xlu0 %v796, 28
    %v1072 = vpop.permute.xlu0 %1071
    %1073 = vrot.lane.b32.xlu0 %v1006, 28
    %v1074 = vpop.permute.xlu0 %1073
    %1075 = vrot.lane.b32.xlu0 %v797, 28
    %v1076 = vpop.permute.xlu0 %1075
    %1077 = vrot.lane.b32.xlu0 %v1007, 28
    %v1078 = vpop.permute.xlu0 %1077
    %1079 = vrot.lane.b32.xlu0 %v798, 28
    %v1080 = vpop.permute.xlu0 %1079
    %1081 = vrot.lane.b32.xlu0 %v1008, 28
    %v1082 = vpop.permute.xlu0 %1081
    %1083 = vrot.lane.b32.xlu0 %v799, 28
    %v1084 = vpop.permute.xlu0 %1083
    %1085 = vrot.lane.b32.xlu0 %v1009, 28
    %v1086 = vpop.permute.xlu0 %1085
    %1087 = vrot.lane.b32.xlu0 %v800, 28
    %v1088 = vpop.permute.xlu0 %1087
    %1089 = vrot.lane.b32.xlu0 %v1010, 28
    %v1090 = vpop.permute.xlu0 %1089
    %1091 = vrot.lane.b32.xlu0 %v801, 28
    %v1092 = vpop.permute.xlu0 %1091
    %1093 = vrot.lane.b32.xlu0 %v1011, 28
    %v1094 = vpop.permute.xlu0 %1093
    %1095 = vrot.lane.b32.xlu0 %v802, 28
    %v1096 = vpop.permute.xlu0 %1095
    %1097 = vrot.lane.b32.xlu0 %v1012, 28
    %v1098 = vpop.permute.xlu0 %1097
    %v1099 = vsel %vm177, %v1092, %v1096
    %v1100 = vsel %vm177, %v1094, %v1098
    %v1101 = vsel %vm177, %v1088, %v1092
    %v1102 = vsel %vm177, %v1090, %v1094
    %v1103 = vsel %vm177, %v1084, %v1088
    %v1104 = vsel %vm177, %v1086, %v1090
    %v1105 = vsel %vm177, %v1080, %v1084
    %v1106 = vsel %vm177, %v1082, %v1086
    %v1107 = vsel %vm177, %v1076, %v1080
    %v1108 = vsel %vm177, %v1078, %v1082
    %v1109 = vsel %vm177, %v1072, %v1076
    %v1110 = vsel %vm177, %v1074, %v1078
    %v1111 = vsel %vm177, %v1096, %v1072
    %v1112 = vsel %vm177, %v1098, %v1074
    %v1113 = vmul.f32 %v1111, %v185
    %v1114 = vmul.f32 %v1109, %v186
    %v1115 = vmul.f32 %v1107, %v187
    %v1116 = vmul.f32 %v1105, %v188
    %v1117 = vmul.f32 %v1103, %v189
    %v1118 = vmul.f32 %v1101, %v190
    %v1119 = vmul.f32 %v1099, %v191
    %v1120 = vmul.f32 %v1112, %v185
    %v1121 = vmul.f32 %v1110, %v186
    %v1122 = vmul.f32 %v1108, %v187
    %v1123 = vmul.f32 %v1106, %v188
    %v1124 = vmul.f32 %v1104, %v189
    %v1125 = vmul.f32 %v1102, %v190
    %v1126 = vmul.f32 %v1100, %v191
    %1127 = vrot.lane.b32.xlu0 %v796, 27
    %v1128 = vpop.permute.xlu0 %1127
    %1129 = vrot.lane.b32.xlu0 %v1006, 27
    %v1130 = vpop.permute.xlu0 %1129
    %1131 = vrot.lane.b32.xlu0 %v797, 27
    %v1132 = vpop.permute.xlu0 %1131
    %1133 = vrot.lane.b32.xlu0 %v1007, 27
    %v1134 = vpop.permute.xlu0 %1133
    %1135 = vrot.lane.b32.xlu0 %v798, 27
    %v1136 = vpop.permute.xlu0 %1135
    %1137 = vrot.lane.b32.xlu0 %v1008, 27
    %v1138 = vpop.permute.xlu0 %1137
    %1139 = vrot.lane.b32.xlu0 %v799, 27
    %v1140 = vpop.permute.xlu0 %1139
    %1141 = vrot.lane.b32.xlu0 %v1009, 27
    %v1142 = vpop.permute.xlu0 %1141
    %1143 = vrot.lane.b32.xlu0 %v800, 27
    %v1144 = vpop.permute.xlu0 %1143
    %1145 = vrot.lane.b32.xlu0 %v1010, 27
    %v1146 = vpop.permute.xlu0 %1145
    %1147 = vrot.lane.b32.xlu0 %v801, 27
    %v1148 = vpop.permute.xlu0 %1147
    %1149 = vrot.lane.b32.xlu0 %v1011, 27
    %v1150 = vpop.permute.xlu0 %1149
    %1151 = vrot.lane.b32.xlu0 %v802, 27
    %v1152 = vpop.permute.xlu0 %1151
    %1153 = vrot.lane.b32.xlu0 %v1012, 27
    %v1154 = vpop.permute.xlu0 %1153
    %v1155 = vsel %vm230, %v1148, %v1152
    %v1156 = vsel %vm230, %v1150, %v1154
    %v1157 = vsel %vm230, %v1144, %v1148
    %v1158 = vsel %vm230, %v1146, %v1150
    %v1159 = vsel %vm230, %v1140, %v1144
    %v1160 = vsel %vm230, %v1142, %v1146
    %v1161 = vsel %vm230, %v1136, %v1140
    %v1162 = vsel %vm230, %v1138, %v1142
    %v1163 = vsel %vm230, %v1132, %v1136
    %v1164 = vsel %vm230, %v1134, %v1138
    %v1165 = vsel %vm230, %v1128, %v1132
    %v1166 = vsel %vm230, %v1130, %v1134
    %v1167 = vsel %vm230, %v1152, %v1128
    %v1168 = vsel %vm230, %v1154, %v1130
    %v1169 = vmul.f32 %v1167, %v238
    %v1170 = vmul.f32 %v1165, %v239
    %v1171 = vmul.f32 %v1163, %v240
    %v1172 = vmul.f32 %v1161, %v241
    %v1173 = vmul.f32 %v1159, %v242
    %v1174 = vmul.f32 %v1157, %v243
    %v1175 = vmul.f32 %v1155, %v244
    %v1176 = vmul.f32 %v1168, %v238
    %v1177 = vmul.f32 %v1166, %v239
    %v1178 = vmul.f32 %v1164, %v240
    %v1179 = vmul.f32 %v1162, %v241
    %v1180 = vmul.f32 %v1160, %v242
    %v1181 = vmul.f32 %v1158, %v243
    %v1182 = vmul.f32 %v1156, %v244
    %1183 = vrot.lane.b32.xlu0 %v796, 1
    %v1184 = vpop.permute.xlu0 %1183
    %1185 = vrot.lane.b32.xlu0 %v1006, 1
    %v1186 = vpop.permute.xlu0 %1185
    %1187 = vrot.lane.b32.xlu0 %v797, 1
    %v1188 = vpop.permute.xlu0 %1187
    %1189 = vrot.lane.b32.xlu0 %v1007, 1
    %v1190 = vpop.permute.xlu0 %1189
    %1191 = vrot.lane.b32.xlu0 %v798, 1
    %v1192 = vpop.permute.xlu0 %1191
    %1193 = vrot.lane.b32.xlu0 %v1008, 1
    %v1194 = vpop.permute.xlu0 %1193
    %1195 = vrot.lane.b32.xlu0 %v799, 1
    %v1196 = vpop.permute.xlu0 %1195
    %1197 = vrot.lane.b32.xlu0 %v1009, 1
    %v1198 = vpop.permute.xlu0 %1197
    %1199 = vrot.lane.b32.xlu0 %v800, 1
    %v1200 = vpop.permute.xlu0 %1199
    %1201 = vrot.lane.b32.xlu0 %v1010, 1
    %v1202 = vpop.permute.xlu0 %1201
    %1203 = vrot.lane.b32.xlu0 %v801, 1
    %v1204 = vpop.permute.xlu0 %1203
    %1205 = vrot.lane.b32.xlu0 %v1011, 1
    %v1206 = vpop.permute.xlu0 %1205
    %1207 = vrot.lane.b32.xlu0 %v802, 1
    %v1208 = vpop.permute.xlu0 %1207
    %1209 = vrot.lane.b32.xlu0 %v1012, 1
    %v1210 = vpop.permute.xlu0 %1209
    %v1211 = vsel %vm283, %v1204, %v1208
    %v1212 = vsel %vm283, %v1206, %v1210
    %v1213 = vsel %vm283, %v1200, %v1204
    %v1214 = vsel %vm283, %v1202, %v1206
    %v1215 = vsel %vm283, %v1196, %v1200
    %v1216 = vsel %vm283, %v1198, %v1202
    %v1217 = vsel %vm283, %v1192, %v1196
    %v1218 = vsel %vm283, %v1194, %v1198
    %v1219 = vsel %vm283, %v1188, %v1192
    %v1220 = vsel %vm283, %v1190, %v1194
    %v1221 = vsel %vm283, %v1184, %v1188
    %v1222 = vsel %vm283, %v1186, %v1190
    %v1223 = vsel %vm283, %v1208, %v1184
    %v1224 = vsel %vm283, %v1210, %v1186
    %v1225 = vmul.f32 %v1223, %v291
    %v1226 = vmul.f32 %v1221, %v292
    %v1227 = vmul.f32 %v1219, %v293
    %v1228 = vmul.f32 %v1217, %v294
    %v1229 = vmul.f32 %v1215, %v295
    %v1230 = vmul.f32 %v1213, %v296
    %v1231 = vmul.f32 %v1211, %v297
    %v1232 = vmul.f32 %v1224, %v291
    %v1233 = vmul.f32 %v1222, %v292
    %v1234 = vmul.f32 %v1220, %v293
    %v1235 = vmul.f32 %v1218, %v294
    %v1236 = vmul.f32 %v1216, %v295
    %v1237 = vmul.f32 %v1214, %v296
    %v1238 = vmul.f32 %v1212, %v297
    %v1239 = vmul.f32 %v796, %v305
    %v1240 = vmul.f32 %v797, %v306
    %v1241 = vmul.f32 %v798, %v307
    %v1242 = vmul.f32 %v799, %v308
    %v1243 = vmul.f32 %v800, %v309
    %v1244 = vmul.f32 %v801, %v310
    %v1245 = vmul.f32 %v802, %v311
    %v1246 = vmul.f32 %v1006, %v305
    %v1247 = vmul.f32 %v1007, %v306
    %v1248 = vmul.f32 %v1008, %v307
    %v1249 = vmul.f32 %v1009, %v308
    %v1250 = vmul.f32 %v1010, %v309
    %v1251 = vmul.f32 %v1011, %v310
    %v1252 = vmul.f32 %v1012, %v311
    %1253 = vrot.lane.b32.xlu0 %v796, 127
    %v1254 = vpop.permute.xlu0 %1253
    %1255 = vrot.lane.b32.xlu0 %v1006, 127
    %v1256 = vpop.permute.xlu0 %1255
    %1257 = vrot.lane.b32.xlu0 %v797, 127
    %v1258 = vpop.permute.xlu0 %1257
    %1259 = vrot.lane.b32.xlu0 %v1007, 127
    %v1260 = vpop.permute.xlu0 %1259
    %1261 = vrot.lane.b32.xlu0 %v798, 127
    %v1262 = vpop.permute.xlu0 %1261
    %1263 = vrot.lane.b32.xlu0 %v1008, 127
    %v1264 = vpop.permute.xlu0 %1263
    %1265 = vrot.lane.b32.xlu0 %v799, 127
    %v1266 = vpop.permute.xlu0 %1265
    %1267 = vrot.lane.b32.xlu0 %v1009, 127
    %v1268 = vpop.permute.xlu0 %1267
    %1269 = vrot.lane.b32.xlu0 %v800, 127
    %v1270 = vpop.permute.xlu0 %1269
    %1271 = vrot.lane.b32.xlu0 %v1010, 127
    %v1272 = vpop.permute.xlu0 %1271
    %1273 = vrot.lane.b32.xlu0 %v801, 127
    %v1274 = vpop.permute.xlu0 %1273
    %1275 = vrot.lane.b32.xlu0 %v1011, 127
    %v1276 = vpop.permute.xlu0 %1275
    %1277 = vrot.lane.b32.xlu0 %v802, 127
    %v1278 = vpop.permute.xlu0 %1277
    %1279 = vrot.lane.b32.xlu0 %v1012, 127
    %v1280 = vpop.permute.xlu0 %1279
    %v1281 = vsel %vm367, %v1274, %v1278
    %v1282 = vsel %vm367, %v1276, %v1280
    %v1283 = vsel %vm367, %v1270, %v1274
    %v1284 = vsel %vm367, %v1272, %v1276
    %v1285 = vsel %vm367, %v1266, %v1270
    %v1286 = vsel %vm367, %v1268, %v1272
    %v1287 = vsel %vm367, %v1262, %v1266
    %v1288 = vsel %vm367, %v1264, %v1268
    %v1289 = vsel %vm367, %v1258, %v1262
    %v1290 = vsel %vm367, %v1260, %v1264
    %v1291 = vsel %vm367, %v1254, %v1258
    %v1292 = vsel %vm367, %v1256, %v1260
    %v1293 = vsel %vm367, %v1278, %v1254
    %v1294 = vsel %vm367, %v1280, %v1256
    %v1295 = vmul.f32 %v1291, %v375
    %v1296 = vmul.f32 %v1289, %v376
    %v1297 = vmul.f32 %v1287, %v377
    %v1298 = vmul.f32 %v1285, %v378
    %v1299 = vmul.f32 %v1283, %v379
    %v1300 = vmul.f32 %v1281, %v380
    %v1301 = vmul.f32 %v1293, %v381
    %v1302 = vmul.f32 %v1292, %v375
    %v1303 = vmul.f32 %v1290, %v376
    %v1304 = vmul.f32 %v1288, %v377
    %v1305 = vmul.f32 %v1286, %v378
    %v1306 = vmul.f32 %v1284, %v379
    %v1307 = vmul.f32 %v1282, %v380
    %v1308 = vmul.f32 %v1294, %v381
    %1309 = vrot.lane.b32.xlu0 %v796, 101
    %v1310 = vpop.permute.xlu0 %1309
    %1311 = vrot.lane.b32.xlu0 %v1006, 101
    %v1312 = vpop.permute.xlu0 %1311
    %1313 = vrot.lane.b32.xlu0 %v797, 101
    %v1314 = vpop.permute.xlu0 %1313
    %1315 = vrot.lane.b32.xlu0 %v1007, 101
    %v1316 = vpop.permute.xlu0 %1315
    %1317 = vrot.lane.b32.xlu0 %v798, 101
    %v1318 = vpop.permute.xlu0 %1317
    %1319 = vrot.lane.b32.xlu0 %v1008, 101
    %v1320 = vpop.permute.xlu0 %1319
    %1321 = vrot.lane.b32.xlu0 %v799, 101
    %v1322 = vpop.permute.xlu0 %1321
    %1323 = vrot.lane.b32.xlu0 %v1009, 101
    %v1324 = vpop.permute.xlu0 %1323
    %1325 = vrot.lane.b32.xlu0 %v800, 101
    %v1326 = vpop.permute.xlu0 %1325
    %1327 = vrot.lane.b32.xlu0 %v1010, 101
    %v1328 = vpop.permute.xlu0 %1327
    %1329 = vrot.lane.b32.xlu0 %v801, 101
    %v1330 = vpop.permute.xlu0 %1329
    %1331 = vrot.lane.b32.xlu0 %v1011, 101
    %v1332 = vpop.permute.xlu0 %1331
    %1333 = vrot.lane.b32.xlu0 %v802, 101
    %v1334 = vpop.permute.xlu0 %1333
    %1335 = vrot.lane.b32.xlu0 %v1012, 101
    %v1336 = vpop.permute.xlu0 %1335
    %v1337 = vsel %vm420, %v1330, %v1334
    %v1338 = vsel %vm420, %v1332, %v1336
    %v1339 = vsel %vm420, %v1326, %v1330
    %v1340 = vsel %vm420, %v1328, %v1332
    %v1341 = vsel %vm420, %v1322, %v1326
    %v1342 = vsel %vm420, %v1324, %v1328
    %v1343 = vsel %vm420, %v1318, %v1322
    %v1344 = vsel %vm420, %v1320, %v1324
    %v1345 = vsel %vm420, %v1314, %v1318
    %v1346 = vsel %vm420, %v1316, %v1320
    %v1347 = vsel %vm420, %v1310, %v1314
    %v1348 = vsel %vm420, %v1312, %v1316
    %v1349 = vsel %vm420, %v1334, %v1310
    %v1350 = vsel %vm420, %v1336, %v1312
    %v1351 = vmul.f32 %v1347, %v428
    %v1352 = vmul.f32 %v1345, %v429
    %v1353 = vmul.f32 %v1343, %v430
    %v1354 = vmul.f32 %v1341, %v431
    %v1355 = vmul.f32 %v1339, %v432
    %v1356 = vmul.f32 %v1337, %v433
    %v1357 = vmul.f32 %v1349, %v434
    %v1358 = vmul.f32 %v1348, %v428
    %v1359 = vmul.f32 %v1346, %v429
    %v1360 = vmul.f32 %v1344, %v430
    %v1361 = vmul.f32 %v1342, %v431
    %v1362 = vmul.f32 %v1340, %v432
    %v1363 = vmul.f32 %v1338, %v433
    %v1364 = vmul.f32 %v1350, %v434
    %1365 = vrot.lane.b32.xlu0 %v796, 100
    %v1366 = vpop.permute.xlu0 %1365
    %1367 = vrot.lane.b32.xlu0 %v1006, 100
    %v1368 = vpop.permute.xlu0 %1367
    %1369 = vrot.lane.b32.xlu0 %v797, 100
    %v1370 = vpop.permute.xlu0 %1369
    %1371 = vrot.lane.b32.xlu0 %v1007, 100
    %v1372 = vpop.permute.xlu0 %1371
    %1373 = vrot.lane.b32.xlu0 %v798, 100
    %v1374 = vpop.permute.xlu0 %1373
    %1375 = vrot.lane.b32.xlu0 %v1008, 100
    %v1376 = vpop.permute.xlu0 %1375
    %1377 = vrot.lane.b32.xlu0 %v799, 100
    %v1378 = vpop.permute.xlu0 %1377
    %1379 = vrot.lane.b32.xlu0 %v1009, 100
    %v1380 = vpop.permute.xlu0 %1379
    %1381 = vrot.lane.b32.xlu0 %v800, 100
    %v1382 = vpop.permute.xlu0 %1381
    %1383 = vrot.lane.b32.xlu0 %v1010, 100
    %v1384 = vpop.permute.xlu0 %1383
    %1385 = vrot.lane.b32.xlu0 %v801, 100
    %v1386 = vpop.permute.xlu0 %1385
    %1387 = vrot.lane.b32.xlu0 %v1011, 100
    %v1388 = vpop.permute.xlu0 %1387
    %1389 = vrot.lane.b32.xlu0 %v802, 100
    %v1390 = vpop.permute.xlu0 %1389
    %1391 = vrot.lane.b32.xlu0 %v1012, 100
    %v1392 = vpop.permute.xlu0 %1391
    %v1393 = vsel %vm473, %v1386, %v1390
    %v1394 = vsel %vm473, %v1388, %v1392
    %v1395 = vsel %vm473, %v1382, %v1386
    %v1396 = vsel %vm473, %v1384, %v1388
    %v1397 = vsel %vm473, %v1378, %v1382
    %v1398 = vsel %vm473, %v1380, %v1384
    %v1399 = vsel %vm473, %v1374, %v1378
    %v1400 = vsel %vm473, %v1376, %v1380
    %v1401 = vsel %vm473, %v1370, %v1374
    %v1402 = vsel %vm473, %v1372, %v1376
    %v1403 = vsel %vm473, %v1366, %v1370
    %v1404 = vsel %vm473, %v1368, %v1372
    %v1405 = vsel %vm473, %v1390, %v1366
    %v1406 = vsel %vm473, %v1392, %v1368
    %v1407 = vmul.f32 %v1403, %v481
    %v1408 = vmul.f32 %v1401, %v482
    %v1409 = vmul.f32 %v1399, %v483
    %v1410 = vmul.f32 %v1397, %v484
    %v1411 = vmul.f32 %v1395, %v485
    %v1412 = vmul.f32 %v1393, %v486
    %v1413 = vmul.f32 %v1405, %v487
    %v1414 = vmul.f32 %v1404, %v481
    %v1415 = vmul.f32 %v1402, %v482
    %v1416 = vmul.f32 %v1400, %v483
    %v1417 = vmul.f32 %v1398, %v484
    %v1418 = vmul.f32 %v1396, %v485
    %v1419 = vmul.f32 %v1394, %v486
    %v1420 = vmul.f32 %v1406, %v487
    %1421 = vrot.lane.b32.xlu0 %v796, 99
    %v1422 = vpop.permute.xlu0 %1421
    %1423 = vrot.lane.b32.xlu0 %v1006, 99
    %v1424 = vpop.permute.xlu0 %1423
    %1425 = vrot.lane.b32.xlu0 %v797, 99
    %v1426 = vpop.permute.xlu0 %1425
    %1427 = vrot.lane.b32.xlu0 %v1007, 99
    %v1428 = vpop.permute.xlu0 %1427
    %1429 = vrot.lane.b32.xlu0 %v798, 99
    %v1430 = vpop.permute.xlu0 %1429
    %1431 = vrot.lane.b32.xlu0 %v1008, 99
    %v1432 = vpop.permute.xlu0 %1431
    %1433 = vrot.lane.b32.xlu0 %v799, 99
    %v1434 = vpop.permute.xlu0 %1433
    %1435 = vrot.lane.b32.xlu0 %v1009, 99
    %v1436 = vpop.permute.xlu0 %1435
    %1437 = vrot.lane.b32.xlu0 %v800, 99
    %v1438 = vpop.permute.xlu0 %1437
    %1439 = vrot.lane.b32.xlu0 %v1010, 99
    %v1440 = vpop.permute.xlu0 %1439
    %1441 = vrot.lane.b32.xlu0 %v801, 99
    %v1442 = vpop.permute.xlu0 %1441
    %1443 = vrot.lane.b32.xlu0 %v1011, 99
    %v1444 = vpop.permute.xlu0 %1443
    %1445 = vrot.lane.b32.xlu0 %v802, 99
    %v1446 = vpop.permute.xlu0 %1445
    %1447 = vrot.lane.b32.xlu0 %v1012, 99
    %v1448 = vpop.permute.xlu0 %1447
    %v1449 = vsel %vm526, %v1442, %v1446
    %v1450 = vsel %vm526, %v1444, %v1448
    %v1451 = vsel %vm526, %v1438, %v1442
    %v1452 = vsel %vm526, %v1440, %v1444
    %v1453 = vsel %vm526, %v1434, %v1438
    %v1454 = vsel %vm526, %v1436, %v1440
    %v1455 = vsel %vm526, %v1430, %v1434
    %v1456 = vsel %vm526, %v1432, %v1436
    %v1457 = vsel %vm526, %v1426, %v1430
    %v1458 = vsel %vm526, %v1428, %v1432
    %v1459 = vsel %vm526, %v1422, %v1426
    %v1460 = vsel %vm526, %v1424, %v1428
    %v1461 = vsel %vm526, %v1446, %v1422
    %v1462 = vsel %vm526, %v1448, %v1424
    %v1463 = vmul.f32 %v1459, %v534
    %v1464 = vmul.f32 %v1457, %v535
    %v1465 = vmul.f32 %v1455, %v536
    %v1466 = vmul.f32 %v1453, %v537
    %v1467 = vmul.f32 %v1451, %v538
    %v1468 = vmul.f32 %v1449, %v539
    %v1469 = vmul.f32 %v1461, %v540
    %v1470 = vmul.f32 %v1460, %v534
    %v1471 = vmul.f32 %v1458, %v535
    %v1472 = vmul.f32 %v1456, %v536
    %v1473 = vmul.f32 %v1454, %v537
    %v1474 = vmul.f32 %v1452, %v538
    %v1475 = vmul.f32 %v1450, %v539
    %v1476 = vmul.f32 %v1462, %v540
    %1478 = vset.pattern.permute.xlu0 0
    %1479 = vperm.xlu0 %1478, %v1014
    %v1480 = vpop.permute.xlu0 %1479
    %vm1482 = vcmask 588800
    %v1484 = vsel %vm1482, %v1013, 0
    %1486 = vmatpush.msra.mxu0 0.0
    %1487 = vmatpush.msra.mxu0 0.0
    %1488 = vmatpush.msra.mxu0 0.0
    %1489 = vmatpush.msra.mxu0 0.0
    %1490 = vmatpush.msra.mxu0 0.0
    %1491 = vmatpush.msra.mxu0 0.0
    %1492 = vmatpush.msra.mxu0 0.0
    %1493 = vmatpush.msra.mxu0 %v1463
    %1494 = vmatpush.msra.mxu0 %v1407
    %1495 = vmatpush.msra.mxu0 %v1351
    %1496 = vmatpush.msra.mxu0 %v1295
    %1497 = vmatpush.msra.mxu0 %v1239
    %1498 = vmatpush.msra.mxu0 %v1225
    %1499 = vmatpush.msra.mxu0 %v1169
    %1500 = vmatpush.msra.mxu0 %v1113
    %1501 = vmatpush.msra.mxu0 %v1057
    %1502 = vmatmul.f32.gmra.mxu0 %v1484
    %v1503 = vpop.f32.mrf.mxu0
    %v1504 = vadd.f32 %v1480, %v1503
    %1505 = vdwg.mxu0
    %1506 = vmatpush.msra.mxu0 0.0
    %1507 = vmatpush.msra.mxu0 0.0
    %1508 = vmatpush.msra.mxu0 0.0
    %1509 = vmatpush.msra.mxu0 0.0
    %1510 = vmatpush.msra.mxu0 0.0
    %1511 = vmatpush.msra.mxu0 0.0
    %1512 = vmatpush.msra.mxu0 0.0
    %1513 = vmatpush.msra.mxu0 %v1464
    %1514 = vmatpush.msra.mxu0 %v1408
    %1515 = vmatpush.msra.mxu0 %v1352
    %1516 = vmatpush.msra.mxu0 %v1296
    %1517 = vmatpush.msra.mxu0 %v1240
    %1518 = vmatpush.msra.mxu0 %v1226
    %1519 = vmatpush.msra.mxu0 %v1170
    %1520 = vmatpush.msra.mxu0 %v1114
    %1521 = vmatpush.msra.mxu0 %v1058
    %1522 = vmatmul.f32.gmra.mxu0 %v1484
    %v1523 = vpop.f32.mrf.mxu0
    %v1524 = vadd.f32 %v1480, %v1523
    %1525 = vdwg.mxu0
    %1526 = vmatpush.msra.mxu0 0.0
    %1527 = vmatpush.msra.mxu0 0.0
    %1528 = vmatpush.msra.mxu0 0.0
    %1529 = vmatpush.msra.mxu0 0.0
    %1530 = vmatpush.msra.mxu0 0.0
    %1531 = vmatpush.msra.mxu0 0.0
    %1532 = vmatpush.msra.mxu0 0.0
    %1533 = vmatpush.msra.mxu0 %v1465
    %1534 = vmatpush.msra.mxu0 %v1409
    %1535 = vmatpush.msra.mxu0 %v1353
    %1536 = vmatpush.msra.mxu0 %v1297
    %1537 = vmatpush.msra.mxu0 %v1241
    %1538 = vmatpush.msra.mxu0 %v1227
    %1539 = vmatpush.msra.mxu0 %v1171
    %1540 = vmatpush.msra.mxu0 %v1115
    %1541 = vmatpush.msra.mxu0 %v1059
    %1542 = vmatmul.f32.gmra.mxu0 %v1484
    %v1543 = vpop.f32.mrf.mxu0
    %v1544 = vadd.f32 %v1480, %v1543
    %1545 = vdwg.mxu0
    %1546 = vmatpush.msra.mxu0 0.0
    %1547 = vmatpush.msra.mxu0 0.0
    %1548 = vmatpush.msra.mxu0 0.0
    %1549 = vmatpush.msra.mxu0 0.0
    %1550 = vmatpush.msra.mxu0 0.0
    %1551 = vmatpush.msra.mxu0 0.0
    %1552 = vmatpush.msra.mxu0 0.0
    %1553 = vmatpush.msra.mxu0 %v1466
    %1554 = vmatpush.msra.mxu0 %v1410
    %1555 = vmatpush.msra.mxu0 %v1354
    %1556 = vmatpush.msra.mxu0 %v1298
    %1557 = vmatpush.msra.mxu0 %v1242
    %1558 = vmatpush.msra.mxu0 %v1228
    %1559 = vmatpush.msra.mxu0 %v1172
    %1560 = vmatpush.msra.mxu0 %v1116
    %1561 = vmatpush.msra.mxu0 %v1060
    %1562 = vmatmul.f32.gmra.mxu0 %v1484
    %v1563 = vpop.f32.mrf.mxu0
    %v1564 = vadd.f32 %v1480, %v1563
    %1565 = vdwg.mxu0
    %1566 = vmatpush.msra.mxu0 0.0
    %1567 = vmatpush.msra.mxu0 0.0
    %1568 = vmatpush.msra.mxu0 0.0
    %1569 = vmatpush.msra.mxu0 0.0
    %1570 = vmatpush.msra.mxu0 0.0
    %1571 = vmatpush.msra.mxu0 0.0
    %1572 = vmatpush.msra.mxu0 0.0
    %1573 = vmatpush.msra.mxu0 %v1467
    %1574 = vmatpush.msra.mxu0 %v1411
    %1575 = vmatpush.msra.mxu0 %v1355
    %1576 = vmatpush.msra.mxu0 %v1299
    %1577 = vmatpush.msra.mxu0 %v1243
    %1578 = vmatpush.msra.mxu0 %v1229
    %1579 = vmatpush.msra.mxu0 %v1173
    %1580 = vmatpush.msra.mxu0 %v1117
    %1581 = vmatpush.msra.mxu0 %v1061
    %1582 = vmatmul.f32.gmra.mxu0 %v1484
    %v1583 = vpop.f32.mrf.mxu0
    %v1584 = vadd.f32 %v1480, %v1583
    %1585 = vdwg.mxu0
    %1586 = vmatpush.msra.mxu0 0.0
    %1587 = vmatpush.msra.mxu0 0.0
    %1588 = vmatpush.msra.mxu0 0.0
    %1589 = vmatpush.msra.mxu0 0.0
    %1590 = vmatpush.msra.mxu0 0.0
    %1591 = vmatpush.msra.mxu0 0.0
    %1592 = vmatpush.msra.mxu0 0.0
    %1593 = vmatpush.msra.mxu0 %v1468
    %1594 = vmatpush.msra.mxu0 %v1412
    %1595 = vmatpush.msra.mxu0 %v1356
    %1596 = vmatpush.msra.mxu0 %v1300
    %1597 = vmatpush.msra.mxu0 %v1244
    %1598 = vmatpush.msra.mxu0 %v1230
    %1599 = vmatpush.msra.mxu0 %v1174
    %1600 = vmatpush.msra.mxu0 %v1118
    %1601 = vmatpush.msra.mxu0 %v1062
    %1602 = vmatmul.f32.gmra.mxu0 %v1484
    %v1603 = vpop.f32.mrf.mxu0
    %v1604 = vadd.f32 %v1480, %v1603
    %1605 = vdwg.mxu0
    %1606 = vmatpush.msra.mxu0 0.0
    %1607 = vmatpush.msra.mxu0 0.0
    %1608 = vmatpush.msra.mxu0 0.0
    %1609 = vmatpush.msra.mxu0 0.0
    %1610 = vmatpush.msra.mxu0 0.0
    %1611 = vmatpush.msra.mxu0 0.0
    %1612 = vmatpush.msra.mxu0 0.0
    %1613 = vmatpush.msra.mxu0 %v1469
    %1614 = vmatpush.msra.mxu0 %v1413
    %1615 = vmatpush.msra.mxu0 %v1357
    %1616 = vmatpush.msra.mxu0 %v1301
    %1617 = vmatpush.msra.mxu0 %v1245
    %1618 = vmatpush.msra.mxu0 %v1231
    %1619 = vmatpush.msra.mxu0 %v1175
    %1620 = vmatpush.msra.mxu0 %v1119
    %1621 = vmatpush.msra.mxu0 %v1063
    %1622 = vmatmul.f32.gmra.mxu0 %v1484
    %v1623 = vpop.f32.mrf.mxu0
    %v1624 = vadd.f32 %v1480, %v1623
    %1625 = vdwg.mxu0
    %v1626 = vmax.f32 %v1504, 0.0
    %v1627 = vmax.f32 %v1524, 0.0
    %v1628 = vmax.f32 %v1544, 0.0
    %v1629 = vmax.f32 %v1564, 0.0
    %v1630 = vmax.f32 %v1584, 0.0
    %v1631 = vmax.f32 %v1604, 0.0
    %v1632 = vmax.f32 %v1624, 0.0
    %1633 = vmatpush.msra.mxu0 0.0
    %1634 = vmatpush.msra.mxu0 0.0
    %1635 = vmatpush.msra.mxu0 0.0
    %1636 = vmatpush.msra.mxu0 0.0
    %1637 = vmatpush.msra.mxu0 0.0
    %1638 = vmatpush.msra.mxu0 0.0
    %1639 = vmatpush.msra.mxu0 0.0
    %1640 = vmatpush.msra.mxu0 %v1470
    %1641 = vmatpush.msra.mxu0 %v1414
    %1642 = vmatpush.msra.mxu0 %v1358
    %1643 = vmatpush.msra.mxu0 %v1302
    %1644 = vmatpush.msra.mxu0 %v1246
    %1645 = vmatpush.msra.mxu0 %v1232
    %1646 = vmatpush.msra.mxu0 %v1176
    %1647 = vmatpush.msra.mxu0 %v1120
    %1648 = vmatpush.msra.mxu0 %v1064
    %1649 = vmatmul.f32.gmra.mxu0 %v1484
    %v1650 = vpop.f32.mrf.mxu0
    %v1651 = vadd.f32 %v1480, %v1650
    %1652 = vdwg.mxu0
    %1653 = vmatpush.msra.mxu0 0.0
    %1654 = vmatpush.msra.mxu0 0.0
    %1655 = vmatpush.msra.mxu0 0.0
    %1656 = vmatpush.msra.mxu0 0.0
    %1657 = vmatpush.msra.mxu0 0.0
    %1658 = vmatpush.msra.mxu0 0.0
    %1659 = vmatpush.msra.mxu0 0.0
    %1660 = vmatpush.msra.mxu0 %v1471
    %1661 = vmatpush.msra.mxu0 %v1415
    %1662 = vmatpush.msra.mxu0 %v1359
    %1663 = vmatpush.msra.mxu0 %v1303
    %1664 = vmatpush.msra.mxu0 %v1247
    %1665 = vmatpush.msra.mxu0 %v1233
    %1666 = vmatpush.msra.mxu0 %v1177
    %1667 = vmatpush.msra.mxu0 %v1121
    %1668 = vmatpush.msra.mxu0 %v1065
    %1669 = vmatmul.f32.gmra.mxu0 %v1484
    %v1670 = vpop.f32.mrf.mxu0
    %v1671 = vadd.f32 %v1480, %v1670
    %1672 = vdwg.mxu0
    %1673 = vmatpush.msra.mxu0 0.0
    %1674 = vmatpush.msra.mxu0 0.0
    %1675 = vmatpush.msra.mxu0 0.0
    %1676 = vmatpush.msra.mxu0 0.0
    %1677 = vmatpush.msra.mxu0 0.0
    %1678 = vmatpush.msra.mxu0 0.0
    %1679 = vmatpush.msra.mxu0 0.0
    %1680 = vmatpush.msra.mxu0 %v1472
    %1681 = vmatpush.msra.mxu0 %v1416
    %1682 = vmatpush.msra.mxu0 %v1360
    %1683 = vmatpush.msra.mxu0 %v1304
    %1684 = vmatpush.msra.mxu0 %v1248
    %1685 = vmatpush.msra.mxu0 %v1234
    %1686 = vmatpush.msra.mxu0 %v1178
    %1687 = vmatpush.msra.mxu0 %v1122
    %1688 = vmatpush.msra.mxu0 %v1066
    %1689 = vmatmul.f32.gmra.mxu0 %v1484
    %v1690 = vpop.f32.mrf.mxu0
    %v1691 = vadd.f32 %v1480, %v1690
    %1692 = vdwg.mxu0
    %1693 = vmatpush.msra.mxu0 0.0
    %1694 = vmatpush.msra.mxu0 0.0
    %1695 = vmatpush.msra.mxu0 0.0
    %1696 = vmatpush.msra.mxu0 0.0
    %1697 = vmatpush.msra.mxu0 0.0
    %1698 = vmatpush.msra.mxu0 0.0
    %1699 = vmatpush.msra.mxu0 0.0
    %1700 = vmatpush.msra.mxu0 %v1473
    %1701 = vmatpush.msra.mxu0 %v1417
    %1702 = vmatpush.msra.mxu0 %v1361
    %1703 = vmatpush.msra.mxu0 %v1305
    %1704 = vmatpush.msra.mxu0 %v1249
    %1705 = vmatpush.msra.mxu0 %v1235
    %1706 = vmatpush.msra.mxu0 %v1179
    %1707 = vmatpush.msra.mxu0 %v1123
    %1708 = vmatpush.msra.mxu0 %v1067
    %1709 = vmatmul.f32.gmra.mxu0 %v1484
    %v1710 = vpop.f32.mrf.mxu0
    %v1711 = vadd.f32 %v1480, %v1710
    %1712 = vdwg.mxu0
    %1713 = vmatpush.msra.mxu0 0.0
    %1714 = vmatpush.msra.mxu0 0.0
    %1715 = vmatpush.msra.mxu0 0.0
    %1716 = vmatpush.msra.mxu0 0.0
    %1717 = vmatpush.msra.mxu0 0.0
    %1718 = vmatpush.msra.mxu0 0.0
    %1719 = vmatpush.msra.mxu0 0.0
    %1720 = vmatpush.msra.mxu0 %v1474
    %1721 = vmatpush.msra.mxu0 %v1418
    %1722 = vmatpush.msra.mxu0 %v1362
    %1723 = vmatpush.msra.mxu0 %v1306
    %1724 = vmatpush.msra.mxu0 %v1250
    %1725 = vmatpush.msra.mxu0 %v1236
    %1726 = vmatpush.msra.mxu0 %v1180
    %1727 = vmatpush.msra.mxu0 %v1124
    %1728 = vmatpush.msra.mxu0 %v1068
    %1729 = vmatmul.f32.gmra.mxu0 %v1484
    %v1730 = vpop.f32.mrf.mxu0
    %v1731 = vadd.f32 %v1480, %v1730
    %1732 = vdwg.mxu0
    %1733 = vmatpush.msra.mxu0 0.0
    %1734 = vmatpush.msra.mxu0 0.0
    %1735 = vmatpush.msra.mxu0 0.0
    %1736 = vmatpush.msra.mxu0 0.0
    %1737 = vmatpush.msra.mxu0 0.0
    %1738 = vmatpush.msra.mxu0 0.0
    %1739 = vmatpush.msra.mxu0 0.0
    %1740 = vmatpush.msra.mxu0 %v1475
    %1741 = vmatpush.msra.mxu0 %v1419
    %1742 = vmatpush.msra.mxu0 %v1363
    %1743 = vmatpush.msra.mxu0 %v1307
    %1744 = vmatpush.msra.mxu0 %v1251
    %1745 = vmatpush.msra.mxu0 %v1237
    %1746 = vmatpush.msra.mxu0 %v1181
    %1747 = vmatpush.msra.mxu0 %v1125
    %1748 = vmatpush.msra.mxu0 %v1069
    %1749 = vmatmul.f32.gmra.mxu0 %v1484
    %v1750 = vpop.f32.mrf.mxu0
    %v1751 = vadd.f32 %v1480, %v1750
    %1752 = vdwg.mxu0
    %1753 = vmatpush.msra.mxu0 0.0
    %1754 = vmatpush.msra.mxu0 0.0
    %1755 = vmatpush.msra.mxu0 0.0
    %1756 = vmatpush.msra.mxu0 0.0
    %1757 = vmatpush.msra.mxu0 0.0
    %1758 = vmatpush.msra.mxu0 0.0
    %1759 = vmatpush.msra.mxu0 0.0
    %1760 = vmatpush.msra.mxu0 %v1476
    %1761 = vmatpush.msra.mxu0 %v1420
    %1762 = vmatpush.msra.mxu0 %v1364
    %1763 = vmatpush.msra.mxu0 %v1308
    %1764 = vmatpush.msra.mxu0 %v1252
    %1765 = vmatpush.msra.mxu0 %v1238
    %1766 = vmatpush.msra.mxu0 %v1182
    %1767 = vmatpush.msra.mxu0 %v1126
    %1768 = vmatpush.msra.mxu0 %v1070
    %1769 = vmatmul.f32.gmra.mxu0 %v1484
    %v1770 = vpop.f32.mrf.mxu0
    %v1771 = vadd.f32 %v1480, %v1770
    %1772 = vdwg.mxu0
    %v1773 = vmax.f32 %v1651, 0.0
    %v1774 = vmax.f32 %v1671, 0.0
    %v1775 = vmax.f32 %v1691, 0.0
    %v1776 = vmax.f32 %v1711, 0.0
    %v1777 = vmax.f32 %v1731, 0.0
    %v1778 = vmax.f32 %v1751, 0.0
    %v1779 = vmax.f32 %v1771, 0.0
    %v1780 = vld [vmem:[#allocation2] sm:$0xff]
    %v1781 = vld [vmem:[#allocation2 + $0x8] sm:$0xff]
    %v1782 = vld [vmem:[#allocation2 + $0x10] sm:$0xff]
    %v1783 = vld [vmem:[#allocation2 + $0x18] sm:$0xff]
    %v1784 = vld [vmem:[#allocation2 + $0x20] sm:$0xff]
    %v1785 = vld [vmem:[#allocation2 + $0x28] sm:$0xff]
    %v1786 = vld [vmem:[#allocation2 + $0x30] sm:$0xff]
    %v1787 = vld [vmem:[#allocation2 + $0x38] sm:$0xff]
    %v1788 = vld [vmem:[#allocation2 + $0x40] sm:$0xff]
    %v1789 = vld [vmem:[#allocation2 + $0x48] sm:$0xff]
    %v1790 = vld [vmem:[#allocation2 + $0x50] sm:$0xff]
    %v1791 = vld [vmem:[#allocation2 + $0x58] sm:$0xff]
    %v1792 = vld [vmem:[#allocation2 + $0x60] sm:$0xff]
    %v1793 = vld [vmem:[#allocation2 + $0x68] sm:$0xff]
    %v1794 = vld [vmem:[#allocation2 + $0x70] sm:$0xff]
    %v1795 = vld [vmem:[#allocation2 + $0x78] sm:$0xff]
    %v1796 = vld [vmem:[#allocation2 + $0x80] sm:$0xff]
    %v1797 = vld [vmem:[#allocation2 + $0x88] sm:$0xff]
    %v1798 = vld [vmem:[#allocation2 + $0x90] sm:$0xff]
    %v1799 = vld [vmem:[#allocation2 + $0x98] sm:$0xff]
    %v1800 = vld [vmem:[#allocation2 + $0xa0] sm:$0xff]
    %v1801 = vld [vmem:[#allocation2 + $0xa8] sm:$0xff]
    %v1802 = vld [vmem:[#allocation2 + $0xb0] sm:$0xff]
    %v1803 = vld [vmem:[#allocation2 + $0xb8] sm:$0xff]
    %v1804 = vld [vmem:[#allocation2 + $0xc0] sm:$0xff]
    %v1805 = vld [vmem:[#allocation2 + $0xc8] sm:$0xff]
    %v1806 = vld [vmem:[#allocation2 + $0xd0] sm:$0xff]
    %v1807 = vld [vmem:[#allocation2 + $0xd8] sm:$0xff]
    %v1808 = vld [vmem:[#allocation2 + $0xe0] sm:$0xff]
    %v1809 = vld [vmem:[#allocation2 + $0xe8] sm:$0xff]
    %v1810 = vld [vmem:[#allocation2 + $0xf0] sm:$0xff]
    %v1811 = vld [vmem:[#allocation2 + $0xf8] sm:$0xff]
    %v1812 = vld [vmem:[#allocation2 + $0x100] sm:$0xff]
    %v1813 = vld [vmem:[#allocation2 + $0x108] sm:$0xff]
    %v1814 = vld [vmem:[#allocation2 + $0x110] sm:$0xff]
    %v1815 = vld [vmem:[#allocation2 + $0x118] sm:$0xff]
    %v1816 = vld [vmem:[#allocation2 + $0x120] sm:$0xff]
    %v1817 = vld [vmem:[#allocation2 + $0x128] sm:$0xff]
    %v1818 = vld [vmem:[#allocation2 + $0x130] sm:$0xff]
    %v1819 = vld [vmem:[#allocation2 + $0x138] sm:$0xff]
    %v1820 = vld [vmem:[#allocation2 + $0x140] sm:$0xff]
    %v1821 = vld [vmem:[#allocation2 + $0x148] sm:$0xff]
    %v1822 = vld [vmem:[#allocation2 + $0x150] sm:$0xff]
    %v1823 = vld [vmem:[#allocation2 + $0x158] sm:$0xff]
    %v1824 = vld [vmem:[#allocation2 + $0x160] sm:$0xff]
    %v1825 = vld [vmem:[#allocation2 + $0x168] sm:$0xff]
    %v1826 = vld [vmem:[#allocation2 + $0x170] sm:$0xff]
    %v1827 = vld [vmem:[#allocation2 + $0x178] sm:$0xff]
    %v1828 = vld [vmem:[#allocation2 + $0x180] sm:$0xff]
    %v1829 = vld [vmem:[#allocation2 + $0x188] sm:$0xff]
    %v1830 = vld [vmem:[#allocation2 + $0x190] sm:$0xff]
    %v1831 = vld [vmem:[#allocation2 + $0x198] sm:$0xff]
    %v1832 = vld [vmem:[#allocation2 + $0x1a0] sm:$0xff]
    %v1833 = vld [vmem:[#allocation2 + $0x1a8] sm:$0xff]
    %v1834 = vld [vmem:[#allocation2 + $0x1b0] sm:$0xff]
    %v1835 = vld [vmem:[#allocation2 + $0x1b8] sm:$0xff]
    %v1836 = vld [vmem:[#allocation2 + $0x1c0] sm:$0xff]
    %v1837 = vld [vmem:[#allocation2 + $0x1c8] sm:$0xff]
    %v1838 = vld [vmem:[#allocation2 + $0x1d0] sm:$0xff]
    %v1839 = vld [vmem:[#allocation2 + $0x1d8] sm:$0xff]
    %v1840 = vld [vmem:[#allocation2 + $0x1e0] sm:$0xff]
    %v1841 = vld [vmem:[#allocation2 + $0x1e8] sm:$0xff]
    %v1842 = vld [vmem:[#allocation2 + $0x1f0] sm:$0xff]
    %v1843 = vld [vmem:[#allocation2 + $0x1f8] sm:$0xff]
    %v1844 = vld [vmem:[#allocation2 + $0x200] sm:$0xff]
    %v1845 = vld [vmem:[#allocation2 + $0x208] sm:$0xff]
    %v1846 = vld [vmem:[#allocation2 + $0x210] sm:$0xff]
    %v1847 = vld [vmem:[#allocation2 + $0x218] sm:$0xff]
    %v1848 = vld [vmem:[#allocation2 + $0x220] sm:$0xff]
    %v1849 = vld [vmem:[#allocation2 + $0x228] sm:$0xff]
    %v1850 = vld [vmem:[#allocation2 + $0x230] sm:$0xff]
    %v1851 = vld [vmem:[#allocation2 + $0x238] sm:$0xff]
    %v1852 = vld [vmem:[#allocation2 + $0x240] sm:$0xff]
    %v1853 = vld [vmem:[#allocation2 + $0x248] sm:$0xff]
    %v1854 = vld [vmem:[#allocation2 + $0x250] sm:$0xff]
    %v1855 = vld [vmem:[#allocation2 + $0x258] sm:$0xff]
    %v1856 = vld [vmem:[#allocation2 + $0x260] sm:$0xff]
    %v1857 = vld [vmem:[#allocation2 + $0x268] sm:$0xff]
    %v1858 = vld [vmem:[#allocation2 + $0x270] sm:$0xff]
    %v1859 = vld [vmem:[#allocation2 + $0x278] sm:$0xff]
    %v1860 = vld [vmem:[#allocation2 + $0x280] sm:$0xff]
    %v1861 = vld [vmem:[#allocation2 + $0x288] sm:$0xff]
    %v1862 = vld [vmem:[#allocation2 + $0x290] sm:$0xff]
    %v1863 = vld [vmem:[#allocation2 + $0x298] sm:$0xff]
    %v1864 = vld [vmem:[#allocation2 + $0x2a0] sm:$0xff]
    %v1865 = vld [vmem:[#allocation2 + $0x2a8] sm:$0xff]
    %v1866 = vld [vmem:[#allocation2 + $0x2b0] sm:$0xff]
    %v1867 = vld [vmem:[#allocation2 + $0x2b8] sm:$0xff]
    %v1868 = vld [vmem:[#allocation2 + $0x2c0] sm:$0xff]
    %v1869 = vld [vmem:[#allocation2 + $0x2c8] sm:$0xff]
    %v1870 = vld [vmem:[#allocation2 + $0x2d0] sm:$0xff]
    %v1871 = vld [vmem:[#allocation2 + $0x2d8] sm:$0xff]
    %v1872 = vld [vmem:[#allocation2 + $0x2e0] sm:$0xff]
    %v1873 = vld [vmem:[#allocation2 + $0x2e8] sm:$0xff]
    %v1874 = vld [vmem:[#allocation2 + $0x2f0] sm:$0xff]
    %v1875 = vld [vmem:[#allocation2 + $0x2f8] sm:$0xff]
    %v1876 = vld [vmem:[#allocation2 + $0x300] sm:$0xff]
    %v1877 = vld [vmem:[#allocation2 + $0x308] sm:$0xff]
    %v1878 = vld [vmem:[#allocation2 + $0x310] sm:$0xff]
    %v1879 = vld [vmem:[#allocation2 + $0x318] sm:$0xff]
    %v1880 = vld [vmem:[#allocation2 + $0x320] sm:$0xff]
    %v1881 = vld [vmem:[#allocation2 + $0x328] sm:$0xff]
    %v1882 = vld [vmem:[#allocation2 + $0x330] sm:$0xff]
    %v1883 = vld [vmem:[#allocation2 + $0x338] sm:$0xff]
    %v1884 = vld [vmem:[#allocation2 + $0x340] sm:$0xff]
    %v1885 = vld [vmem:[#allocation2 + $0x348] sm:$0xff]
    %v1886 = vld [vmem:[#allocation2 + $0x350] sm:$0xff]
    %v1887 = vld [vmem:[#allocation2 + $0x358] sm:$0xff]
    %v1888 = vld [vmem:[#allocation2 + $0x360] sm:$0xff]
    %v1889 = vld [vmem:[#allocation2 + $0x368] sm:$0xff]
    %v1890 = vld [vmem:[#allocation2 + $0x370] sm:$0xff]
    %v1891 = vld [vmem:[#allocation2 + $0x378] sm:$0xff]
    %v1892 = vld [vmem:[#allocation2 + $0x380] sm:$0xff]
    %v1893 = vld [vmem:[#allocation2 + $0x388] sm:$0xff]
    %v1894 = vld [vmem:[#allocation2 + $0x390] sm:$0xff]
    %v1895 = vld [vmem:[#allocation2 + $0x398] sm:$0xff]
    %v1896 = vld [vmem:[#allocation2 + $0x3a0] sm:$0xff]
    %v1897 = vld [vmem:[#allocation2 + $0x3a8] sm:$0xff]
    %v1898 = vld [vmem:[#allocation2 + $0x3b0] sm:$0xff]
    %v1899 = vld [vmem:[#allocation2 + $0x3b8] sm:$0xff]
    %v1900 = vld [vmem:[#allocation2 + $0x3c0] sm:$0xff]
    %v1901 = vld [vmem:[#allocation2 + $0x3c8] sm:$0xff]
    %v1902 = vld [vmem:[#allocation2 + $0x3d0] sm:$0xff]
    %v1903 = vld [vmem:[#allocation2 + $0x3d8] sm:$0xff]
    %v1904 = vld [vmem:[#allocation2 + $0x3e0] sm:$0xff]
    %v1905 = vld [vmem:[#allocation2 + $0x3e8] sm:$0xff]
    %v1906 = vld [vmem:[#allocation2 + $0x3f0] sm:$0xff]
    %v1907 = vld [vmem:[#allocation2 + $0x3f8] sm:$0xff]
    %v1908 = vld [vmem:[#allocation2 + $0x400] sm:$0xff]
    %v1909 = vld [vmem:[#allocation2 + $0x408] sm:$0xff]
    %v1910 = vld [vmem:[#allocation2 + $0x410] sm:$0xff]
    %v1911 = vld [vmem:[#allocation2 + $0x418] sm:$0xff]
    %v1912 = vld [vmem:[#allocation2 + $0x420] sm:$0xff]
    %v1913 = vld [vmem:[#allocation2 + $0x428] sm:$0xff]
    %v1914 = vld [vmem:[#allocation2 + $0x430] sm:$0xff]
    %v1915 = vld [vmem:[#allocation2 + $0x438] sm:$0xff]
    %v1916 = vld [vmem:[#allocation2 + $0x440] sm:$0xff]
    %v1917 = vld [vmem:[#allocation2 + $0x448] sm:$0xff]
    %v1918 = vld [vmem:[#allocation2 + $0x450] sm:$0xff]
    %v1919 = vld [vmem:[#allocation2 + $0x458] sm:$0xff]
    %v1920 = vld [vmem:[#allocation2 + $0x460] sm:$0xff]
    %v1921 = vld [vmem:[#allocation2 + $0x468] sm:$0xff]
    %v1922 = vld [vmem:[#allocation2 + $0x470] sm:$0xff]
    %v1923 = vld [vmem:[#allocation2 + $0x478] sm:$0xff]
    %v1924 = vld [vmem:[#allocation2 + $0x480] sm:$0xff]
    %v1925 = vld [vmem:[#allocation2 + $0x488] sm:$0xff]
    %v1926 = vld [vmem:[#allocation2 + $0x490] sm:$0xff]
    %v1927 = vld [vmem:[#allocation2 + $0x498] sm:$0xff]
    %v1928 = vld [vmem:[#allocation2 + $0x4a0] sm:$0xff]
    %v1929 = vld [vmem:[#allocation2 + $0x4a8] sm:$0xff]
    %v1930 = vld [vmem:[#allocation2 + $0x4b0] sm:$0xff]
    %v1931 = vld [vmem:[#allocation2 + $0x4b8] sm:$0xff]
    %v1932 = vld [vmem:[#allocation2 + $0x4c0] sm:$0xff]
    %v1933 = vld [vmem:[#allocation2 + $0x4c8] sm:$0xff]
    %v1934 = vld [vmem:[#allocation2 + $0x4d0] sm:$0xff]
    %v1935 = vld [vmem:[#allocation2 + $0x4d8] sm:$0xff]
    %v1936 = vld [vmem:[#allocation2 + $0x4e0] sm:$0xff]
    %v1937 = vld [vmem:[#allocation2 + $0x4e8] sm:$0xff]
    %v1938 = vld [vmem:[#allocation2 + $0x4f0] sm:$0xff]
    %v1939 = vld [vmem:[#allocation2 + $0x4f8] sm:$0xff]
    %v1940 = vld [vmem:[#allocation2 + $0x500] sm:$0xff]
    %v1941 = vld [vmem:[#allocation2 + $0x508] sm:$0xff]
    %v1942 = vld [vmem:[#allocation2 + $0x510] sm:$0xff]
    %v1943 = vld [vmem:[#allocation2 + $0x518] sm:$0xff]
    %v1944 = vld [vmem:[#allocation2 + $0x520] sm:$0xff]
    %v1945 = vld [vmem:[#allocation2 + $0x528] sm:$0xff]
    %v1946 = vld [vmem:[#allocation2 + $0x530] sm:$0xff]
    %v1947 = vld [vmem:[#allocation2 + $0x538] sm:$0xff]
    %v1948 = vld [vmem:[#allocation2 + $0x540] sm:$0xff]
    %v1949 = vld [vmem:[#allocation2 + $0x548] sm:$0xff]
    %v1950 = vld [vmem:[#allocation2 + $0x550] sm:$0xff]
    %v1951 = vld [vmem:[#allocation2 + $0x558] sm:$0xff]
    %v1952 = vld [vmem:[#allocation2 + $0x560] sm:$0xff]
    %v1953 = vld [vmem:[#allocation2 + $0x568] sm:$0xff]
    %v1954 = vld [vmem:[#allocation2 + $0x570] sm:$0xff]
    %v1955 = vld [vmem:[#allocation2 + $0x578] sm:$0xff]
    %v1956 = vld [vmem:[#allocation2 + $0x580] sm:$0xff]
    %v1957 = vld [vmem:[#allocation2 + $0x588] sm:$0xff]
    %v1958 = vld [vmem:[#allocation2 + $0x590] sm:$0xff]
    %v1959 = vld [vmem:[#allocation2 + $0x598] sm:$0xff]
    %v1960 = vld [vmem:[#allocation2 + $0x5a0] sm:$0xff]
    %v1961 = vld [vmem:[#allocation2 + $0x5a8] sm:$0xff]
    %v1962 = vld [vmem:[#allocation2 + $0x5b0] sm:$0xff]
    %v1963 = vld [vmem:[#allocation2 + $0x5b8] sm:$0xff]
    %v1964 = vld [vmem:[#allocation2 + $0x5c0] sm:$0xff]
    %v1965 = vld [vmem:[#allocation2 + $0x5c8] sm:$0xff]
    %v1966 = vld [vmem:[#allocation2 + $0x5d0] sm:$0xff]
    %v1967 = vld [vmem:[#allocation2 + $0x5d8] sm:$0xff]
    %v1968 = vld [vmem:[#allocation2 + $0x5e0] sm:$0xff]
    %v1969 = vld [vmem:[#allocation2 + $0x5e8] sm:$0xff]
    %v1970 = vld [vmem:[#allocation2 + $0x5f0] sm:$0xff]
    %v1971 = vld [vmem:[#allocation2 + $0x5f8] sm:$0xff]
    %v1972 = vld [vmem:[#allocation2 + $0x600] sm:$0xff]
    %v1973 = vld [vmem:[#allocation2 + $0x608] sm:$0xff]
    %v1974 = vld [vmem:[#allocation2 + $0x610] sm:$0xff]
    %v1975 = vld [vmem:[#allocation2 + $0x618] sm:$0xff]
    %v1976 = vld [vmem:[#allocation2 + $0x620] sm:$0xff]
    %v1977 = vld [vmem:[#allocation2 + $0x628] sm:$0xff]
    %v1978 = vld [vmem:[#allocation2 + $0x630] sm:$0xff]
    %v1979 = vld [vmem:[#allocation2 + $0x638] sm:$0xff]
    %v1980 = vld [vmem:[#allocation2 + $0x640] sm:$0xff]
    %v1981 = vld [vmem:[#allocation2 + $0x648] sm:$0xff]
    %v1982 = vld [vmem:[#allocation2 + $0x650] sm:$0xff]
    %v1983 = vld [vmem:[#allocation2 + $0x658] sm:$0xff]
    %v1984 = vld [vmem:[#allocation2 + $0x660] sm:$0xff]
    %v1985 = vld [vmem:[#allocation2 + $0x668] sm:$0xff]
    %v1986 = vld [vmem:[#allocation2 + $0x670] sm:$0xff]
    %v1987 = vld [vmem:[#allocation2 + $0x678] sm:$0xff]
    %v1988 = vld [vmem:[#allocation2 + $0x680] sm:$0xff]
    %v1989 = vld [vmem:[#allocation2 + $0x688] sm:$0xff]
    %v1990 = vld [vmem:[#allocation2 + $0x690] sm:$0xff]
    %v1991 = vld [vmem:[#allocation2 + $0x698] sm:$0xff]
    %v1992 = vld [vmem:[#allocation2 + $0x6a0] sm:$0xff]
    %v1993 = vld [vmem:[#allocation2 + $0x6a8] sm:$0xff]
    %v1994 = vld [vmem:[#allocation2 + $0x6b0] sm:$0xff]
    %v1995 = vld [vmem:[#allocation2 + $0x6b8] sm:$0xff]
    %v1996 = vld [vmem:[#allocation2 + $0x6c0] sm:$0xff]
    %v1997 = vld [vmem:[#allocation2 + $0x6c8] sm:$0xff]
    %v1998 = vld [vmem:[#allocation2 + $0x6d0] sm:$0xff]
    %v1999 = vld [vmem:[#allocation2 + $0x6d8] sm:$0xff]
    %v2000 = vld [vmem:[#allocation2 + $0x6e0] sm:$0xff]
    %v2001 = vld [vmem:[#allocation2 + $0x6e8] sm:$0xff]
    %v2002 = vld [vmem:[#allocation2 + $0x6f0] sm:$0xff]
    %v2003 = vld [vmem:[#allocation2 + $0x6f8] sm:$0xff]
    %2004 = vrot.lane.b32.xlu0 %v1626, 127
    %v2005 = vpop.permute.xlu0 %2004
    %2006 = vrot.lane.b32.xlu0 %v1773, 127
    %v2007 = vpop.permute.xlu0 %2006
    %2008 = vrot.lane.b32.xlu0 %v1627, 127
    %v2009 = vpop.permute.xlu0 %2008
    %2010 = vrot.lane.b32.xlu0 %v1774, 127
    %v2011 = vpop.permute.xlu0 %2010
    %2012 = vrot.lane.b32.xlu0 %v1628, 127
    %v2013 = vpop.permute.xlu0 %2012
    %2014 = vrot.lane.b32.xlu0 %v1775, 127
    %v2015 = vpop.permute.xlu0 %2014
    %2016 = vrot.lane.b32.xlu0 %v1629, 127
    %v2017 = vpop.permute.xlu0 %2016
    %2018 = vrot.lane.b32.xlu0 %v1776, 127
    %v2019 = vpop.permute.xlu0 %2018
    %2020 = vrot.lane.b32.xlu0 %v1630, 127
    %v2021 = vpop.permute.xlu0 %2020
    %2022 = vrot.lane.b32.xlu0 %v1777, 127
    %v2023 = vpop.permute.xlu0 %2022
    %2024 = vrot.lane.b32.xlu0 %v1631, 127
    %v2025 = vpop.permute.xlu0 %2024
    %2026 = vrot.lane.b32.xlu0 %v1778, 127
    %v2027 = vpop.permute.xlu0 %2026
    %2028 = vrot.lane.b32.xlu0 %v1632, 127
    %v2029 = vpop.permute.xlu0 %2028
    %2030 = vrot.lane.b32.xlu0 %v1779, 127
    %v2031 = vpop.permute.xlu0 %2030
    %v2032 = vsel %vm367, %v2025, %v2029
    %v2033 = vsel %vm367, %v2027, %v2031
    %v2034 = vsel %vm367, %v2021, %v2025
    %v2035 = vsel %vm367, %v2023, %v2027
    %v2036 = vsel %vm367, %v2017, %v2021
    %v2037 = vsel %vm367, %v2019, %v2023
    %v2038 = vsel %vm367, %v2013, %v2017
    %v2039 = vsel %vm367, %v2015, %v2019
    %v2040 = vsel %vm367, %v2009, %v2013
    %v2041 = vsel %vm367, %v2011, %v2015
    %v2042 = vsel %vm367, %v2005, %v2009
    %v2043 = vsel %vm367, %v2007, %v2011
    %v2044 = vsel %vm367, %v2029, %v2005
    %v2045 = vsel %vm367, %v2031, %v2007
    %v2046 = vmax.f32 %v1626, %v2042
    %v2047 = vmax.f32 %v1627, %v2040
    %v2048 = vmax.f32 %v1628, %v2038
    %v2049 = vmax.f32 %v1629, %v2036
    %v2050 = vmax.f32 %v1630, %v2034
    %v2051 = vmax.f32 %v1631, %v2032
    %v2052 = vmax.f32 %v1632, %v2044
    %v2053 = vmax.f32 %v1773, %v2043
    %v2054 = vmax.f32 %v1774, %v2041
    %v2055 = vmax.f32 %v1775, %v2039
    %v2056 = vmax.f32 %v1776, %v2037
    %v2057 = vmax.f32 %v1777, %v2035
    %v2058 = vmax.f32 %v1778, %v2033
    %v2059 = vmax.f32 %v1779, %v2045
    %2060 = vrot.lane.b32.xlu0 %v2046, 100
    %v2061 = vpop.permute.xlu0 %2060
    %2062 = vrot.lane.b32.xlu0 %v2053, 100
    %v2063 = vpop.permute.xlu0 %2062
    %2064 = vrot.lane.b32.xlu0 %v2047, 100
    %v2065 = vpop.permute.xlu0 %2064
    %2066 = vrot.lane.b32.xlu0 %v2054, 100
    %v2067 = vpop.permute.xlu0 %2066
    %2068 = vrot.lane.b32.xlu0 %v2048, 100
    %v2069 = vpop.permute.xlu0 %2068
    %2070 = vrot.lane.b32.xlu0 %v2055, 100
    %v2071 = vpop.permute.xlu0 %2070
    %2072 = vrot.lane.b32.xlu0 %v2049, 100
    %v2073 = vpop.permute.xlu0 %2072
    %2074 = vrot.lane.b32.xlu0 %v2056, 100
    %v2075 = vpop.permute.xlu0 %2074
    %2076 = vrot.lane.b32.xlu0 %v2050, 100
    %v2077 = vpop.permute.xlu0 %2076
    %2078 = vrot.lane.b32.xlu0 %v2057, 100
    %v2079 = vpop.permute.xlu0 %2078
    %2080 = vrot.lane.b32.xlu0 %v2051, 100
    %v2081 = vpop.permute.xlu0 %2080
    %2082 = vrot.lane.b32.xlu0 %v2058, 100
    %v2083 = vpop.permute.xlu0 %2082
    %2084 = vrot.lane.b32.xlu0 %v2052, 100
    %v2085 = vpop.permute.xlu0 %2084
    %2086 = vrot.lane.b32.xlu0 %v2059, 100
    %v2087 = vpop.permute.xlu0 %2086
    %v2088 = vsel %vm473, %v2081, %v2085
    %v2089 = vsel %vm473, %v2083, %v2087
    %v2090 = vsel %vm473, %v2077, %v2081
    %v2091 = vsel %vm473, %v2079, %v2083
    %v2092 = vsel %vm473, %v2073, %v2077
    %v2093 = vsel %vm473, %v2075, %v2079
    %v2094 = vsel %vm473, %v2069, %v2073
    %v2095 = vsel %vm473, %v2071, %v2075
    %v2096 = vsel %vm473, %v2065, %v2069
    %v2097 = vsel %vm473, %v2067, %v2071
    %v2098 = vsel %vm473, %v2061, %v2065
    %v2099 = vsel %vm473, %v2063, %v2067
    %v2100 = vsel %vm473, %v2085, %v2061
    %v2101 = vsel %vm473, %v2087, %v2063
    %v2102 = vmax.f32 %v2046, %v2098
    %v2103 = vmax.f32 %v2047, %v2096
    %v2104 = vmax.f32 %v2048, %v2094
    %v2105 = vmax.f32 %v2049, %v2092
    %v2106 = vmax.f32 %v2050, %v2090
    %v2107 = vmax.f32 %v2051, %v2088
    %v2108 = vmax.f32 %v2052, %v2100
    %v2109 = vmax.f32 %v2053, %v2099
    %v2110 = vmax.f32 %v2054, %v2097
    %v2111 = vmax.f32 %v2055, %v2095
    %v2112 = vmax.f32 %v2056, %v2093
    %v2113 = vmax.f32 %v2057, %v2091
    %v2114 = vmax.f32 %v2058, %v2089
    %v2115 = vmax.f32 %v2059, %v2101
    %2116 = vmatpush.msra.mxu0 %v1810
    %2117 = vmatpush.msra.mxu0 %v1808
    %2118 = vmatpush.msra.mxu0 %v1806
    %2119 = vmatpush.msra.mxu0 %v1804
    %2120 = vmatpush.msra.mxu0 %v1802
    %2121 = vmatpush.msra.mxu0 %v1800
    %2122 = vmatpush.msra.mxu0 %v1798
    %2123 = vmatpush.msra.mxu0 %v1796
    %2124 = vmatpush.msra.mxu0 %v1794
    %2125 = vmatpush.msra.mxu0 %v1792
    %2126 = vmatpush.msra.mxu0 %v1790
    %2127 = vmatpush.msra.mxu0 %v1788
    %2128 = vmatpush.msra.mxu0 %v1786
    %2129 = vmatpush.msra.mxu0 %v1784
    %2130 = vmatpush.msra.mxu0 %v1782
    %2131 = vmatpush.msra.mxu0 %v1780
    %2132 = vmatmul.f32.gmra.mxu0 %v2102
    %v2133 = vpop.f32.mrf.mxu0
    %v2134 = vadd.f32 0.0, %v2133
    %2135 = vmatmul.f32.gmra.mxu0 %v2109
    %v2136 = vpop.f32.mrf.mxu0
    %v2137 = vadd.f32 0.0, %v2136
    %2138 = vdwg.mxu0
    %2139 = vmatpush.msra.mxu0 %v1842
    %2140 = vmatpush.msra.mxu0 %v1840
    %2141 = vmatpush.msra.mxu0 %v1838
    %2142 = vmatpush.msra.mxu0 %v1836
    %2143 = vmatpush.msra.mxu0 %v1834
    %2144 = vmatpush.msra.mxu0 %v1832
    %2145 = vmatpush.msra.mxu0 %v1830
    %2146 = vmatpush.msra.mxu0 %v1828
    %2147 = vmatpush.msra.mxu0 %v1826
    %2148 = vmatpush.msra.mxu0 %v1824
    %2149 = vmatpush.msra.mxu0 %v1822
    %2150 = vmatpush.msra.mxu0 %v1820
    %2151 = vmatpush.msra.mxu0 %v1818
    %2152 = vmatpush.msra.mxu0 %v1816
    %2153 = vmatpush.msra.mxu0 %v1814
    %2154 = vmatpush.msra.mxu0 %v1812
    %2155 = vmatmul.f32.gmra.mxu0 %v2103
    %v2156 = vpop.f32.mrf.mxu0
    %v2157 = vadd.f32 %v2134, %v2156
    %2158 = vmatmul.f32.gmra.mxu0 %v2110
    %v2159 = vpop.f32.mrf.mxu0
    %v2160 = vadd.f32 %v2137, %v2159
    %2161 = vdwg.mxu0
    %2162 = vmatpush.msra.mxu0 %v1874
    %2163 = vmatpush.msra.mxu0 %v1872
    %2164 = vmatpush.msra.mxu0 %v1870
    %2165 = vmatpush.msra.mxu0 %v1868
    %2166 = vmatpush.msra.mxu0 %v1866
    %2167 = vmatpush.msra.mxu0 %v1864
    %2168 = vmatpush.msra.mxu0 %v1862
    %2169 = vmatpush.msra.mxu0 %v1860
    %2170 = vmatpush.msra.mxu0 %v1858
    %2171 = vmatpush.msra.mxu0 %v1856
    %2172 = vmatpush.msra.mxu0 %v1854
    %2173 = vmatpush.msra.mxu0 %v1852
    %2174 = vmatpush.msra.mxu0 %v1850
    %2175 = vmatpush.msra.mxu0 %v1848
    %2176 = vmatpush.msra.mxu0 %v1846
    %2177 = vmatpush.msra.mxu0 %v1844
    %2178 = vmatmul.f32.gmra.mxu0 %v2104
    %v2179 = vpop.f32.mrf.mxu0
    %v2180 = vadd.f32 %v2157, %v2179
    %2181 = vmatmul.f32.gmra.mxu0 %v2111
    %v2182 = vpop.f32.mrf.mxu0
    %v2183 = vadd.f32 %v2160, %v2182
    %2184 = vdwg.mxu0
    %2185 = vmatpush.msra.mxu0 %v1906
    %2186 = vmatpush.msra.mxu0 %v1904
    %2187 = vmatpush.msra.mxu0 %v1902
    %2188 = vmatpush.msra.mxu0 %v1900
    %2189 = vmatpush.msra.mxu0 %v1898
    %2190 = vmatpush.msra.mxu0 %v1896
    %2191 = vmatpush.msra.mxu0 %v1894
    %2192 = vmatpush.msra.mxu0 %v1892
    %2193 = vmatpush.msra.mxu0 %v1890
    %2194 = vmatpush.msra.mxu0 %v1888
    %2195 = vmatpush.msra.mxu0 %v1886
    %2196 = vmatpush.msra.mxu0 %v1884
    %2197 = vmatpush.msra.mxu0 %v1882
    %2198 = vmatpush.msra.mxu0 %v1880
    %2199 = vmatpush.msra.mxu0 %v1878
    %2200 = vmatpush.msra.mxu0 %v1876
    %2201 = vmatmul.f32.gmra.mxu0 %v2105
    %v2202 = vpop.f32.mrf.mxu0
    %v2203 = vadd.f32 %v2180, %v2202
    %2204 = vmatmul.f32.gmra.mxu0 %v2112
    %v2205 = vpop.f32.mrf.mxu0
    %v2206 = vadd.f32 %v2183, %v2205
    %2207 = vdwg.mxu0
    %2208 = vmatpush.msra.mxu0 %v1938
    %2209 = vmatpush.msra.mxu0 %v1936
    %2210 = vmatpush.msra.mxu0 %v1934
    %2211 = vmatpush.msra.mxu0 %v1932
    %2212 = vmatpush.msra.mxu0 %v1930
    %2213 = vmatpush.msra.mxu0 %v1928
    %2214 = vmatpush.msra.mxu0 %v1926
    %2215 = vmatpush.msra.mxu0 %v1924
    %2216 = vmatpush.msra.mxu0 %v1922
    %2217 = vmatpush.msra.mxu0 %v1920
    %2218 = vmatpush.msra.mxu0 %v1918
    %2219 = vmatpush.msra.mxu0 %v1916
    %2220 = vmatpush.msra.mxu0 %v1914
    %2221 = vmatpush.msra.mxu0 %v1912
    %2222 = vmatpush.msra.mxu0 %v1910
    %2223 = vmatpush.msra.mxu0 %v1908
    %2224 = vmatmul.f32.gmra.mxu0 %v2106
    %v2225 = vpop.f32.mrf.mxu0
    %v2226 = vadd.f32 %v2203, %v2225
    %2227 = vmatmul.f32.gmra.mxu0 %v2113
    %v2228 = vpop.f32.mrf.mxu0
    %v2229 = vadd.f32 %v2206, %v2228
    %2230 = vdwg.mxu0
    %2231 = vmatpush.msra.mxu0 %v1970
    %2232 = vmatpush.msra.mxu0 %v1968
    %2233 = vmatpush.msra.mxu0 %v1966
    %2234 = vmatpush.msra.mxu0 %v1964
    %2235 = vmatpush.msra.mxu0 %v1962
    %2236 = vmatpush.msra.mxu0 %v1960
    %2237 = vmatpush.msra.mxu0 %v1958
    %2238 = vmatpush.msra.mxu0 %v1956
    %2239 = vmatpush.msra.mxu0 %v1954
    %2240 = vmatpush.msra.mxu0 %v1952
    %2241 = vmatpush.msra.mxu0 %v1950
    %2242 = vmatpush.msra.mxu0 %v1948
    %2243 = vmatpush.msra.mxu0 %v1946
    %2244 = vmatpush.msra.mxu0 %v1944
    %2245 = vmatpush.msra.mxu0 %v1942
    %2246 = vmatpush.msra.mxu0 %v1940
    %2247 = vmatmul.f32.gmra.mxu0 %v2107
    %v2248 = vpop.f32.mrf.mxu0
    %v2249 = vadd.f32 %v2226, %v2248
    %2250 = vmatmul.f32.gmra.mxu0 %v2114
    %v2251 = vpop.f32.mrf.mxu0
    %v2252 = vadd.f32 %v2229, %v2251
    %2253 = vdwg.mxu0
    %2254 = vmatpush.msra.mxu0 %v2002
    %2255 = vmatpush.msra.mxu0 %v2000
    %2256 = vmatpush.msra.mxu0 %v1998
    %2257 = vmatpush.msra.mxu0 %v1996
    %2258 = vmatpush.msra.mxu0 %v1994
    %2259 = vmatpush.msra.mxu0 %v1992
    %2260 = vmatpush.msra.mxu0 %v1990
    %2261 = vmatpush.msra.mxu0 %v1988
    %2262 = vmatpush.msra.mxu0 %v1986
    %2263 = vmatpush.msra.mxu0 %v1984
    %2264 = vmatpush.msra.mxu0 %v1982
    %2265 = vmatpush.msra.mxu0 %v1980
    %2266 = vmatpush.msra.mxu0 %v1978
    %2267 = vmatpush.msra.mxu0 %v1976
    %2268 = vmatpush.msra.mxu0 %v1974
    %2269 = vmatpush.msra.mxu0 %v1972
    %2270 = vmatmul.f32.gmra.mxu0 %v2108
    %v2271 = vpop.f32.mrf.mxu0
    %v2272 = vadd.f32 %v2249, %v2271
    %2273 = vmatmul.f32.gmra.mxu0 %v2115
    %v2274 = vpop.f32.mrf.mxu0
    %v2275 = vadd.f32 %v2252, %v2274
    %2276 = vdwg.mxu0
    %2277 = vmatpush.msra.mxu0 %v1811
    %2278 = vmatpush.msra.mxu0 %v1809
    %2279 = vmatpush.msra.mxu0 %v1807
    %2280 = vmatpush.msra.mxu0 %v1805
    %2281 = vmatpush.msra.mxu0 %v1803
    %2282 = vmatpush.msra.mxu0 %v1801
    %2283 = vmatpush.msra.mxu0 %v1799
    %2284 = vmatpush.msra.mxu0 %v1797
    %2285 = vmatpush.msra.mxu0 %v1795
    %2286 = vmatpush.msra.mxu0 %v1793
    %2287 = vmatpush.msra.mxu0 %v1791
    %2288 = vmatpush.msra.mxu0 %v1789
    %2289 = vmatpush.msra.mxu0 %v1787
    %2290 = vmatpush.msra.mxu0 %v1785
    %2291 = vmatpush.msra.mxu0 %v1783
    %2292 = vmatpush.msra.mxu0 %v1781
    %2293 = vmatmul.f32.gmra.mxu0 %v2102
    %v2294 = vpop.f32.mrf.mxu0
    %v2295 = vadd.f32 0.0, %v2294
    %2296 = vmatmul.f32.gmra.mxu0 %v2109
    %v2297 = vpop.f32.mrf.mxu0
    %v2298 = vadd.f32 0.0, %v2297
    %2299 = vdwg.mxu0
    %2300 = vmatpush.msra.mxu0 %v1843
    %2301 = vmatpush.msra.mxu0 %v1841
    %2302 = vmatpush.msra.mxu0 %v1839
    %2303 = vmatpush.msra.mxu0 %v1837
    %2304 = vmatpush.msra.mxu0 %v1835
    %2305 = vmatpush.msra.mxu0 %v1833
    %2306 = vmatpush.msra.mxu0 %v1831
    %2307 = vmatpush.msra.mxu0 %v1829
    %2308 = vmatpush.msra.mxu0 %v1827
    %2309 = vmatpush.msra.mxu0 %v1825
    %2310 = vmatpush.msra.mxu0 %v1823
    %2311 = vmatpush.msra.mxu0 %v1821
    %2312 = vmatpush.msra.mxu0 %v1819
    %2313 = vmatpush.msra.mxu0 %v1817
    %2314 = vmatpush.msra.mxu0 %v1815
    %2315 = vmatpush.msra.mxu0 %v1813
    %2316 = vmatmul.f32.gmra.mxu0 %v2103
    %v2317 = vpop.f32.mrf.mxu0
    %v2318 = vadd.f32 %v2295, %v2317
    %2319 = vmatmul.f32.gmra.mxu0 %v2110
    %v2320 = vpop.f32.mrf.mxu0
    %v2321 = vadd.f32 %v2298, %v2320
    %2322 = vdwg.mxu0
    %2323 = vmatpush.msra.mxu0 %v1875
    %2324 = vmatpush.msra.mxu0 %v1873
    %2325 = vmatpush.msra.mxu0 %v1871
    %2326 = vmatpush.msra.mxu0 %v1869
    %2327 = vmatpush.msra.mxu0 %v1867
    %2328 = vmatpush.msra.mxu0 %v1865
    %2329 = vmatpush.msra.mxu0 %v1863
    %2330 = vmatpush.msra.mxu0 %v1861
    %2331 = vmatpush.msra.mxu0 %v1859
    %2332 = vmatpush.msra.mxu0 %v1857
    %2333 = vmatpush.msra.mxu0 %v1855
    %2334 = vmatpush.msra.mxu0 %v1853
    %2335 = vmatpush.msra.mxu0 %v1851
    %2336 = vmatpush.msra.mxu0 %v1849
    %2337 = vmatpush.msra.mxu0 %v1847
    %2338 = vmatpush.msra.mxu0 %v1845
    %2339 = vmatmul.f32.gmra.mxu0 %v2104
    %v2340 = vpop.f32.mrf.mxu0
    %v2341 = vadd.f32 %v2318, %v2340
    %2342 = vmatmul.f32.gmra.mxu0 %v2111
    %v2343 = vpop.f32.mrf.mxu0
    %v2344 = vadd.f32 %v2321, %v2343
    %2345 = vdwg.mxu0
    %2346 = vmatpush.msra.mxu0 %v1907
    %2347 = vmatpush.msra.mxu0 %v1905
    %2348 = vmatpush.msra.mxu0 %v1903
    %2349 = vmatpush.msra.mxu0 %v1901
    %2350 = vmatpush.msra.mxu0 %v1899
    %2351 = vmatpush.msra.mxu0 %v1897
    %2352 = vmatpush.msra.mxu0 %v1895
    %2353 = vmatpush.msra.mxu0 %v1893
    %2354 = vmatpush.msra.mxu0 %v1891
    %2355 = vmatpush.msra.mxu0 %v1889
    %2356 = vmatpush.msra.mxu0 %v1887
    %2357 = vmatpush.msra.mxu0 %v1885
    %2358 = vmatpush.msra.mxu0 %v1883
    %2359 = vmatpush.msra.mxu0 %v1881
    %2360 = vmatpush.msra.mxu0 %v1879
    %2361 = vmatpush.msra.mxu0 %v1877
    %2362 = vmatmul.f32.gmra.mxu0 %v2105
    %v2363 = vpop.f32.mrf.mxu0
    %v2364 = vadd.f32 %v2341, %v2363
    %2365 = vmatmul.f32.gmra.mxu0 %v2112
    %v2366 = vpop.f32.mrf.mxu0
    %v2367 = vadd.f32 %v2344, %v2366
    %2368 = vdwg.mxu0
    %2369 = vmatpush.msra.mxu0 %v1939
    %2370 = vmatpush.msra.mxu0 %v1937
    %2371 = vmatpush.msra.mxu0 %v1935
    %2372 = vmatpush.msra.mxu0 %v1933
    %2373 = vmatpush.msra.mxu0 %v1931
    %2374 = vmatpush.msra.mxu0 %v1929
    %2375 = vmatpush.msra.mxu0 %v1927
    %2376 = vmatpush.msra.mxu0 %v1925
    %2377 = vmatpush.msra.mxu0 %v1923
    %2378 = vmatpush.msra.mxu0 %v1921
    %2379 = vmatpush.msra.mxu0 %v1919
    %2380 = vmatpush.msra.mxu0 %v1917
    %2381 = vmatpush.msra.mxu0 %v1915
    %2382 = vmatpush.msra.mxu0 %v1913
    %2383 = vmatpush.msra.mxu0 %v1911
    %2384 = vmatpush.msra.mxu0 %v1909
    %2385 = vmatmul.f32.gmra.mxu0 %v2106
    %v2386 = vpop.f32.mrf.mxu0
    %v2387 = vadd.f32 %v2364, %v2386
    %2388 = vmatmul.f32.gmra.mxu0 %v2113
    %v2389 = vpop.f32.mrf.mxu0
    %v2390 = vadd.f32 %v2367, %v2389
    %2391 = vdwg.mxu0
    %2392 = vmatpush.msra.mxu0 %v1971
    %2393 = vmatpush.msra.mxu0 %v1969
    %2394 = vmatpush.msra.mxu0 %v1967
    %2395 = vmatpush.msra.mxu0 %v1965
    %2396 = vmatpush.msra.mxu0 %v1963
    %2397 = vmatpush.msra.mxu0 %v1961
    %2398 = vmatpush.msra.mxu0 %v1959
    %2399 = vmatpush.msra.mxu0 %v1957
    %2400 = vmatpush.msra.mxu0 %v1955
    %2401 = vmatpush.msra.mxu0 %v1953
    %2402 = vmatpush.msra.mxu0 %v1951
    %2403 = vmatpush.msra.mxu0 %v1949
    %2404 = vmatpush.msra.mxu0 %v1947
    %2405 = vmatpush.msra.mxu0 %v1945
    %2406 = vmatpush.msra.mxu0 %v1943
    %2407 = vmatpush.msra.mxu0 %v1941
    %2408 = vmatmul.f32.gmra.mxu0 %v2107
    %v2409 = vpop.f32.mrf.mxu0
    %v2410 = vadd.f32 %v2387, %v2409
    %2411 = vmatmul.f32.gmra.mxu0 %v2114
    %v2412 = vpop.f32.mrf.mxu0
    %v2413 = vadd.f32 %v2390, %v2412
    %2414 = vdwg.mxu0
    %2415 = vmatpush.msra.mxu0 %v2003
    %2416 = vmatpush.msra.mxu0 %v2001
    %2417 = vmatpush.msra.mxu0 %v1999
    %2418 = vmatpush.msra.mxu0 %v1997
    %2419 = vmatpush.msra.mxu0 %v1995
    %2420 = vmatpush.msra.mxu0 %v1993
    %2421 = vmatpush.msra.mxu0 %v1991
    %2422 = vmatpush.msra.mxu0 %v1989
    %2423 = vmatpush.msra.mxu0 %v1987
    %2424 = vmatpush.msra.mxu0 %v1985
    %2425 = vmatpush.msra.mxu0 %v1983
    %2426 = vmatpush.msra.mxu0 %v1981
    %2427 = vmatpush.msra.mxu0 %v1979
    %2428 = vmatpush.msra.mxu0 %v1977
    %2429 = vmatpush.msra.mxu0 %v1975
    %2430 = vmatpush.msra.mxu0 %v1973
    %2431 = vmatmul.f32.gmra.mxu0 %v2108
    %v2432 = vpop.f32.mrf.mxu0
    %v2433 = vadd.f32 %v2410, %v2432
    %2434 = vmatmul.f32.gmra.mxu0 %v2115
    %v2435 = vpop.f32.mrf.mxu0
    %v2436 = vadd.f32 %v2413, %v2435
    %2437 = vdwg.mxu0
    %v2438 = vld [vmem:[%s5] sm:$0xff]
    %v2439 = vld [vmem:[%s6] sm:$0xff]
    %2440 = vrot.lane.b32.xlu0 %v2272, 15
    %v2441 = vpop.permute.xlu0 %2440
    %2442 = vrot.lane.b32.xlu0 %v2275, 15
    %v2443 = vpop.permute.xlu0 %2442
    %2444 = vrot.lane.b32.xlu0 %v2433, 15
    %v2445 = vpop.permute.xlu0 %2444
    %2446 = vrot.lane.b32.xlu0 %v2436, 15
    %v2447 = vpop.permute.xlu0 %2446
    %vm2448 = vcmp.lt.s32.totalorder %v123, 15
    %v2449 = vsel %vm2448, %v2441, %v2445
    %v2450 = vsel %vm2448, %v2443, %v2447
    %v2451 = vsel %vm2448, %v2445, %v2441
    %v2452 = vsel %vm2448, %v2447, %v2443
    %v2453 = vperm.slane %v83, 0
    %v2454 = vperm.slane %v84, 0
    %v2455 = vmul.f32 %v2451, %v2453
    %v2456 = vmul.f32 %v2449, %v2454
    %v2457 = vmul.f32 %v2452, %v2453
    %v2458 = vmul.f32 %v2450, %v2454
    %2459 = vrot.lane.b32.xlu0 %v2272, 14
    %v2460 = vpop.permute.xlu0 %2459
    %2461 = vrot.lane.b32.xlu0 %v2275, 14
    %v2462 = vpop.permute.xlu0 %2461
    %2463 = vrot.lane.b32.xlu0 %v2433, 14
    %v2464 = vpop.permute.xlu0 %2463
    %2465 = vrot.lane.b32.xlu0 %v2436, 14
    %v2466 = vpop.permute.xlu0 %2465
    %vm2467 = vcmp.lt.s32.totalorder %v123, 14
    %v2468 = vsel %vm2467, %v2460, %v2464
    %v2469 = vsel %vm2467, %v2462, %v2466
    %v2470 = vsel %vm2467, %v2464, %v2460
    %v2471 = vsel %vm2467, %v2466, %v2462
    %v2472 = vperm.slane %v83, 1
    %v2473 = vperm.slane %v84, 1
    %v2474 = vmul.f32 %v2470, %v2472
    %v2475 = vmul.f32 %v2468, %v2473
    %v2476 = vmul.f32 %v2471, %v2472
    %v2477 = vmul.f32 %v2469, %v2473
    %2478 = vrot.lane.b32.xlu0 %v2272, 13
    %v2479 = vpop.permute.xlu0 %2478
    %2480 = vrot.lane.b32.xlu0 %v2275, 13
    %v2481 = vpop.permute.xlu0 %2480
    %2482 = vrot.lane.b32.xlu0 %v2433, 13
    %v2483 = vpop.permute.xlu0 %2482
    %2484 = vrot.lane.b32.xlu0 %v2436, 13
    %v2485 = vpop.permute.xlu0 %2484
    %vm2486 = vcmp.lt.s32.totalorder %v123, 13
    %v2487 = vsel %vm2486, %v2479, %v2483
    %v2488 = vsel %vm2486, %v2481, %v2485
    %v2489 = vsel %vm2486, %v2483, %v2479
    %v2490 = vsel %vm2486, %v2485, %v2481
    %v2491 = vperm.slane %v83, 2
    %v2492 = vperm.slane %v84, 2
    %v2493 = vmul.f32 %v2489, %v2491
    %v2494 = vmul.f32 %v2487, %v2492
    %v2495 = vmul.f32 %v2490, %v2491
    %v2496 = vmul.f32 %v2488, %v2492
    %2497 = vrot.lane.b32.xlu0 %v2272, 1
    %v2498 = vpop.permute.xlu0 %2497
    %2499 = vrot.lane.b32.xlu0 %v2275, 1
    %v2500 = vpop.permute.xlu0 %2499
    %2501 = vrot.lane.b32.xlu0 %v2433, 1
    %v2502 = vpop.permute.xlu0 %2501
    %2503 = vrot.lane.b32.xlu0 %v2436, 1
    %v2504 = vpop.permute.xlu0 %2503
    %v2505 = vsel %vm283, %v2498, %v2502
    %v2506 = vsel %vm283, %v2500, %v2504
    %v2507 = vsel %vm283, %v2502, %v2498
    %v2508 = vsel %vm283, %v2504, %v2500
    %v2509 = vperm.slane %v83, 3
    %v2510 = vperm.slane %v84, 3
    %v2511 = vmul.f32 %v2507, %v2509
    %v2512 = vmul.f32 %v2505, %v2510
    %v2513 = vmul.f32 %v2508, %v2509
    %v2514 = vmul.f32 %v2506, %v2510
    %v2515 = vperm.slane %v83, 4
    %v2516 = vperm.slane %v84, 4
    %v2517 = vmul.f32 %v2272, %v2515
    %v2518 = vmul.f32 %v2433, %v2516
    %v2519 = vmul.f32 %v2275, %v2515
    %v2520 = vmul.f32 %v2436, %v2516
    %2521 = vrot.lane.b32.xlu0 %v2272, 127
    %v2522 = vpop.permute.xlu0 %2521
    %2523 = vrot.lane.b32.xlu0 %v2275, 127
    %v2524 = vpop.permute.xlu0 %2523
    %2525 = vrot.lane.b32.xlu0 %v2433, 127
    %v2526 = vpop.permute.xlu0 %2525
    %2527 = vrot.lane.b32.xlu0 %v2436, 127
    %v2528 = vpop.permute.xlu0 %2527
    %v2529 = vsel %vm367, %v2522, %v2526
    %v2530 = vsel %vm367, %v2524, %v2528
    %v2531 = vsel %vm367, %v2526, %v2522
    %v2532 = vsel %vm367, %v2528, %v2524
    %v2533 = vperm.slane %v83, 5
    %v2534 = vperm.slane %v84, 5
    %v2535 = vmul.f32 %v2529, %v2533
    %v2536 = vmul.f32 %v2531, %v2534
    %v2537 = vmul.f32 %v2530, %v2533
    %v2538 = vmul.f32 %v2532, %v2534
    %2539 = vrot.lane.b32.xlu0 %v2272, 115
    %v2540 = vpop.permute.xlu0 %2539
    %2541 = vrot.lane.b32.xlu0 %v2275, 115
    %v2542 = vpop.permute.xlu0 %2541
    %2543 = vrot.lane.b32.xlu0 %v2433, 115
    %v2544 = vpop.permute.xlu0 %2543
    %2545 = vrot.lane.b32.xlu0 %v2436, 115
    %v2546 = vpop.permute.xlu0 %2545
    %vm2547 = vcmp.lt.s32.totalorder %v123, 115
    %v2548 = vsel %vm2547, %v2540, %v2544
    %v2549 = vsel %vm2547, %v2542, %v2546
    %v2550 = vsel %vm2547, %v2544, %v2540
    %v2551 = vsel %vm2547, %v2546, %v2542
    %v2552 = vperm.slane %v83, 6
    %v2553 = vperm.slane %v84, 6
    %v2554 = vmul.f32 %v2548, %v2552
    %v2555 = vmul.f32 %v2550, %v2553
    %v2556 = vmul.f32 %v2549, %v2552
    %v2557 = vmul.f32 %v2551, %v2553
    %2558 = vrot.lane.b32.xlu0 %v2272, 114
    %v2559 = vpop.permute.xlu0 %2558
    %2560 = vrot.lane.b32.xlu0 %v2275, 114
    %v2561 = vpop.permute.xlu0 %2560
    %2562 = vrot.lane.b32.xlu0 %v2433, 114
    %v2563 = vpop.permute.xlu0 %2562
    %2564 = vrot.lane.b32.xlu0 %v2436, 114
    %v2565 = vpop.permute.xlu0 %2564
    %vm2566 = vcmp.lt.s32.totalorder %v123, 114
    %v2567 = vsel %vm2566, %v2559, %v2563
    %v2568 = vsel %vm2566, %v2561, %v2565
    %v2569 = vsel %vm2566, %v2563, %v2559
    %v2570 = vsel %vm2566, %v2565, %v2561
    %v2571 = vperm.slane %v83, 7
    %v2572 = vperm.slane %v84, 7
    %v2573 = vmul.f32 %v2567, %v2571
    %v2574 = vmul.f32 %v2569, %v2572
    %v2575 = vmul.f32 %v2568, %v2571
    %v2576 = vmul.f32 %v2570, %v2572
    %2577 = vrot.lane.b32.xlu0 %v2272, 113
    %v2578 = vpop.permute.xlu0 %2577
    %2579 = vrot.lane.b32.xlu0 %v2275, 113
    %v2580 = vpop.permute.xlu0 %2579
    %2581 = vrot.lane.b32.xlu0 %v2433, 113
    %v2582 = vpop.permute.xlu0 %2581
    %2583 = vrot.lane.b32.xlu0 %v2436, 113
    %v2584 = vpop.permute.xlu0 %2583
    %vm2585 = vcmp.lt.s32.totalorder %v123, 113
    %v2586 = vsel %vm2585, %v2578, %v2582
    %v2587 = vsel %vm2585, %v2580, %v2584
    %v2588 = vsel %vm2585, %v2582, %v2578
    %v2589 = vsel %vm2585, %v2584, %v2580
    %v2590 = vperm.slane %v85, 0
    %v2591 = vperm.slane %v86, 0
    %v2592 = vmul.f32 %v2586, %v2590
    %v2593 = vmul.f32 %v2588, %v2591
    %v2594 = vmul.f32 %v2587, %v2590
    %v2595 = vmul.f32 %v2589, %v2591
    %2597 = vset.pattern.permute.xlu0 0
    %2598 = vperm.xlu0 %2597, %v2439
    %v2599 = vpop.permute.xlu0 %2598
    %v2602 = vsel %vm1482, %v2438, 0
    %2604 = vmatpush.msra.mxu0 0.0
    %2605 = vmatpush.msra.mxu0 0.0
    %2606 = vmatpush.msra.mxu0 0.0
    %2607 = vmatpush.msra.mxu0 0.0
    %2608 = vmatpush.msra.mxu0 0.0
    %2609 = vmatpush.msra.mxu0 0.0
    %2610 = vmatpush.msra.mxu0 0.0
    %2611 = vmatpush.msra.mxu0 %v2592
    %2612 = vmatpush.msra.mxu0 %v2573
    %2613 = vmatpush.msra.mxu0 %v2554
    %2614 = vmatpush.msra.mxu0 %v2535
    %2615 = vmatpush.msra.mxu0 %v2517
    %2616 = vmatpush.msra.mxu0 %v2511
    %2617 = vmatpush.msra.mxu0 %v2493
    %2618 = vmatpush.msra.mxu0 %v2474
    %2619 = vmatpush.msra.mxu0 %v2455
    %2620 = vmatmul.f32.gmra.mxu0 %v2602
    %v2621 = vpop.f32.mrf.mxu0
    %v2622 = vadd.f32 %v2599, %v2621
    %2623 = vdwg.mxu0
    %2624 = vmatpush.msra.mxu0 0.0
    %2625 = vmatpush.msra.mxu0 0.0
    %2626 = vmatpush.msra.mxu0 0.0
    %2627 = vmatpush.msra.mxu0 0.0
    %2628 = vmatpush.msra.mxu0 0.0
    %2629 = vmatpush.msra.mxu0 0.0
    %2630 = vmatpush.msra.mxu0 0.0
    %2631 = vmatpush.msra.mxu0 %v2593
    %2632 = vmatpush.msra.mxu0 %v2574
    %2633 = vmatpush.msra.mxu0 %v2555
    %2634 = vmatpush.msra.mxu0 %v2536
    %2635 = vmatpush.msra.mxu0 %v2518
    %2636 = vmatpush.msra.mxu0 %v2512
    %2637 = vmatpush.msra.mxu0 %v2494
    %2638 = vmatpush.msra.mxu0 %v2475
    %2639 = vmatpush.msra.mxu0 %v2456
    %2640 = vmatmul.f32.gmra.mxu0 %v2602
    %v2641 = vpop.f32.mrf.mxu0
    %v2642 = vadd.f32 %v2599, %v2641
    %2643 = vdwg.mxu0
    %v2644 = vmax.f32 %v2622, 0.0
    %v2645 = vmax.f32 %v2642, 0.0
    %2646 = vmatpush.msra.mxu0 0.0
    %2647 = vmatpush.msra.mxu0 0.0
    %2648 = vmatpush.msra.mxu0 0.0
    %2649 = vmatpush.msra.mxu0 0.0
    %2650 = vmatpush.msra.mxu0 0.0
    %2651 = vmatpush.msra.mxu0 0.0
    %2652 = vmatpush.msra.mxu0 0.0
    %2653 = vmatpush.msra.mxu0 %v2594
    %2654 = vmatpush.msra.mxu0 %v2575
    %2655 = vmatpush.msra.mxu0 %v2556
    %2656 = vmatpush.msra.mxu0 %v2537
    %2657 = vmatpush.msra.mxu0 %v2519
    %2658 = vmatpush.msra.mxu0 %v2513
    %2659 = vmatpush.msra.mxu0 %v2495
    %2660 = vmatpush.msra.mxu0 %v2476
    %2661 = vmatpush.msra.mxu0 %v2457
    %2662 = vmatmul.f32.gmra.mxu0 %v2602
    %v2663 = vpop.f32.mrf.mxu0
    %v2664 = vadd.f32 %v2599, %v2663
    %2665 = vdwg.mxu0
    %2666 = vmatpush.msra.mxu0 0.0
    %2667 = vmatpush.msra.mxu0 0.0
    %2668 = vmatpush.msra.mxu0 0.0
    %2669 = vmatpush.msra.mxu0 0.0
    %2670 = vmatpush.msra.mxu0 0.0
    %2671 = vmatpush.msra.mxu0 0.0
    %2672 = vmatpush.msra.mxu0 0.0
    %2673 = vmatpush.msra.mxu0 %v2595
    %2674 = vmatpush.msra.mxu0 %v2576
    %2675 = vmatpush.msra.mxu0 %v2557
    %2676 = vmatpush.msra.mxu0 %v2538
    %2677 = vmatpush.msra.mxu0 %v2520
    %2678 = vmatpush.msra.mxu0 %v2514
    %2679 = vmatpush.msra.mxu0 %v2496
    %2680 = vmatpush.msra.mxu0 %v2477
    %2681 = vmatpush.msra.mxu0 %v2458
    %2682 = vmatmul.f32.gmra.mxu0 %v2602
    %v2683 = vpop.f32.mrf.mxu0
    %v2684 = vadd.f32 %v2599, %v2683
    %2685 = vdwg.mxu0
    %v2686 = vmax.f32 %v2664, 0.0
    %v2687 = vmax.f32 %v2684, 0.0
    %v2688 = vld [vmem:[%s7] sm:$0xff]
    %v2689 = vld [vmem:[%s8] sm:$0xff]
    %2690 = vrot.lane.b32.xlu0 %v2644, 15
    %v2691 = vpop.permute.xlu0 %2690
    %2692 = vrot.lane.b32.xlu0 %v2686, 15
    %v2693 = vpop.permute.xlu0 %2692
    %2694 = vrot.lane.b32.xlu0 %v2645, 15
    %v2695 = vpop.permute.xlu0 %2694
    %2696 = vrot.lane.b32.xlu0 %v2687, 15
    %v2697 = vpop.permute.xlu0 %2696
    %v2698 = vsel %vm2448, %v2691, %v2695
    %v2699 = vsel %vm2448, %v2693, %v2697
    %v2700 = vsel %vm2448, %v2695, %v2691
    %v2701 = vsel %vm2448, %v2697, %v2693
    %v2702 = vmul.f32 %v2700, %v2453
    %v2703 = vmul.f32 %v2698, %v2454
    %v2704 = vmul.f32 %v2701, %v2453
    %v2705 = vmul.f32 %v2699, %v2454
    %2706 = vrot.lane.b32.xlu0 %v2644, 14
    %v2707 = vpop.permute.xlu0 %2706
    %2708 = vrot.lane.b32.xlu0 %v2686, 14
    %v2709 = vpop.permute.xlu0 %2708
    %2710 = vrot.lane.b32.xlu0 %v2645, 14
    %v2711 = vpop.permute.xlu0 %2710
    %2712 = vrot.lane.b32.xlu0 %v2687, 14
    %v2713 = vpop.permute.xlu0 %2712
    %v2714 = vsel %vm2467, %v2707, %v2711
    %v2715 = vsel %vm2467, %v2709, %v2713
    %v2716 = vsel %vm2467, %v2711, %v2707
    %v2717 = vsel %vm2467, %v2713, %v2709
    %v2718 = vmul.f32 %v2716, %v2472
    %v2719 = vmul.f32 %v2714, %v2473
    %v2720 = vmul.f32 %v2717, %v2472
    %v2721 = vmul.f32 %v2715, %v2473
    %2722 = vrot.lane.b32.xlu0 %v2644, 13
    %v2723 = vpop.permute.xlu0 %2722
    %2724 = vrot.lane.b32.xlu0 %v2686, 13
    %v2725 = vpop.permute.xlu0 %2724
    %2726 = vrot.lane.b32.xlu0 %v2645, 13
    %v2727 = vpop.permute.xlu0 %2726
    %2728 = vrot.lane.b32.xlu0 %v2687, 13
    %v2729 = vpop.permute.xlu0 %2728
    %v2730 = vsel %vm2486, %v2723, %v2727
    %v2731 = vsel %vm2486, %v2725, %v2729
    %v2732 = vsel %vm2486, %v2727, %v2723
    %v2733 = vsel %vm2486, %v2729, %v2725
    %v2734 = vmul.f32 %v2732, %v2491
    %v2735 = vmul.f32 %v2730, %v2492
    %v2736 = vmul.f32 %v2733, %v2491
    %v2737 = vmul.f32 %v2731, %v2492
    %2738 = vrot.lane.b32.xlu0 %v2644, 1
    %v2739 = vpop.permute.xlu0 %2738
    %2740 = vrot.lane.b32.xlu0 %v2686, 1
    %v2741 = vpop.permute.xlu0 %2740
    %2742 = vrot.lane.b32.xlu0 %v2645, 1
    %v2743 = vpop.permute.xlu0 %2742
    %2744 = vrot.lane.b32.xlu0 %v2687, 1
    %v2745 = vpop.permute.xlu0 %2744
    %v2746 = vsel %vm283, %v2739, %v2743
    %v2747 = vsel %vm283, %v2741, %v2745
    %v2748 = vsel %vm283, %v2743, %v2739
    %v2749 = vsel %vm283, %v2745, %v2741
    %v2750 = vmul.f32 %v2748, %v2509
    %v2751 = vmul.f32 %v2746, %v2510
    %v2752 = vmul.f32 %v2749, %v2509
    %v2753 = vmul.f32 %v2747, %v2510
    %v2754 = vmul.f32 %v2644, %v2515
    %v2755 = vmul.f32 %v2645, %v2516
    %v2756 = vmul.f32 %v2686, %v2515
    %v2757 = vmul.f32 %v2687, %v2516
    %2758 = vrot.lane.b32.xlu0 %v2644, 127
    %v2759 = vpop.permute.xlu0 %2758
    %2760 = vrot.lane.b32.xlu0 %v2686, 127
    %v2761 = vpop.permute.xlu0 %2760
    %2762 = vrot.lane.b32.xlu0 %v2645, 127
    %v2763 = vpop.permute.xlu0 %2762
    %2764 = vrot.lane.b32.xlu0 %v2687, 127
    %v2765 = vpop.permute.xlu0 %2764
    %v2766 = vsel %vm367, %v2759, %v2763
    %v2767 = vsel %vm367, %v2761, %v2765
    %v2768 = vsel %vm367, %v2763, %v2759
    %v2769 = vsel %vm367, %v2765, %v2761
    %v2770 = vmul.f32 %v2766, %v2533
    %v2771 = vmul.f32 %v2768, %v2534
    %v2772 = vmul.f32 %v2767, %v2533
    %v2773 = vmul.f32 %v2769, %v2534
    %2774 = vrot.lane.b32.xlu0 %v2644, 115
    %v2775 = vpop.permute.xlu0 %2774
    %2776 = vrot.lane.b32.xlu0 %v2686, 115
    %v2777 = vpop.permute.xlu0 %2776
    %2778 = vrot.lane.b32.xlu0 %v2645, 115
    %v2779 = vpop.permute.xlu0 %2778
    %2780 = vrot.lane.b32.xlu0 %v2687, 115
    %v2781 = vpop.permute.xlu0 %2780
    %v2782 = vsel %vm2547, %v2775, %v2779
    %v2783 = vsel %vm2547, %v2777, %v2781
    %v2784 = vsel %vm2547, %v2779, %v2775
    %v2785 = vsel %vm2547, %v2781, %v2777
    %v2786 = vmul.f32 %v2782, %v2552
    %v2787 = vmul.f32 %v2784, %v2553
    %v2788 = vmul.f32 %v2783, %v2552
    %v2789 = vmul.f32 %v2785, %v2553
    %2790 = vrot.lane.b32.xlu0 %v2644, 114
    %v2791 = vpop.permute.xlu0 %2790
    %2792 = vrot.lane.b32.xlu0 %v2686, 114
    %v2793 = vpop.permute.xlu0 %2792
    %2794 = vrot.lane.b32.xlu0 %v2645, 114
    %v2795 = vpop.permute.xlu0 %2794
    %2796 = vrot.lane.b32.xlu0 %v2687, 114
    %v2797 = vpop.permute.xlu0 %2796
    %v2798 = vsel %vm2566, %v2791, %v2795
    %v2799 = vsel %vm2566, %v2793, %v2797
    %v2800 = vsel %vm2566, %v2795, %v2791
    %v2801 = vsel %vm2566, %v2797, %v2793
    %v2802 = vmul.f32 %v2798, %v2571
    %v2803 = vmul.f32 %v2800, %v2572
    %v2804 = vmul.f32 %v2799, %v2571
    %v2805 = vmul.f32 %v2801, %v2572
    %2806 = vrot.lane.b32.xlu0 %v2644, 113
    %v2807 = vpop.permute.xlu0 %2806
    %2808 = vrot.lane.b32.xlu0 %v2686, 113
    %v2809 = vpop.permute.xlu0 %2808
    %2810 = vrot.lane.b32.xlu0 %v2645, 113
    %v2811 = vpop.permute.xlu0 %2810
    %2812 = vrot.lane.b32.xlu0 %v2687, 113
    %v2813 = vpop.permute.xlu0 %2812
    %v2814 = vsel %vm2585, %v2807, %v2811
    %v2815 = vsel %vm2585, %v2809, %v2813
    %v2816 = vsel %vm2585, %v2811, %v2807
    %v2817 = vsel %vm2585, %v2813, %v2809
    %v2818 = vmul.f32 %v2814, %v2590
    %v2819 = vmul.f32 %v2816, %v2591
    %v2820 = vmul.f32 %v2815, %v2590
    %v2821 = vmul.f32 %v2817, %v2591
    %2823 = vset.pattern.permute.xlu0 0
    %2824 = vperm.xlu0 %2823, %v2689
    %v2825 = vpop.permute.xlu0 %2824
    %v2828 = vsel %vm1482, %v2688, 0
    %2830 = vmatpush.msra.mxu0 0.0
    %2831 = vmatpush.msra.mxu0 0.0
    %2832 = vmatpush.msra.mxu0 0.0
    %2833 = vmatpush.msra.mxu0 0.0
    %2834 = vmatpush.msra.mxu0 0.0
    %2835 = vmatpush.msra.mxu0 0.0
    %2836 = vmatpush.msra.mxu0 0.0
    %2837 = vmatpush.msra.mxu0 %v2818
    %2838 = vmatpush.msra.mxu0 %v2802
    %2839 = vmatpush.msra.mxu0 %v2786
    %2840 = vmatpush.msra.mxu0 %v2770
    %2841 = vmatpush.msra.mxu0 %v2754
    %2842 = vmatpush.msra.mxu0 %v2750
    %2843 = vmatpush.msra.mxu0 %v2734
    %2844 = vmatpush.msra.mxu0 %v2718
    %2845 = vmatpush.msra.mxu0 %v2702
    %2846 = vmatmul.f32.gmra.mxu0 %v2828
    %v2847 = vpop.f32.mrf.mxu0
    %v2848 = vadd.f32 %v2825, %v2847
    %2849 = vdwg.mxu0
    %2850 = vmatpush.msra.mxu0 0.0
    %2851 = vmatpush.msra.mxu0 0.0
    %2852 = vmatpush.msra.mxu0 0.0
    %2853 = vmatpush.msra.mxu0 0.0
    %2854 = vmatpush.msra.mxu0 0.0
    %2855 = vmatpush.msra.mxu0 0.0
    %2856 = vmatpush.msra.mxu0 0.0
    %2857 = vmatpush.msra.mxu0 %v2819
    %2858 = vmatpush.msra.mxu0 %v2803
    %2859 = vmatpush.msra.mxu0 %v2787
    %2860 = vmatpush.msra.mxu0 %v2771
    %2861 = vmatpush.msra.mxu0 %v2755
    %2862 = vmatpush.msra.mxu0 %v2751
    %2863 = vmatpush.msra.mxu0 %v2735
    %2864 = vmatpush.msra.mxu0 %v2719
    %2865 = vmatpush.msra.mxu0 %v2703
    %2866 = vmatmul.f32.gmra.mxu0 %v2828
    %v2867 = vpop.f32.mrf.mxu0
    %v2868 = vadd.f32 %v2825, %v2867
    %2869 = vdwg.mxu0
    %v2870 = vmax.f32 %v2848, 0.0
    %v2871 = vmax.f32 %v2868, 0.0
    %2872 = vmatpush.msra.mxu0 0.0
    %2873 = vmatpush.msra.mxu0 0.0
    %2874 = vmatpush.msra.mxu0 0.0
    %2875 = vmatpush.msra.mxu0 0.0
    %2876 = vmatpush.msra.mxu0 0.0
    %2877 = vmatpush.msra.mxu0 0.0
    %2878 = vmatpush.msra.mxu0 0.0
    %2879 = vmatpush.msra.mxu0 %v2820
    %2880 = vmatpush.msra.mxu0 %v2804
    %2881 = vmatpush.msra.mxu0 %v2788
    %2882 = vmatpush.msra.mxu0 %v2772
    %2883 = vmatpush.msra.mxu0 %v2756
    %2884 = vmatpush.msra.mxu0 %v2752
    %2885 = vmatpush.msra.mxu0 %v2736
    %2886 = vmatpush.msra.mxu0 %v2720
    %2887 = vmatpush.msra.mxu0 %v2704
    %2888 = vmatmul.f32.gmra.mxu0 %v2828
    %v2889 = vpop.f32.mrf.mxu0
    %v2890 = vadd.f32 %v2825, %v2889
    %2891 = vdwg.mxu0
    %2892 = vmatpush.msra.mxu0 0.0
    %2893 = vmatpush.msra.mxu0 0.0
    %2894 = vmatpush.msra.mxu0 0.0
    %2895 = vmatpush.msra.mxu0 0.0
    %2896 = vmatpush.msra.mxu0 0.0
    %2897 = vmatpush.msra.mxu0 0.0
    %2898 = vmatpush.msra.mxu0 0.0
    %2899 = vmatpush.msra.mxu0 %v2821
    %2900 = vmatpush.msra.mxu0 %v2805
    %2901 = vmatpush.msra.mxu0 %v2789
    %2902 = vmatpush.msra.mxu0 %v2773
    %2903 = vmatpush.msra.mxu0 %v2757
    %2904 = vmatpush.msra.mxu0 %v2753
    %2905 = vmatpush.msra.mxu0 %v2737
    %2906 = vmatpush.msra.mxu0 %v2721
    %2907 = vmatpush.msra.mxu0 %v2705
    %2908 = vmatmul.f32.gmra.mxu0 %v2828
    %v2909 = vpop.f32.mrf.mxu0
    %v2910 = vadd.f32 %v2825, %v2909
    %2911 = vdwg.mxu0
    %v2912 = vmax.f32 %v2890, 0.0
    %v2913 = vmax.f32 %v2910, 0.0
    %v2914 = vld [vmem:[%s14] sm:$0xff]
    %v2915 = vld [vmem:[%s14 + $0x8] sm:$0xff]
    %v2916 = vld [vmem:[%s14 + $0x10] sm:$0xff]
    %v2917 = vld [vmem:[%s14 + $0x18] sm:$0xff]
    %v2918 = vld [vmem:[%s14 + $0x20] sm:$0xff]
    %v2919 = vld [vmem:[%s14 + $0x28] sm:$0xff]
    %v2920 = vld [vmem:[%s14 + $0x30] sm:$0xff]
    %v2921 = vld [vmem:[%s14 + $0x38] sm:$0xff]
    %v2922 = vld [vmem:[%s14 + $0x40] sm:$0xff]
    %v2923 = vld [vmem:[%s14 + $0x48] sm:$0xff]
    %v2924 = vld [vmem:[%s14 + $0x50] sm:$0xff]
    %v2925 = vld [vmem:[%s14 + $0x58] sm:$0xff]
    %v2926 = vld [vmem:[%s14 + $0x60] sm:$0xff]
    %v2927 = vld [vmem:[%s14 + $0x68] sm:$0xff]
    %v2928 = vld [vmem:[%s14 + $0x70] sm:$0xff]
    %v2929 = vld [vmem:[%s14 + $0x78] sm:$0xff]
    %v2930 = vld [vmem:[%s14 + $0x80] sm:$0xff]
    %v2931 = vld [vmem:[%s14 + $0x88] sm:$0xff]
    %v2932 = vld [vmem:[%s14 + $0x90] sm:$0xff]
    %v2933 = vld [vmem:[%s14 + $0x98] sm:$0xff]
    %v2934 = vld [vmem:[%s14 + $0xa0] sm:$0xff]
    %v2935 = vld [vmem:[%s14 + $0xa8] sm:$0xff]
    %v2936 = vld [vmem:[%s14 + $0xb0] sm:$0xff]
    %v2937 = vld [vmem:[%s14 + $0xb8] sm:$0xff]
    %v2938 = vld [vmem:[%s14 + $0xc0] sm:$0xff]
    %v2939 = vld [vmem:[%s14 + $0xc8] sm:$0xff]
    %v2940 = vld [vmem:[%s14 + $0xd0] sm:$0xff]
    %v2941 = vld [vmem:[%s14 + $0xd8] sm:$0xff]
    %v2942 = vld [vmem:[%s14 + $0xe0] sm:$0xff]
    %v2943 = vld [vmem:[%s14 + $0xe8] sm:$0xff]
    %v2944 = vld [vmem:[%s14 + $0xf0] sm:$0xff]
    %v2945 = vld [vmem:[%s14 + $0xf8] sm:$0xff]
    %2946 = vrot.lane.b32.xlu0 %v2870, 127
    %v2947 = vpop.permute.xlu0 %2946
    %2948 = vrot.lane.b32.xlu0 %v2912, 127
    %v2949 = vpop.permute.xlu0 %2948
    %2950 = vrot.lane.b32.xlu0 %v2871, 127
    %v2951 = vpop.permute.xlu0 %2950
    %2952 = vrot.lane.b32.xlu0 %v2913, 127
    %v2953 = vpop.permute.xlu0 %2952
    %v2954 = vsel %vm367, %v2947, %v2951
    %v2955 = vsel %vm367, %v2949, %v2953
    %v2956 = vsel %vm367, %v2951, %v2947
    %v2957 = vsel %vm367, %v2953, %v2949
    %v2958 = vmax.f32 %v2870, %v2954
    %v2959 = vmax.f32 %v2871, %v2956
    %v2960 = vmax.f32 %v2912, %v2955
    %v2961 = vmax.f32 %v2913, %v2957
    %2962 = vrot.lane.b32.xlu0 %v2958, 114
    %v2963 = vpop.permute.xlu0 %2962
    %2964 = vrot.lane.b32.xlu0 %v2960, 114
    %v2965 = vpop.permute.xlu0 %2964
    %2966 = vrot.lane.b32.xlu0 %v2959, 114
    %v2967 = vpop.permute.xlu0 %2966
    %2968 = vrot.lane.b32.xlu0 %v2961, 114
    %v2969 = vpop.permute.xlu0 %2968
    %v2970 = vsel %vm2566, %v2963, %v2967
    %v2971 = vsel %vm2566, %v2965, %v2969
    %v2972 = vsel %vm2566, %v2967, %v2963
    %v2973 = vsel %vm2566, %v2969, %v2965
    %v2974 = vmax.f32 %v2958, %v2970
    %v2975 = vmax.f32 %v2959, %v2972
    %v2976 = vmax.f32 %v2960, %v2971
    %v2977 = vmax.f32 %v2961, %v2973
    %2978 = vmatpush.msra.mxu0 %v2929
    %2979 = vmatpush.msra.mxu0 %v2928
    %2980 = vmatpush.msra.mxu0 %v2927
    %2981 = vmatpush.msra.mxu0 %v2926
    %2982 = vmatpush.msra.mxu0 %v2925
    %2983 = vmatpush.msra.mxu0 %v2924
    %2984 = vmatpush.msra.mxu0 %v2923
    %2985 = vmatpush.msra.mxu0 %v2922
    %2986 = vmatpush.msra.mxu0 %v2921
    %2987 = vmatpush.msra.mxu0 %v2920
    %2988 = vmatpush.msra.mxu0 %v2919
    %2989 = vmatpush.msra.mxu0 %v2918
    %2990 = vmatpush.msra.mxu0 %v2917
    %2991 = vmatpush.msra.mxu0 %v2916
    %2992 = vmatpush.msra.mxu0 %v2915
    %2993 = vmatpush.msra.mxu0 %v2914
    %2994 = vmatmul.f32.gmra.mxu0 %v2974
    %v2995 = vpop.f32.mrf.mxu0
    %v2996 = vadd.f32 0.0, %v2995
    %2997 = vmatmul.f32.gmra.mxu0 %v2976
    %v2998 = vpop.f32.mrf.mxu0
    %v2999 = vadd.f32 0.0, %v2998
    %3000 = vdwg.mxu0
    %3001 = vmatpush.msra.mxu0 %v2945
    %3002 = vmatpush.msra.mxu0 %v2944
    %3003 = vmatpush.msra.mxu0 %v2943
    %3004 = vmatpush.msra.mxu0 %v2942
    %3005 = vmatpush.msra.mxu0 %v2941
    %3006 = vmatpush.msra.mxu0 %v2940
    %3007 = vmatpush.msra.mxu0 %v2939
    %3008 = vmatpush.msra.mxu0 %v2938
    %3009 = vmatpush.msra.mxu0 %v2937
    %3010 = vmatpush.msra.mxu0 %v2936
    %3011 = vmatpush.msra.mxu0 %v2935
    %3012 = vmatpush.msra.mxu0 %v2934
    %3013 = vmatpush.msra.mxu0 %v2933
    %3014 = vmatpush.msra.mxu0 %v2932
    %3015 = vmatpush.msra.mxu0 %v2931
    %3016 = vmatpush.msra.mxu0 %v2930
    %3017 = vmatmul.f32.gmra.mxu0 %v2975
    %v3018 = vpop.f32.mrf.mxu0
    %v3019 = vadd.f32 %v2996, %v3018
    %3020 = vmatmul.f32.gmra.mxu0 %v2977
    %v3021 = vpop.f32.mrf.mxu0
    %v3022 = vadd.f32 %v2999, %v3021
    %3023 = vdwg.mxu0
    %v3024 = vld [vmem:[%s9] sm:$0xff]
    %v3025 = vld [vmem:[%s9 + $0x8] sm:$0xff]
    %v3026 = vld [vmem:[%s9 + $0x10] sm:$0xff]
    %v3027 = vld [vmem:[%s9 + $0x18] sm:$0xff]
    %v3028 = vld [vmem:[%s9 + $0x20] sm:$0xff]
    %v3029 = vld [vmem:[%s9 + $0x28] sm:$0xff]
    %v3030 = vld [vmem:[%s9 + $0x30] sm:$0xff]
    %v3031 = vld [vmem:[%s9 + $0x38] sm:$0xff]
    %v3032 = vld [vmem:[%s9 + $0x40] sm:$0xff]
    %v3033 = vld [vmem:[%s9 + $0x48] sm:$0xff]
    %v3034 = vld [vmem:[%s9 + $0x50] sm:$0xff]
    %v3035 = vld [vmem:[%s9 + $0x58] sm:$0xff]
    %v3036 = vld [vmem:[%s9 + $0x60] sm:$0xff]
    %v3037 = vld [vmem:[%s9 + $0x68] sm:$0xff]
    %v3038 = vld [vmem:[%s9 + $0x70] sm:$0xff]
    %v3039 = vld [vmem:[%s9 + $0x78] sm:$0xff]
    %v3040 = vld [vmem:[%s9 + $0x80] sm:$0xff]
    %v3041 = vld [vmem:[%s9 + $0x88] sm:$0xff]
    %v3042 = vld [vmem:[%s9 + $0x90] sm:$0xff]
    %v3043 = vld [vmem:[%s9 + $0x98] sm:$0xff]
    %v3044 = vld [vmem:[%s9 + $0xa0] sm:$0xff]
    %v3045 = vld [vmem:[%s9 + $0xa8] sm:$0xff]
    %v3046 = vld [vmem:[%s9 + $0xb0] sm:$0xff]
    %v3047 = vld [vmem:[%s9 + $0xb8] sm:$0xff]
    %v3048 = vld [vmem:[%s9 + $0xc0] sm:$0xff]
    %v3049 = vld [vmem:[%s9 + $0xc8] sm:$0xff]
    %v3050 = vld [vmem:[%s9 + $0xd0] sm:$0xff]
    %v3051 = vld [vmem:[%s9 + $0xd8] sm:$0xff]
    %v3052 = vld [vmem:[%s9 + $0xe0] sm:$0xff]
    %v3053 = vld [vmem:[%s9 + $0xe8] sm:$0xff]
    %v3054 = vld [vmem:[%s9 + $0xf0] sm:$0xff]
    %v3055 = vld [vmem:[%s9 + $0xf8] sm:$0xff]
    %v3056 = vld [vmem:[%s9 + $0x100] sm:$0xff]
    %v3057 = vld [vmem:[%s9 + $0x108] sm:$0xff]
    %v3058 = vld [vmem:[%s9 + $0x110] sm:$0xff]
    %v3059 = vld [vmem:[%s9 + $0x118] sm:$0xff]
    %v3060 = vld [vmem:[%s9 + $0x120] sm:$0xff]
    %v3061 = vld [vmem:[%s9 + $0x128] sm:$0xff]
    %v3062 = vld [vmem:[%s9 + $0x130] sm:$0xff]
    %v3063 = vld [vmem:[%s9 + $0x138] sm:$0xff]
    %v3064 = vld [vmem:[%s9 + $0x140] sm:$0xff]
    %v3065 = vld [vmem:[%s9 + $0x148] sm:$0xff]
    %v3066 = vld [vmem:[%s9 + $0x150] sm:$0xff]
    %v3067 = vld [vmem:[%s9 + $0x158] sm:$0xff]
    %v3068 = vld [vmem:[%s9 + $0x160] sm:$0xff]
    %v3069 = vld [vmem:[%s9 + $0x168] sm:$0xff]
    %v3070 = vld [vmem:[%s9 + $0x170] sm:$0xff]
    %v3071 = vld [vmem:[%s9 + $0x178] sm:$0xff]
    %v3072 = vld [vmem:[%s9 + $0x180] sm:$0xff]
    %v3073 = vld [vmem:[%s9 + $0x188] sm:$0xff]
    %v3074 = vld [vmem:[%s9 + $0x190] sm:$0xff]
    %v3075 = vld [vmem:[%s9 + $0x198] sm:$0xff]
    %v3076 = vld [vmem:[%s9 + $0x1a0] sm:$0xff]
    %v3077 = vld [vmem:[%s9 + $0x1a8] sm:$0xff]
    %v3078 = vld [vmem:[%s9 + $0x1b0] sm:$0xff]
    %v3079 = vld [vmem:[%s9 + $0x1b8] sm:$0xff]
    %v3080 = vld [vmem:[%s9 + $0x1c0] sm:$0xff]
    %v3081 = vld [vmem:[%s9 + $0x1c8] sm:$0xff]
    %v3082 = vld [vmem:[%s9 + $0x1d0] sm:$0xff]
    %v3083 = vld [vmem:[%s9 + $0x1d8] sm:$0xff]
    %v3084 = vld [vmem:[%s9 + $0x1e0] sm:$0xff]
    %v3085 = vld [vmem:[%s9 + $0x1e8] sm:$0xff]
    %v3086 = vld [vmem:[%s9 + $0x1f0] sm:$0xff]
    %v3087 = vld [vmem:[%s9 + $0x1f8] sm:$0xff]
    %v3088 = vld [vmem:[%s9 + $0x200] sm:$0xff]
    %v3089 = vld [vmem:[%s9 + $0x208] sm:$0xff]
    %v3090 = vld [vmem:[%s9 + $0x210] sm:$0xff]
    %v3091 = vld [vmem:[%s9 + $0x218] sm:$0xff]
    %v3092 = vld [vmem:[%s9 + $0x220] sm:$0xff]
    %v3093 = vld [vmem:[%s9 + $0x228] sm:$0xff]
    %v3094 = vld [vmem:[%s9 + $0x230] sm:$0xff]
    %v3095 = vld [vmem:[%s9 + $0x238] sm:$0xff]
    %v3096 = vld [vmem:[%s9 + $0x240] sm:$0xff]
    %v3097 = vld [vmem:[%s9 + $0x248] sm:$0xff]
    %v3098 = vld [vmem:[%s9 + $0x250] sm:$0xff]
    %v3099 = vld [vmem:[%s9 + $0x258] sm:$0xff]
    %v3100 = vld [vmem:[%s9 + $0x260] sm:$0xff]
    %v3101 = vld [vmem:[%s9 + $0x268] sm:$0xff]
    %v3102 = vld [vmem:[%s9 + $0x270] sm:$0xff]
    %v3103 = vld [vmem:[%s9 + $0x278] sm:$0xff]
    %v3104 = vld [vmem:[%s9 + $0x280] sm:$0xff]
    %v3105 = vld [vmem:[%s9 + $0x288] sm:$0xff]
    %v3106 = vld [vmem:[%s9 + $0x290] sm:$0xff]
    %v3107 = vld [vmem:[%s9 + $0x298] sm:$0xff]
    %v3108 = vld [vmem:[%s9 + $0x2a0] sm:$0xff]
    %v3109 = vld [vmem:[%s9 + $0x2a8] sm:$0xff]
    %v3110 = vld [vmem:[%s9 + $0x2b0] sm:$0xff]
    %v3111 = vld [vmem:[%s9 + $0x2b8] sm:$0xff]
    %v3112 = vld [vmem:[%s9 + $0x2c0] sm:$0xff]
    %v3113 = vld [vmem:[%s9 + $0x2c8] sm:$0xff]
    %v3114 = vld [vmem:[%s9 + $0x2d0] sm:$0xff]
    %v3115 = vld [vmem:[%s9 + $0x2d8] sm:$0xff]
    %v3116 = vld [vmem:[%s9 + $0x2e0] sm:$0xff]
    %v3117 = vld [vmem:[%s9 + $0x2e8] sm:$0xff]
    %v3118 = vld [vmem:[%s9 + $0x2f0] sm:$0xff]
    %v3119 = vld [vmem:[%s9 + $0x2f8] sm:$0xff]
    %v3120 = vld [vmem:[%s9 + $0x300] sm:$0xff]
    %v3121 = vld [vmem:[%s9 + $0x308] sm:$0xff]
    %v3122 = vld [vmem:[%s9 + $0x310] sm:$0xff]
    %v3123 = vld [vmem:[%s9 + $0x318] sm:$0xff]
    %v3124 = vld [vmem:[%s9 + $0x320] sm:$0xff]
    %v3125 = vld [vmem:[%s9 + $0x328] sm:$0xff]
    %v3126 = vld [vmem:[%s9 + $0x330] sm:$0xff]
    %v3127 = vld [vmem:[%s9 + $0x338] sm:$0xff]
    %v3128 = vld [vmem:[%s9 + $0x340] sm:$0xff]
    %v3129 = vld [vmem:[%s9 + $0x348] sm:$0xff]
    %v3130 = vld [vmem:[%s9 + $0x350] sm:$0xff]
    %v3131 = vld [vmem:[%s9 + $0x358] sm:$0xff]
    %v3132 = vld [vmem:[%s9 + $0x360] sm:$0xff]
    %v3133 = vld [vmem:[%s9 + $0x368] sm:$0xff]
    %v3134 = vld [vmem:[%s9 + $0x370] sm:$0xff]
    %v3135 = vld [vmem:[%s9 + $0x378] sm:$0xff]
    %v3136 = vld [vmem:[%s9 + $0x380] sm:$0xff]
    %v3137 = vld [vmem:[%s9 + $0x388] sm:$0xff]
    %v3138 = vld [vmem:[%s9 + $0x390] sm:$0xff]
    %v3139 = vld [vmem:[%s9 + $0x398] sm:$0xff]
    %v3140 = vld [vmem:[%s9 + $0x3a0] sm:$0xff]
    %v3141 = vld [vmem:[%s9 + $0x3a8] sm:$0xff]
    %v3142 = vld [vmem:[%s9 + $0x3b0] sm:$0xff]
    %v3143 = vld [vmem:[%s9 + $0x3b8] sm:$0xff]
    %v3144 = vld [vmem:[%s9 + $0x3c0] sm:$0xff]
    %v3145 = vld [vmem:[%s9 + $0x3c8] sm:$0xff]
    %v3146 = vld [vmem:[%s9 + $0x3d0] sm:$0xff]
    %v3147 = vld [vmem:[%s9 + $0x3d8] sm:$0xff]
    %v3148 = vld [vmem:[%s9 + $0x3e0] sm:$0xff]
    %v3149 = vld [vmem:[%s9 + $0x3e8] sm:$0xff]
    %v3150 = vld [vmem:[%s9 + $0x3f0] sm:$0xff]
    %v3151 = vld [vmem:[%s9 + $0x3f8] sm:$0xff]
    %v3152 = vld [vmem:[%s10] sm:$0x1]
    %v3154 = vrot.slane %v3019, 1
    %v3156 = vrot.slane %v3019, 2
    %v3158 = vrot.slane %v3019, 3
    %v3160 = vrot.slane %v3019, 4
    %v3162 = vrot.slane %v3019, 5
    %v3164 = vrot.slane %v3019, 6
    %v3166 = vrot.slane %v3019, 7
    %3168 = vmatpush.msra.mxu0 %v3039
    %3169 = vmatpush.msra.mxu0 %v3038
    %3170 = vmatpush.msra.mxu0 %v3037
    %3171 = vmatpush.msra.mxu0 %v3036
    %3172 = vmatpush.msra.mxu0 %v3035
    %3173 = vmatpush.msra.mxu0 %v3034
    %3174 = vmatpush.msra.mxu0 %v3033
    %3175 = vmatpush.msra.mxu0 %v3032
    %3176 = vmatpush.msra.mxu0 %v3031
    %3177 = vmatpush.msra.mxu0 %v3030
    %3178 = vmatpush.msra.mxu0 %v3029
    %3179 = vmatpush.msra.mxu0 %v3028
    %3180 = vmatpush.msra.mxu0 %v3027
    %3181 = vmatpush.msra.mxu0 %v3026
    %3182 = vmatpush.msra.mxu0 %v3025
    %3183 = vmatpush.msra.mxu0 %v3024
    %3184 = vmatmul.f32.gmra.mxu0 %v3019
    %v3185 = vpop.f32.mrf.mxu0
    %v3186 = vadd.f32 %v3152, %v3185
    %3187 = vdwg.mxu0
    %3188 = vmatpush.msra.mxu0 %v3055
    %3189 = vmatpush.msra.mxu0 %v3054
    %3190 = vmatpush.msra.mxu0 %v3053
    %3191 = vmatpush.msra.mxu0 %v3052
    %3192 = vmatpush.msra.mxu0 %v3051
    %3193 = vmatpush.msra.mxu0 %v3050
    %3194 = vmatpush.msra.mxu0 %v3049
    %3195 = vmatpush.msra.mxu0 %v3048
    %3196 = vmatpush.msra.mxu0 %v3047
    %3197 = vmatpush.msra.mxu0 %v3046
    %3198 = vmatpush.msra.mxu0 %v3045
    %3199 = vmatpush.msra.mxu0 %v3044
    %3200 = vmatpush.msra.mxu0 %v3043
    %3201 = vmatpush.msra.mxu0 %v3042
    %3202 = vmatpush.msra.mxu0 %v3041
    %3203 = vmatpush.msra.mxu0 %v3040
    %3204 = vmatmul.f32.gmra.mxu0 %v3154
    %v3205 = vpop.f32.mrf.mxu0
    %v3206 = vadd.f32 %v3186, %v3205
    %3207 = vdwg.mxu0
    %3208 = vmatpush.msra.mxu0 %v3071
    %3209 = vmatpush.msra.mxu0 %v3070
    %3210 = vmatpush.msra.mxu0 %v3069
    %3211 = vmatpush.msra.mxu0 %v3068
    %3212 = vmatpush.msra.mxu0 %v3067
    %3213 = vmatpush.msra.mxu0 %v3066
    %3214 = vmatpush.msra.mxu0 %v3065
    %3215 = vmatpush.msra.mxu0 %v3064
    %3216 = vmatpush.msra.mxu0 %v3063
    %3217 = vmatpush.msra.mxu0 %v3062
    %3218 = vmatpush.msra.mxu0 %v3061
    %3219 = vmatpush.msra.mxu0 %v3060
    %3220 = vmatpush.msra.mxu0 %v3059
    %3221 = vmatpush.msra.mxu0 %v3058
    %3222 = vmatpush.msra.mxu0 %v3057
    %3223 = vmatpush.msra.mxu0 %v3056
    %3224 = vmatmul.f32.gmra.mxu0 %v3156
    %v3225 = vpop.f32.mrf.mxu0
    %v3226 = vadd.f32 %v3206, %v3225
    %3227 = vdwg.mxu0
    %3228 = vmatpush.msra.mxu0 %v3087
    %3229 = vmatpush.msra.mxu0 %v3086
    %3230 = vmatpush.msra.mxu0 %v3085
    %3231 = vmatpush.msra.mxu0 %v3084
    %3232 = vmatpush.msra.mxu0 %v3083
    %3233 = vmatpush.msra.mxu0 %v3082
    %3234 = vmatpush.msra.mxu0 %v3081
    %3235 = vmatpush.msra.mxu0 %v3080
    %3236 = vmatpush.msra.mxu0 %v3079
    %3237 = vmatpush.msra.mxu0 %v3078
    %3238 = vmatpush.msra.mxu0 %v3077
    %3239 = vmatpush.msra.mxu0 %v3076
    %3240 = vmatpush.msra.mxu0 %v3075
    %3241 = vmatpush.msra.mxu0 %v3074
    %3242 = vmatpush.msra.mxu0 %v3073
    %3243 = vmatpush.msra.mxu0 %v3072
    %3244 = vmatmul.f32.gmra.mxu0 %v3158
    %v3245 = vpop.f32.mrf.mxu0
    %v3246 = vadd.f32 %v3226, %v3245
    %3247 = vdwg.mxu0
    %3248 = vmatpush.msra.mxu0 %v3103
    %3249 = vmatpush.msra.mxu0 %v3102
    %3250 = vmatpush.msra.mxu0 %v3101
    %3251 = vmatpush.msra.mxu0 %v3100
    %3252 = vmatpush.msra.mxu0 %v3099
    %3253 = vmatpush.msra.mxu0 %v3098
    %3254 = vmatpush.msra.mxu0 %v3097
    %3255 = vmatpush.msra.mxu0 %v3096
    %3256 = vmatpush.msra.mxu0 %v3095
    %3257 = vmatpush.msra.mxu0 %v3094
    %3258 = vmatpush.msra.mxu0 %v3093
    %3259 = vmatpush.msra.mxu0 %v3092
    %3260 = vmatpush.msra.mxu0 %v3091
    %3261 = vmatpush.msra.mxu0 %v3090
    %3262 = vmatpush.msra.mxu0 %v3089
    %3263 = vmatpush.msra.mxu0 %v3088
    %3264 = vmatmul.f32.gmra.mxu0 %v3160
    %v3265 = vpop.f32.mrf.mxu0
    %v3266 = vadd.f32 %v3246, %v3265
    %3267 = vdwg.mxu0
    %3268 = vmatpush.msra.mxu0 %v3119
    %3269 = vmatpush.msra.mxu0 %v3118
    %3270 = vmatpush.msra.mxu0 %v3117
    %3271 = vmatpush.msra.mxu0 %v3116
    %3272 = vmatpush.msra.mxu0 %v3115
    %3273 = vmatpush.msra.mxu0 %v3114
    %3274 = vmatpush.msra.mxu0 %v3113
    %3275 = vmatpush.msra.mxu0 %v3112
    %3276 = vmatpush.msra.mxu0 %v3111
    %3277 = vmatpush.msra.mxu0 %v3110
    %3278 = vmatpush.msra.mxu0 %v3109
    %3279 = vmatpush.msra.mxu0 %v3108
    %3280 = vmatpush.msra.mxu0 %v3107
    %3281 = vmatpush.msra.mxu0 %v3106
    %3282 = vmatpush.msra.mxu0 %v3105
    %3283 = vmatpush.msra.mxu0 %v3104
    %3284 = vmatmul.f32.gmra.mxu0 %v3162
    %v3285 = vpop.f32.mrf.mxu0
    %v3286 = vadd.f32 %v3266, %v3285
    %3287 = vdwg.mxu0
    %3288 = vmatpush.msra.mxu0 %v3135
    %3289 = vmatpush.msra.mxu0 %v3134
    %3290 = vmatpush.msra.mxu0 %v3133
    %3291 = vmatpush.msra.mxu0 %v3132
    %3292 = vmatpush.msra.mxu0 %v3131
    %3293 = vmatpush.msra.mxu0 %v3130
    %3294 = vmatpush.msra.mxu0 %v3129
    %3295 = vmatpush.msra.mxu0 %v3128
    %3296 = vmatpush.msra.mxu0 %v3127
    %3297 = vmatpush.msra.mxu0 %v3126
    %3298 = vmatpush.msra.mxu0 %v3125
    %3299 = vmatpush.msra.mxu0 %v3124
    %3300 = vmatpush.msra.mxu0 %v3123
    %3301 = vmatpush.msra.mxu0 %v3122
    %3302 = vmatpush.msra.mxu0 %v3121
    %3303 = vmatpush.msra.mxu0 %v3120
    %3304 = vmatmul.f32.gmra.mxu0 %v3164
    %v3305 = vpop.f32.mrf.mxu0
    %v3306 = vadd.f32 %v3286, %v3305
    %3307 = vdwg.mxu0
    %3308 = vmatpush.msra.mxu0 %v3151
    %3309 = vmatpush.msra.mxu0 %v3150
    %3310 = vmatpush.msra.mxu0 %v3149
    %3311 = vmatpush.msra.mxu0 %v3148
    %3312 = vmatpush.msra.mxu0 %v3147
    %3313 = vmatpush.msra.mxu0 %v3146
    %3314 = vmatpush.msra.mxu0 %v3145
    %3315 = vmatpush.msra.mxu0 %v3144
    %3316 = vmatpush.msra.mxu0 %v3143
    %3317 = vmatpush.msra.mxu0 %v3142
    %3318 = vmatpush.msra.mxu0 %v3141
    %3319 = vmatpush.msra.mxu0 %v3140
    %3320 = vmatpush.msra.mxu0 %v3139
    %3321 = vmatpush.msra.mxu0 %v3138
    %3322 = vmatpush.msra.mxu0 %v3137
    %3323 = vmatpush.msra.mxu0 %v3136
    %3324 = vmatmul.f32.gmra.mxu0 %v3166
    %v3325 = vpop.f32.mrf.mxu0
    %v3326 = vadd.f32 %v3306, %v3325
    %3327 = vdwg.mxu0
    %vm3328 = vcmask 73728
    %3329 = vst.msk [vmem:[#allocation5] sm:$0x1] %vm3328, %v3326
    %v3331 = vrot.slane %v3022, 1
    %v3333 = vrot.slane %v3022, 2
    %v3335 = vrot.slane %v3022, 3
    %v3337 = vrot.slane %v3022, 4
    %v3339 = vrot.slane %v3022, 5
    %v3341 = vrot.slane %v3022, 6
    %v3343 = vrot.slane %v3022, 7
    %3345 = vmatpush.msra.mxu0 %v3039
    %3346 = vmatpush.msra.mxu0 %v3038
    %3347 = vmatpush.msra.mxu0 %v3037
    %3348 = vmatpush.msra.mxu0 %v3036
    %3349 = vmatpush.msra.mxu0 %v3035
    %3350 = vmatpush.msra.mxu0 %v3034
    %3351 = vmatpush.msra.mxu0 %v3033
    %3352 = vmatpush.msra.mxu0 %v3032
    %3353 = vmatpush.msra.mxu0 %v3031
    %3354 = vmatpush.msra.mxu0 %v3030
    %3355 = vmatpush.msra.mxu0 %v3029
    %3356 = vmatpush.msra.mxu0 %v3028
    %3357 = vmatpush.msra.mxu0 %v3027
    %3358 = vmatpush.msra.mxu0 %v3026
    %3359 = vmatpush.msra.mxu0 %v3025
    %3360 = vmatpush.msra.mxu0 %v3024
    %3361 = vmatmul.f32.gmra.mxu0 %v3022
    %v3362 = vpop.f32.mrf.mxu0
    %v3363 = vadd.f32 %v3152, %v3362
    %3364 = vdwg.mxu0
    %3365 = vmatpush.msra.mxu0 %v3055
    %3366 = vmatpush.msra.mxu0 %v3054
    %3367 = vmatpush.msra.mxu0 %v3053
    %3368 = vmatpush.msra.mxu0 %v3052
    %3369 = vmatpush.msra.mxu0 %v3051
    %3370 = vmatpush.msra.mxu0 %v3050
    %3371 = vmatpush.msra.mxu0 %v3049
    %3372 = vmatpush.msra.mxu0 %v3048
    %3373 = vmatpush.msra.mxu0 %v3047
    %3374 = vmatpush.msra.mxu0 %v3046
    %3375 = vmatpush.msra.mxu0 %v3045
    %3376 = vmatpush.msra.mxu0 %v3044
    %3377 = vmatpush.msra.mxu0 %v3043
    %3378 = vmatpush.msra.mxu0 %v3042
    %3379 = vmatpush.msra.mxu0 %v3041
    %3380 = vmatpush.msra.mxu0 %v3040
    %3381 = vmatmul.f32.gmra.mxu0 %v3331
    %v3382 = vpop.f32.mrf.mxu0
    %v3383 = vadd.f32 %v3363, %v3382
    %3384 = vdwg.mxu0
    %3385 = vmatpush.msra.mxu0 %v3071
    %3386 = vmatpush.msra.mxu0 %v3070
    %3387 = vmatpush.msra.mxu0 %v3069
    %3388 = vmatpush.msra.mxu0 %v3068
    %3389 = vmatpush.msra.mxu0 %v3067
    %3390 = vmatpush.msra.mxu0 %v3066
    %3391 = vmatpush.msra.mxu0 %v3065
    %3392 = vmatpush.msra.mxu0 %v3064
    %3393 = vmatpush.msra.mxu0 %v3063
    %3394 = vmatpush.msra.mxu0 %v3062
    %3395 = vmatpush.msra.mxu0 %v3061
    %3396 = vmatpush.msra.mxu0 %v3060
    %3397 = vmatpush.msra.mxu0 %v3059
    %3398 = vmatpush.msra.mxu0 %v3058
    %3399 = vmatpush.msra.mxu0 %v3057
    %3400 = vmatpush.msra.mxu0 %v3056
    %3401 = vmatmul.f32.gmra.mxu0 %v3333
    %v3402 = vpop.f32.mrf.mxu0
    %v3403 = vadd.f32 %v3383, %v3402
    %3404 = vdwg.mxu0
    %3405 = vmatpush.msra.mxu0 %v3087
    %3406 = vmatpush.msra.mxu0 %v3086
    %3407 = vmatpush.msra.mxu0 %v3085
    %3408 = vmatpush.msra.mxu0 %v3084
    %3409 = vmatpush.msra.mxu0 %v3083
    %3410 = vmatpush.msra.mxu0 %v3082
    %3411 = vmatpush.msra.mxu0 %v3081
    %3412 = vmatpush.msra.mxu0 %v3080
    %3413 = vmatpush.msra.mxu0 %v3079
    %3414 = vmatpush.msra.mxu0 %v3078
    %3415 = vmatpush.msra.mxu0 %v3077
    %3416 = vmatpush.msra.mxu0 %v3076
    %3417 = vmatpush.msra.mxu0 %v3075
    %3418 = vmatpush.msra.mxu0 %v3074
    %3419 = vmatpush.msra.mxu0 %v3073
    %3420 = vmatpush.msra.mxu0 %v3072
    %3421 = vmatmul.f32.gmra.mxu0 %v3335
    %v3422 = vpop.f32.mrf.mxu0
    %v3423 = vadd.f32 %v3403, %v3422
    %3424 = vdwg.mxu0
    %3425 = vmatpush.msra.mxu0 %v3103
    %3426 = vmatpush.msra.mxu0 %v3102
    %3427 = vmatpush.msra.mxu0 %v3101
    %3428 = vmatpush.msra.mxu0 %v3100
    %3429 = vmatpush.msra.mxu0 %v3099
    %3430 = vmatpush.msra.mxu0 %v3098
    %3431 = vmatpush.msra.mxu0 %v3097
    %3432 = vmatpush.msra.mxu0 %v3096
    %3433 = vmatpush.msra.mxu0 %v3095
    %3434 = vmatpush.msra.mxu0 %v3094
    %3435 = vmatpush.msra.mxu0 %v3093
    %3436 = vmatpush.msra.mxu0 %v3092
    %3437 = vmatpush.msra.mxu0 %v3091
    %3438 = vmatpush.msra.mxu0 %v3090
    %3439 = vmatpush.msra.mxu0 %v3089
    %3440 = vmatpush.msra.mxu0 %v3088
    %3441 = vmatmul.f32.gmra.mxu0 %v3337
    %v3442 = vpop.f32.mrf.mxu0
    %v3443 = vadd.f32 %v3423, %v3442
    %3444 = vdwg.mxu0
    %3445 = vmatpush.msra.mxu0 %v3119
    %3446 = vmatpush.msra.mxu0 %v3118
    %3447 = vmatpush.msra.mxu0 %v3117
    %3448 = vmatpush.msra.mxu0 %v3116
    %3449 = vmatpush.msra.mxu0 %v3115
    %3450 = vmatpush.msra.mxu0 %v3114
    %3451 = vmatpush.msra.mxu0 %v3113
    %3452 = vmatpush.msra.mxu0 %v3112
    %3453 = vmatpush.msra.mxu0 %v3111
    %3454 = vmatpush.msra.mxu0 %v3110
    %3455 = vmatpush.msra.mxu0 %v3109
    %3456 = vmatpush.msra.mxu0 %v3108
    %3457 = vmatpush.msra.mxu0 %v3107
    %3458 = vmatpush.msra.mxu0 %v3106
    %3459 = vmatpush.msra.mxu0 %v3105
    %3460 = vmatpush.msra.mxu0 %v3104
    %3461 = vmatmul.f32.gmra.mxu0 %v3339
    %v3462 = vpop.f32.mrf.mxu0
    %v3463 = vadd.f32 %v3443, %v3462
    %3464 = vdwg.mxu0
    %3465 = vmatpush.msra.mxu0 %v3135
    %3466 = vmatpush.msra.mxu0 %v3134
    %3467 = vmatpush.msra.mxu0 %v3133
    %3468 = vmatpush.msra.mxu0 %v3132
    %3469 = vmatpush.msra.mxu0 %v3131
    %3470 = vmatpush.msra.mxu0 %v3130
    %3471 = vmatpush.msra.mxu0 %v3129
    %3472 = vmatpush.msra.mxu0 %v3128
    %3473 = vmatpush.msra.mxu0 %v3127
    %3474 = vmatpush.msra.mxu0 %v3126
    %3475 = vmatpush.msra.mxu0 %v3125
    %3476 = vmatpush.msra.mxu0 %v3124
    %3477 = vmatpush.msra.mxu0 %v3123
    %3478 = vmatpush.msra.mxu0 %v3122
    %3479 = vmatpush.msra.mxu0 %v3121
    %3480 = vmatpush.msra.mxu0 %v3120
    %3481 = vmatmul.f32.gmra.mxu0 %v3341
    %v3482 = vpop.f32.mrf.mxu0
    %v3483 = vadd.f32 %v3463, %v3482
    %3484 = vdwg.mxu0
    %3485 = vmatpush.msra.mxu0 %v3151
    %3486 = vmatpush.msra.mxu0 %v3150
    %3487 = vmatpush.msra.mxu0 %v3149
    %3488 = vmatpush.msra.mxu0 %v3148
    %3489 = vmatpush.msra.mxu0 %v3147
    %3490 = vmatpush.msra.mxu0 %v3146
    %3491 = vmatpush.msra.mxu0 %v3145
    %3492 = vmatpush.msra.mxu0 %v3144
    %3493 = vmatpush.msra.mxu0 %v3143
    %3494 = vmatpush.msra.mxu0 %v3142
    %3495 = vmatpush.msra.mxu0 %v3141
    %3496 = vmatpush.msra.mxu0 %v3140
    %3497 = vmatpush.msra.mxu0 %v3139
    %3498 = vmatpush.msra.mxu0 %v3138
    %3499 = vmatpush.msra.mxu0 %v3137
    %3500 = vmatpush.msra.mxu0 %v3136
    %3501 = vmatmul.f32.gmra.mxu0 %v3343
    %v3502 = vpop.f32.mrf.mxu0
    %v3503 = vadd.f32 %v3483, %v3502
    %3504 = vdwg.mxu0
    %3505 = vst.msk [vmem:[#allocation5 + $0x1] sm:$0x1] %vm3328, %v3503
    // Predicated region
    $region66: #{mnist_model_v1_forward.1} parent=1 // pred_check
      _
    $region67: #{mnist_model_v1_forward.1} parent=1 // pred_check_branch
      %3507 = sbr.rel (0) target = $region69
    $region68: #{mnist_model_v1_forward.1} parent=1 // pred_region
      %3509 = vsyncadd [#allocation4], 0
      %s3511 = sshll.u32 [#allocation5], 4
      %s3512 = int_to_ptr.vmem [resolvable:$true] %s3511
      %s3513 = sshll.u32 %s15, 4
      %s3514 = int_to_ptr.hbm [resolvable:$true] %s3513
      %3516 = dma.vmem_to_hbm [thread:$0]  %s3512, 32, %s3514, [#allocation4]
    $region69: #{mnist_model_v1_forward.1} parent=1 // pred_fallthru
      _
    // Predicated region
    $region70: #{mnist_model_v1_forward.1} parent=1 // pred_check
      _
    $region71: #{mnist_model_v1_forward.1} parent=1 // pred_check_branch
      %3518 = sbr.rel (0) target = $region73
    $region72: #{mnist_model_v1_forward.1} parent=1 // pred_region
      %3520 = dma.done [#allocation4], 32
    $region73: #{mnist_model_v1_forward.1} parent=1 // pred_fallthru
      _
    %3521 = vsyncpa [#allocation3], 1
    %3522 = vsyncpa [#allocation4], 1

</llo_original>
